<compile_context>
chip_gen: v7x
topology: tpu7x:2x2x1
jax: 0.10.0
libtpu: 0.0.40
codegen_flags: <defaults>
</compile_context>

<pallas_src>
import functools

import jax
import jax.numpy as jnp
from jax import lax
from jax.experimental import pallas as pl
from jax.experimental.pallas import tpu as pltpu


# ----------------------------- Pallas kernel ------------------------------- #

def fused_conv_bn_relu_kernel(xcol_ref, wt_ref, gamma_ref, beta_ref, out_ref, *, eps):
    """Single-step kernel (no grid): everything is VMEM-resident.

    xcol_ref  : (M, Kp)   bf16   im2col slab, M = N*DHW, Kp = 27*Cin padded to 512
    wt_ref    : (Kp, Cout) bf16  folded conv weights (stationary MXU operand)
    gamma_ref : (1, Cout)  f32   BatchNorm weight
    beta_ref  : (1, Cout)  f32   BatchNorm bias
    out_ref   : (M, Cout)  f32   fused Conv+BN+ReLU output
    """
    # (M, Kp) @ (Kp, Cout): long axis (M=1024) streams against the small stationary
    # weight; bf16 operands, f32 MXU accumulation.
    y = jnp.dot(xcol_ref[...], wt_ref[...], preferred_element_type=jnp.float32)

    # Training-mode BatchNorm statistics over the N*DHW axis (two-pass: numerically
    # stable vs E[y^2]-E[y]^2).  Biased variance, matching PyTorch normalization.
    mean = jnp.mean(y, axis=0, keepdims=True)                      # (1, Cout)
    var = jnp.mean(jnp.square(y - mean), axis=0, keepdims=True)    # (1, Cout)

    scale = gamma_ref[...] * lax.rsqrt(var + eps)                  # (1, Cout)
    shift = beta_ref[...] - mean * scale                           # (1, Cout)

    # Fused affine + ReLU, single vectorized pass, single store.
    out_ref[...] = jnp.maximum(y * scale + shift, 0.0)


# ------------------------------ Wrapper ------------------------------------ #

@functools.partial(jax.jit, static_argnames=("eps",))
def conv3d_block_forward(x_ncdhw, weight, bias, gamma, beta, eps=1e-5):
    """Forward of Conv3D_Block (norm=True path).

    x_ncdhw : [N, C_in, D, H, W]  (PyTorch layout)
    weight  : [C_out, C_in, 3, 3, 3]
    bias    : [C_out]   (unused: exactly absorbed by training-mode BatchNorm)
    gamma, beta : [C_out]
    returns : [N, C_out, D, H, W]
    """
    del bias  # absorbed by the BN mean subtraction (exact up to float rounding)

    N, Cin, D, H, W = x_ncdhw.shape
    Cout = weight.shape[0]
    DHW = D * H * W
    M = N * DHW
    K = 27 * Cin
    K_pad = ((K + 127) // 128) * 128          # 486 -> 512

    # im2col in (N*DHW, K_pad) layout: spatial/batch on the streamed (sublane) axis,
    # taps*channels on the contraction axis.  The K zero-pad is a slab in the concat
    # (no second full-array pad copy).
    # TODO(synk): at production spatial sizes build this in-kernel from a single
    # halo-padded slab DMA instead of materializing a 27x HBM slab.
    xp = jnp.pad(x_ncdhw, ((0, 0), (0, 0), (1, 1), (1, 1), (1, 1)))
    xp = jnp.transpose(xp, (0, 2, 3, 4, 1)).astype(jnp.bfloat16)   # (N, D+2, H+2, W+2, Cin)
    slabs = []
    for kd in range(3):
        for kh in range(3):
            for kw in range(3):
                slabs.append(
                    xp[:, kd:kd + D, kh:kh + H, kw:kw + W, :].reshape(N, DHW, Cin))
    slabs.append(jnp.zeros((N, DHW, K_pad - K), dtype=jnp.bfloat16))
    xcol = jnp.concatenate(slabs, axis=-1).reshape(M, K_pad)        # (M, K_pad)

    # (Cout, Cin, 3,3,3) -> (K, Cout) matching the im2col (kd,kh,kw,cin) ordering,
    # zero-pad the contraction dim, bf16.
    wt = jnp.transpose(weight, (2, 3, 4, 1, 0)).reshape(K, Cout)
    wt = jnp.pad(wt, ((0, K_pad - K), (0, 0))).astype(jnp.bfloat16)  # (K_pad, Cout)

    gamma2 = gamma.reshape(1, Cout).astype(jnp.float32)
    beta2 = beta.reshape(1, Cout).astype(jnp.float32)

    kernel = functools.partial(fused_conv_bn_relu_kernel, eps=eps)

    out = pl.pallas_call(
        kernel,
        out_shape=jax.ShapeDtypeStruct((M, Cout), jnp.float32),
        compiler_params=pltpu.CompilerParams(vmem_limit_bytes=32 * 1024 * 1024),
    )(xcol, wt, gamma2, beta2)

    # (N*DHW, Cout) -> (N, Cout, D, H, W): cheap XLA transpose of a small output.
    out = out.reshape(N, D, H, W, Cout)
    return jnp.transpose(out, (0, 4, 1, 2, 3))

    # TODO(synk): BatchNorm3d running_mean/running_var momentum updates are
    # training-state mutation and are not reproduced here.


# ------------------------------ Reference ----------------------------------- #

def reference_forward(x_ncdhw, weight, bias, gamma, beta, eps=1e-5):
    y = lax.conv_general_dilated(
        x_ncdhw, weight, window_strides=(1, 1, 1),
        padding=((1, 1), (1, 1), (1, 1)),
        dimension_numbers=("NCDHW", "OIDHW", "NCDHW"),
        precision=lax.Precision.HIGHEST)
    y = y + bias.reshape(1, -1, 1, 1, 1)
    mean = jnp.mean(y, axis=(0, 2, 3, 4), keepdims=True)
    var = jnp.mean(jnp.square(y - mean), axis=(0, 2, 3, 4), keepdims=True)
    y = (y - mean) / jnp.sqrt(var + eps)
    y = y * gamma.reshape(1, -1, 1, 1, 1) + beta.reshape(1, -1, 1, 1, 1)
    return jnp.maximum(y, 0.0)


# -------------------------------- Main -------------------------------------- #

if __name__ == "__main__":
    N, Cin, Cout = 2, 18, 32
    D = H = W = 8

    key = jax.random.PRNGKey(0)
    kx, kw, kb = jax.random.split(key, 3)

    x = jax.random.normal(kx, (N, Cin, D, H, W), dtype=jnp.float32)

    # Deterministic synthetic parameters (shapes per nn.Conv3d / nn.BatchNorm3d).
    fan_in = Cin * 3 * 3 * 3
    weight = jax.random.normal(kw, (Cout, Cin, 3, 3, 3), dtype=jnp.float32) / jnp.sqrt(fan_in)
    bias = 0.1 * jax.random.normal(kb, (Cout,), dtype=jnp.float32)
    gamma = jnp.ones((Cout,), dtype=jnp.float32)   # BatchNorm3d default weight
    beta = jnp.zeros((Cout,), dtype=jnp.float32)   # BatchNorm3d default bias

    out = conv3d_block_forward(x, weight, bias, gamma, beta)
    out = jax.block_until_ready(out)

    ref = jax.block_until_ready(reference_forward(x, weight, bias, gamma, beta))

    assert out.shape == (N, Cout, D, H, W), out.shape

    import numpy as np
    o = np.asarray(out); r = np.asarray(ref)
    # bf16 MXU operands vs f32-HIGHEST reference: allow ~3e-2 elementwise, check RMS too.
    np.testing.assert_allclose(o, r, rtol=3e-2, atol=3e-2)
    rms = float(np.sqrt(np.mean((o - r) ** 2)) / (np.sqrt(np.mean(r ** 2)) + 1e-12))
    assert rms < 1e-2, f"relative RMS error too high: {rms}"

    print("KERNEL_OK")
</pallas_src>

<mosaic_0001>
module attributes {stable_mosaic.version = 11 : i64} {
  func.func @fused_conv_bn_relu_kernel(%arg0: memref<1024x512xbf16, #tpu.memory_space<vmem>>, %arg1: memref<512x32xbf16, #tpu.memory_space<vmem>>, %arg2: memref<1x32xf32, #tpu.memory_space<vmem>>, %arg3: memref<1x32xf32, #tpu.memory_space<vmem>>, %arg4: memref<1024x32xf32, #tpu.memory_space<vmem>>) attributes {dimension_semantics = [], scalar_prefetch = 0 : i64, scratch_operands = 0 : i64, tpu.core_type = #tpu.core_type<tc>} {
    %c0 = arith.constant 0 : index
    %c0_0 = arith.constant 0 : index
    %0 = vector.load %arg0[%c0, %c0_0] : memref<1024x512xbf16, #tpu.memory_space<vmem>>, vector<1024x512xbf16>
    %c0_1 = arith.constant 0 : index
    %c0_2 = arith.constant 0 : index
    %1 = vector.load %arg1[%c0_1, %c0_2] : memref<512x32xbf16, #tpu.memory_space<vmem>>, vector<512x32xbf16>
    %cst = arith.constant dense<0.000000e+00> : vector<1024x32xf32>
    %2 = tpu.matmul %0, %1, %cst {dimension_numbers = #tpu.dot_dimension_numbers<[1], [0], [0], [1], [0, 0, 1, 1], [], []>} : vector<1024x512xbf16>, vector<512x32xbf16>, vector<1024x32xf32> -> vector<1024x32xf32>
    %cst_3 = arith.constant dense<0.000000e+00> : vector<32xf32>
    %3 = vector.multi_reduction <add>, %2, %cst_3 [0] : vector<1024x32xf32> to vector<32xf32>
    %4 = vector.shape_cast %3 : vector<32xf32> to vector<1x32xf32>
    %cst_4 = arith.constant 1.024000e+03 : f32
    %5 = vector.broadcast %cst_4 : f32 to vector<1x32xf32>
    %6 = arith.divf %4, %5 : vector<1x32xf32>
    %7 = vector.broadcast %6 : vector<1x32xf32> to vector<1024x32xf32>
    %8 = arith.subf %2, %7 : vector<1024x32xf32>
    %9 = arith.mulf %8, %8 : vector<1024x32xf32>
    %cst_5 = arith.constant dense<0.000000e+00> : vector<32xf32>
    %10 = vector.multi_reduction <add>, %9, %cst_5 [0] : vector<1024x32xf32> to vector<32xf32>
    %11 = vector.shape_cast %10 : vector<32xf32> to vector<1x32xf32>
    %cst_6 = arith.constant 1.024000e+03 : f32
    %12 = vector.broadcast %cst_6 : f32 to vector<1x32xf32>
    %13 = arith.divf %11, %12 : vector<1x32xf32>
    %c0_7 = arith.constant 0 : index
    %c0_8 = arith.constant 0 : index
    %14 = vector.load %arg2[%c0_7, %c0_8] : memref<1x32xf32, #tpu.memory_space<vmem>>, vector<1x32xf32>
    %cst_9 = arith.constant 9.99999974E-6 : f32
    %15 = vector.broadcast %cst_9 : f32 to vector<1x32xf32>
    %16 = arith.addf %13, %15 : vector<1x32xf32>
    %17 = math.rsqrt %16 : vector<1x32xf32>
    %18 = arith.mulf %14, %17 : vector<1x32xf32>
    %c0_10 = arith.constant 0 : index
    %c0_11 = arith.constant 0 : index
    %19 = vector.load %arg3[%c0_10, %c0_11] : memref<1x32xf32, #tpu.memory_space<vmem>>, vector<1x32xf32>
    %20 = arith.mulf %6, %18 : vector<1x32xf32>
    %21 = arith.subf %19, %20 : vector<1x32xf32>
    %22 = vector.broadcast %18 : vector<1x32xf32> to vector<1024x32xf32>
    %23 = arith.mulf %2, %22 : vector<1024x32xf32>
    %24 = vector.broadcast %21 : vector<1x32xf32> to vector<1024x32xf32>
    %25 = arith.addf %23, %24 : vector<1024x32xf32>
    %cst_12 = arith.constant 0.000000e+00 : f32
    %26 = vector.broadcast %cst_12 : f32 to vector<1024x32xf32>
    %27 = arith.maximumf %25, %26 : vector<1024x32xf32>
    %c0_13 = arith.constant 0 : index
    %c0_14 = arith.constant 0 : index
    %28 = vector.load %arg4[%c0_13, %c0_14] : memref<1024x32xf32, #tpu.memory_space<vmem>>, vector<1024x32xf32>
    tpu.vector_store %arg4[%c0_13, %c0_14], %27 {strides = array<i32>} : memref<1024x32xf32, #tpu.memory_space<vmem>>, vector<1024x32xf32>,
    return
  }
}

</mosaic_0001>

<llo_original>
// kernel: conv3d_block_forward.1
$region0: #{conv3d_block_forward.1}
  #allocation0 [shape = 'u32[]', space=smem, size = 0x4, offset = 0x4, fixed_abs, tag = 'smem constant byte address 0x4 - core index']
  #allocation1 [shape = 'u32[144,128]{1,0:T(1,128)}', space=vmem, size = 0x12000, scoped, tag = 'internal scratch']
  %s0 = inlined_call_operand.vmem [shape: bf16[1024,512], index: 0, kind: input, shape index: {}]
  %s1 = inlined_call_operand.vmem [shape: bf16[512,32], index: 1, kind: input, shape index: {}]
  %s2 = inlined_call_operand.vmem [shape: f32[1,32], index: 2, kind: input, shape index: {}]
  %s3 = inlined_call_operand.vmem [shape: f32[1,32], index: 3, kind: input, shape index: {}]
  %s4 = inlined_call_operand.hbm [shape: f32[1024,32], index: 4, kind: output, shape index: {}]
  %s5 = sld [smem:[#allocation0]]
  $region26: #{conv3d_block_forward.1} parent=0
    _
  %s7 = ssub.s32 1, %s5
  %s8 = scalar_select 0, %s7, %s5
  $region1: #{conv3d_block_forward.1} parent=0
    #allocation2 [shape = 'u8[524288]{0}', space=vmem, size = 0x80000, scoped, tag = 'output window, operand 0, single buffered']
    #allocation3 [shape = 's32[1]{0}', space=sflag, size = 0x4, scoped, tag = 'scoped memory for conv3d_block_forward.1']
    %9 = vsyncpa [#allocation3], 0
    // Predicated region
    $region2: #{conv3d_block_forward.1} parent=1 // pred_check
      _
    $region3: #{conv3d_block_forward.1} parent=1 // pred_check_branch
      %11 = sbr.rel (0) target = $region5
    $region4: #{conv3d_block_forward.1} parent=1 // pred_region
      _
    $region5: #{conv3d_block_forward.1} parent=1 // pred_fallthru
      _
    // Predicated region
    $region6: #{conv3d_block_forward.1} parent=1 // pred_check
      _
    $region7: #{conv3d_block_forward.1} parent=1 // pred_check_branch
      %13 = sbr.rel (0) target = $region9
    $region8: #{conv3d_block_forward.1} parent=1 // pred_region
      _
    $region9: #{conv3d_block_forward.1} parent=1 // pred_fallthru
      _
    // Predicated region
    $region10: #{conv3d_block_forward.1} parent=1 // pred_check
      _
    $region11: #{conv3d_block_forward.1} parent=1 // pred_check_branch
      %15 = sbr.rel (0) target = $region13
    $region12: #{conv3d_block_forward.1} parent=1 // pred_region
      _
    $region13: #{conv3d_block_forward.1} parent=1 // pred_fallthru
      _
    // Predicated region
    $region14: #{conv3d_block_forward.1} parent=1 // pred_check
      _
    $region15: #{conv3d_block_forward.1} parent=1 // pred_check_branch
      %17 = sbr.rel (0) target = $region17
    $region16: #{conv3d_block_forward.1} parent=1 // pred_region
      _
    $region17: #{conv3d_block_forward.1} parent=1 // pred_fallthru
      _
    %v19 = vld [vmem:[%s0] sm:$0xff]
    %v20 = vld [vmem:[%s0 + $0x8] sm:$0xff]
    %v21 = vld [vmem:[%s0 + $0x10] sm:$0xff]
    %v22 = vld [vmem:[%s0 + $0x18] sm:$0xff]
    %v23 = vld [vmem:[%s0 + $0x20] sm:$0xff]
    %v24 = vld [vmem:[%s0 + $0x28] sm:$0xff]
    %v25 = vld [vmem:[%s0 + $0x30] sm:$0xff]
    %v26 = vld [vmem:[%s0 + $0x38] sm:$0xff]
    %v27 = vld [vmem:[%s0 + $0x40] sm:$0xff]
    %v28 = vld [vmem:[%s0 + $0x48] sm:$0xff]
    %v29 = vld [vmem:[%s0 + $0x50] sm:$0xff]
    %v30 = vld [vmem:[%s0 + $0x58] sm:$0xff]
    %v31 = vld [vmem:[%s0 + $0x60] sm:$0xff]
    %v32 = vld [vmem:[%s0 + $0x68] sm:$0xff]
    %v33 = vld [vmem:[%s0 + $0x70] sm:$0xff]
    %v34 = vld [vmem:[%s0 + $0x78] sm:$0xff]
    %v35 = vld [vmem:[%s0 + $0x80] sm:$0xff]
    %v36 = vld [vmem:[%s0 + $0x88] sm:$0xff]
    %v37 = vld [vmem:[%s0 + $0x90] sm:$0xff]
    %v38 = vld [vmem:[%s0 + $0x98] sm:$0xff]
    %v39 = vld [vmem:[%s0 + $0xa0] sm:$0xff]
    %v40 = vld [vmem:[%s0 + $0xa8] sm:$0xff]
    %v41 = vld [vmem:[%s0 + $0xb0] sm:$0xff]
    %v42 = vld [vmem:[%s0 + $0xb8] sm:$0xff]
    %v43 = vld [vmem:[%s0 + $0xc0] sm:$0xff]
    %v44 = vld [vmem:[%s0 + $0xc8] sm:$0xff]
    %v45 = vld [vmem:[%s0 + $0xd0] sm:$0xff]
    %v46 = vld [vmem:[%s0 + $0xd8] sm:$0xff]
    %v47 = vld [vmem:[%s0 + $0xe0] sm:$0xff]
    %v48 = vld [vmem:[%s0 + $0xe8] sm:$0xff]
    %v49 = vld [vmem:[%s0 + $0xf0] sm:$0xff]
    %v50 = vld [vmem:[%s0 + $0xf8] sm:$0xff]
    %v51 = vld [vmem:[%s0 + $0x100] sm:$0xff]
    %v52 = vld [vmem:[%s0 + $0x108] sm:$0xff]
    %v53 = vld [vmem:[%s0 + $0x110] sm:$0xff]
    %v54 = vld [vmem:[%s0 + $0x118] sm:$0xff]
    %v55 = vld [vmem:[%s0 + $0x120] sm:$0xff]
    %v56 = vld [vmem:[%s0 + $0x128] sm:$0xff]
    %v57 = vld [vmem:[%s0 + $0x130] sm:$0xff]
    %v58 = vld [vmem:[%s0 + $0x138] sm:$0xff]
    %v59 = vld [vmem:[%s0 + $0x140] sm:$0xff]
    %v60 = vld [vmem:[%s0 + $0x148] sm:$0xff]
    %v61 = vld [vmem:[%s0 + $0x150] sm:$0xff]
    %v62 = vld [vmem:[%s0 + $0x158] sm:$0xff]
    %v63 = vld [vmem:[%s0 + $0x160] sm:$0xff]
    %v64 = vld [vmem:[%s0 + $0x168] sm:$0xff]
    %v65 = vld [vmem:[%s0 + $0x170] sm:$0xff]
    %v66 = vld [vmem:[%s0 + $0x178] sm:$0xff]
    %v67 = vld [vmem:[%s0 + $0x180] sm:$0xff]
    %v68 = vld [vmem:[%s0 + $0x188] sm:$0xff]
    %v69 = vld [vmem:[%s0 + $0x190] sm:$0xff]
    %v70 = vld [vmem:[%s0 + $0x198] sm:$0xff]
    %v71 = vld [vmem:[%s0 + $0x1a0] sm:$0xff]
    %v72 = vld [vmem:[%s0 + $0x1a8] sm:$0xff]
    %v73 = vld [vmem:[%s0 + $0x1b0] sm:$0xff]
    %v74 = vld [vmem:[%s0 + $0x1b8] sm:$0xff]
    %v75 = vld [vmem:[%s0 + $0x1c0] sm:$0xff]
    %v76 = vld [vmem:[%s0 + $0x1c8] sm:$0xff]
    %v77 = vld [vmem:[%s0 + $0x1d0] sm:$0xff]
    %v78 = vld [vmem:[%s0 + $0x1d8] sm:$0xff]
    %v79 = vld [vmem:[%s0 + $0x1e0] sm:$0xff]
    %v80 = vld [vmem:[%s0 + $0x1e8] sm:$0xff]
    %v81 = vld [vmem:[%s0 + $0x1f0] sm:$0xff]
    %v82 = vld [vmem:[%s0 + $0x1f8] sm:$0xff]
    %v83 = vld [vmem:[%s0 + $0x200] sm:$0xff]
    %v84 = vld [vmem:[%s0 + $0x208] sm:$0xff]
    %v85 = vld [vmem:[%s0 + $0x210] sm:$0xff]
    %v86 = vld [vmem:[%s0 + $0x218] sm:$0xff]
    %v87 = vld [vmem:[%s0 + $0x220] sm:$0xff]
    %v88 = vld [vmem:[%s0 + $0x228] sm:$0xff]
    %v89 = vld [vmem:[%s0 + $0x230] sm:$0xff]
    %v90 = vld [vmem:[%s0 + $0x238] sm:$0xff]
    %v91 = vld [vmem:[%s0 + $0x240] sm:$0xff]
    %v92 = vld [vmem:[%s0 + $0x248] sm:$0xff]
    %v93 = vld [vmem:[%s0 + $0x250] sm:$0xff]
    %v94 = vld [vmem:[%s0 + $0x258] sm:$0xff]
    %v95 = vld [vmem:[%s0 + $0x260] sm:$0xff]
    %v96 = vld [vmem:[%s0 + $0x268] sm:$0xff]
    %v97 = vld [vmem:[%s0 + $0x270] sm:$0xff]
    %v98 = vld [vmem:[%s0 + $0x278] sm:$0xff]
    %v99 = vld [vmem:[%s0 + $0x280] sm:$0xff]
    %v100 = vld [vmem:[%s0 + $0x288] sm:$0xff]
    %v101 = vld [vmem:[%s0 + $0x290] sm:$0xff]
    %v102 = vld [vmem:[%s0 + $0x298] sm:$0xff]
    %v103 = vld [vmem:[%s0 + $0x2a0] sm:$0xff]
    %v104 = vld [vmem:[%s0 + $0x2a8] sm:$0xff]
    %v105 = vld [vmem:[%s0 + $0x2b0] sm:$0xff]
    %v106 = vld [vmem:[%s0 + $0x2b8] sm:$0xff]
    %v107 = vld [vmem:[%s0 + $0x2c0] sm:$0xff]
    %v108 = vld [vmem:[%s0 + $0x2c8] sm:$0xff]
    %v109 = vld [vmem:[%s0 + $0x2d0] sm:$0xff]
    %v110 = vld [vmem:[%s0 + $0x2d8] sm:$0xff]
    %v111 = vld [vmem:[%s0 + $0x2e0] sm:$0xff]
    %v112 = vld [vmem:[%s0 + $0x2e8] sm:$0xff]
    %v113 = vld [vmem:[%s0 + $0x2f0] sm:$0xff]
    %v114 = vld [vmem:[%s0 + $0x2f8] sm:$0xff]
    %v115 = vld [vmem:[%s0 + $0x300] sm:$0xff]
    %v116 = vld [vmem:[%s0 + $0x308] sm:$0xff]
    %v117 = vld [vmem:[%s0 + $0x310] sm:$0xff]
    %v118 = vld [vmem:[%s0 + $0x318] sm:$0xff]
    %v119 = vld [vmem:[%s0 + $0x320] sm:$0xff]
    %v120 = vld [vmem:[%s0 + $0x328] sm:$0xff]
    %v121 = vld [vmem:[%s0 + $0x330] sm:$0xff]
    %v122 = vld [vmem:[%s0 + $0x338] sm:$0xff]
    %v123 = vld [vmem:[%s0 + $0x340] sm:$0xff]
    %v124 = vld [vmem:[%s0 + $0x348] sm:$0xff]
    %v125 = vld [vmem:[%s0 + $0x350] sm:$0xff]
    %v126 = vld [vmem:[%s0 + $0x358] sm:$0xff]
    %v127 = vld [vmem:[%s0 + $0x360] sm:$0xff]
    %v128 = vld [vmem:[%s0 + $0x368] sm:$0xff]
    %v129 = vld [vmem:[%s0 + $0x370] sm:$0xff]
    %v130 = vld [vmem:[%s0 + $0x378] sm:$0xff]
    %v131 = vld [vmem:[%s0 + $0x380] sm:$0xff]
    %v132 = vld [vmem:[%s0 + $0x388] sm:$0xff]
    %v133 = vld [vmem:[%s0 + $0x390] sm:$0xff]
    %v134 = vld [vmem:[%s0 + $0x398] sm:$0xff]
    %v135 = vld [vmem:[%s0 + $0x3a0] sm:$0xff]
    %v136 = vld [vmem:[%s0 + $0x3a8] sm:$0xff]
    %v137 = vld [vmem:[%s0 + $0x3b0] sm:$0xff]
    %v138 = vld [vmem:[%s0 + $0x3b8] sm:$0xff]
    %v139 = vld [vmem:[%s0 + $0x3c0] sm:$0xff]
    %v140 = vld [vmem:[%s0 + $0x3c8] sm:$0xff]
    %v141 = vld [vmem:[%s0 + $0x3d0] sm:$0xff]
    %v142 = vld [vmem:[%s0 + $0x3d8] sm:$0xff]
    %v143 = vld [vmem:[%s0 + $0x3e0] sm:$0xff]
    %v144 = vld [vmem:[%s0 + $0x3e8] sm:$0xff]
    %v145 = vld [vmem:[%s0 + $0x3f0] sm:$0xff]
    %v146 = vld [vmem:[%s0 + $0x3f8] sm:$0xff]
    %v147 = vld [vmem:[%s0 + $0x400] sm:$0xff]
    %v148 = vld [vmem:[%s0 + $0x408] sm:$0xff]
    %v149 = vld [vmem:[%s0 + $0x410] sm:$0xff]
    %v150 = vld [vmem:[%s0 + $0x418] sm:$0xff]
    %v151 = vld [vmem:[%s0 + $0x420] sm:$0xff]
    %v152 = vld [vmem:[%s0 + $0x428] sm:$0xff]
    %v153 = vld [vmem:[%s0 + $0x430] sm:$0xff]
    %v154 = vld [vmem:[%s0 + $0x438] sm:$0xff]
    %v155 = vld [vmem:[%s0 + $0x440] sm:$0xff]
    %v156 = vld [vmem:[%s0 + $0x448] sm:$0xff]
    %v157 = vld [vmem:[%s0 + $0x450] sm:$0xff]
    %v158 = vld [vmem:[%s0 + $0x458] sm:$0xff]
    %v159 = vld [vmem:[%s0 + $0x460] sm:$0xff]
    %v160 = vld [vmem:[%s0 + $0x468] sm:$0xff]
    %v161 = vld [vmem:[%s0 + $0x470] sm:$0xff]
    %v162 = vld [vmem:[%s0 + $0x478] sm:$0xff]
    %v163 = vld [vmem:[%s0 + $0x480] sm:$0xff]
    %v164 = vld [vmem:[%s0 + $0x488] sm:$0xff]
    %v165 = vld [vmem:[%s0 + $0x490] sm:$0xff]
    %v166 = vld [vmem:[%s0 + $0x498] sm:$0xff]
    %v167 = vld [vmem:[%s0 + $0x4a0] sm:$0xff]
    %v168 = vld [vmem:[%s0 + $0x4a8] sm:$0xff]
    %v169 = vld [vmem:[%s0 + $0x4b0] sm:$0xff]
    %v170 = vld [vmem:[%s0 + $0x4b8] sm:$0xff]
    %v171 = vld [vmem:[%s0 + $0x4c0] sm:$0xff]
    %v172 = vld [vmem:[%s0 + $0x4c8] sm:$0xff]
    %v173 = vld [vmem:[%s0 + $0x4d0] sm:$0xff]
    %v174 = vld [vmem:[%s0 + $0x4d8] sm:$0xff]
    %v175 = vld [vmem:[%s0 + $0x4e0] sm:$0xff]
    %v176 = vld [vmem:[%s0 + $0x4e8] sm:$0xff]
    %v177 = vld [vmem:[%s0 + $0x4f0] sm:$0xff]
    %v178 = vld [vmem:[%s0 + $0x4f8] sm:$0xff]
    %v179 = vld [vmem:[%s0 + $0x500] sm:$0xff]
    %v180 = vld [vmem:[%s0 + $0x508] sm:$0xff]
    %v181 = vld [vmem:[%s0 + $0x510] sm:$0xff]
    %v182 = vld [vmem:[%s0 + $0x518] sm:$0xff]
    %v183 = vld [vmem:[%s0 + $0x520] sm:$0xff]
    %v184 = vld [vmem:[%s0 + $0x528] sm:$0xff]
    %v185 = vld [vmem:[%s0 + $0x530] sm:$0xff]
    %v186 = vld [vmem:[%s0 + $0x538] sm:$0xff]
    %v187 = vld [vmem:[%s0 + $0x540] sm:$0xff]
    %v188 = vld [vmem:[%s0 + $0x548] sm:$0xff]
    %v189 = vld [vmem:[%s0 + $0x550] sm:$0xff]
    %v190 = vld [vmem:[%s0 + $0x558] sm:$0xff]
    %v191 = vld [vmem:[%s0 + $0x560] sm:$0xff]
    %v192 = vld [vmem:[%s0 + $0x568] sm:$0xff]
    %v193 = vld [vmem:[%s0 + $0x570] sm:$0xff]
    %v194 = vld [vmem:[%s0 + $0x578] sm:$0xff]
    %v195 = vld [vmem:[%s0 + $0x580] sm:$0xff]
    %v196 = vld [vmem:[%s0 + $0x588] sm:$0xff]
    %v197 = vld [vmem:[%s0 + $0x590] sm:$0xff]
    %v198 = vld [vmem:[%s0 + $0x598] sm:$0xff]
    %v199 = vld [vmem:[%s0 + $0x5a0] sm:$0xff]
    %v200 = vld [vmem:[%s0 + $0x5a8] sm:$0xff]
    %v201 = vld [vmem:[%s0 + $0x5b0] sm:$0xff]
    %v202 = vld [vmem:[%s0 + $0x5b8] sm:$0xff]
    %v203 = vld [vmem:[%s0 + $0x5c0] sm:$0xff]
    %v204 = vld [vmem:[%s0 + $0x5c8] sm:$0xff]
    %v205 = vld [vmem:[%s0 + $0x5d0] sm:$0xff]
    %v206 = vld [vmem:[%s0 + $0x5d8] sm:$0xff]
    %v207 = vld [vmem:[%s0 + $0x5e0] sm:$0xff]
    %v208 = vld [vmem:[%s0 + $0x5e8] sm:$0xff]
    %v209 = vld [vmem:[%s0 + $0x5f0] sm:$0xff]
    %v210 = vld [vmem:[%s0 + $0x5f8] sm:$0xff]
    %v211 = vld [vmem:[%s0 + $0x600] sm:$0xff]
    %v212 = vld [vmem:[%s0 + $0x608] sm:$0xff]
    %v213 = vld [vmem:[%s0 + $0x610] sm:$0xff]
    %v214 = vld [vmem:[%s0 + $0x618] sm:$0xff]
    %v215 = vld [vmem:[%s0 + $0x620] sm:$0xff]
    %v216 = vld [vmem:[%s0 + $0x628] sm:$0xff]
    %v217 = vld [vmem:[%s0 + $0x630] sm:$0xff]
    %v218 = vld [vmem:[%s0 + $0x638] sm:$0xff]
    %v219 = vld [vmem:[%s0 + $0x640] sm:$0xff]
    %v220 = vld [vmem:[%s0 + $0x648] sm:$0xff]
    %v221 = vld [vmem:[%s0 + $0x650] sm:$0xff]
    %v222 = vld [vmem:[%s0 + $0x658] sm:$0xff]
    %v223 = vld [vmem:[%s0 + $0x660] sm:$0xff]
    %v224 = vld [vmem:[%s0 + $0x668] sm:$0xff]
    %v225 = vld [vmem:[%s0 + $0x670] sm:$0xff]
    %v226 = vld [vmem:[%s0 + $0x678] sm:$0xff]
    %v227 = vld [vmem:[%s0 + $0x680] sm:$0xff]
    %v228 = vld [vmem:[%s0 + $0x688] sm:$0xff]
    %v229 = vld [vmem:[%s0 + $0x690] sm:$0xff]
    %v230 = vld [vmem:[%s0 + $0x698] sm:$0xff]
    %v231 = vld [vmem:[%s0 + $0x6a0] sm:$0xff]
    %v232 = vld [vmem:[%s0 + $0x6a8] sm:$0xff]
    %v233 = vld [vmem:[%s0 + $0x6b0] sm:$0xff]
    %v234 = vld [vmem:[%s0 + $0x6b8] sm:$0xff]
    %v235 = vld [vmem:[%s0 + $0x6c0] sm:$0xff]
    %v236 = vld [vmem:[%s0 + $0x6c8] sm:$0xff]
    %v237 = vld [vmem:[%s0 + $0x6d0] sm:$0xff]
    %v238 = vld [vmem:[%s0 + $0x6d8] sm:$0xff]
    %v239 = vld [vmem:[%s0 + $0x6e0] sm:$0xff]
    %v240 = vld [vmem:[%s0 + $0x6e8] sm:$0xff]
    %v241 = vld [vmem:[%s0 + $0x6f0] sm:$0xff]
    %v242 = vld [vmem:[%s0 + $0x6f8] sm:$0xff]
    %v243 = vld [vmem:[%s0 + $0x700] sm:$0xff]
    %v244 = vld [vmem:[%s0 + $0x708] sm:$0xff]
    %v245 = vld [vmem:[%s0 + $0x710] sm:$0xff]
    %v246 = vld [vmem:[%s0 + $0x718] sm:$0xff]
    %v247 = vld [vmem:[%s0 + $0x720] sm:$0xff]
    %v248 = vld [vmem:[%s0 + $0x728] sm:$0xff]
    %v249 = vld [vmem:[%s0 + $0x730] sm:$0xff]
    %v250 = vld [vmem:[%s0 + $0x738] sm:$0xff]
    %v251 = vld [vmem:[%s0 + $0x740] sm:$0xff]
    %v252 = vld [vmem:[%s0 + $0x748] sm:$0xff]
    %v253 = vld [vmem:[%s0 + $0x750] sm:$0xff]
    %v254 = vld [vmem:[%s0 + $0x758] sm:$0xff]
    %v255 = vld [vmem:[%s0 + $0x760] sm:$0xff]
    %v256 = vld [vmem:[%s0 + $0x768] sm:$0xff]
    %v257 = vld [vmem:[%s0 + $0x770] sm:$0xff]
    %v258 = vld [vmem:[%s0 + $0x778] sm:$0xff]
    %v259 = vld [vmem:[%s0 + $0x780] sm:$0xff]
    %v260 = vld [vmem:[%s0 + $0x788] sm:$0xff]
    %v261 = vld [vmem:[%s0 + $0x790] sm:$0xff]
    %v262 = vld [vmem:[%s0 + $0x798] sm:$0xff]
    %v263 = vld [vmem:[%s0 + $0x7a0] sm:$0xff]
    %v264 = vld [vmem:[%s0 + $0x7a8] sm:$0xff]
    %v265 = vld [vmem:[%s0 + $0x7b0] sm:$0xff]
    %v266 = vld [vmem:[%s0 + $0x7b8] sm:$0xff]
    %v267 = vld [vmem:[%s0 + $0x7c0] sm:$0xff]
    %v268 = vld [vmem:[%s0 + $0x7c8] sm:$0xff]
    %v269 = vld [vmem:[%s0 + $0x7d0] sm:$0xff]
    %v270 = vld [vmem:[%s0 + $0x7d8] sm:$0xff]
    %v271 = vld [vmem:[%s0 + $0x7e0] sm:$0xff]
    %v272 = vld [vmem:[%s0 + $0x7e8] sm:$0xff]
    %v273 = vld [vmem:[%s0 + $0x7f0] sm:$0xff]
    %v274 = vld [vmem:[%s0 + $0x7f8] sm:$0xff]
    %v275 = vld [vmem:[%s1] sm:$0xf]
    %v276 = vld [vmem:[%s1 + $0x4] sm:$0xf]
    %v277 = vld [vmem:[%s1 + $0x8] sm:$0xf]
    %v278 = vld [vmem:[%s1 + $0xc] sm:$0xf]
    %v279 = vld [vmem:[%s1 + $0x10] sm:$0xf]
    %v280 = vld [vmem:[%s1 + $0x14] sm:$0xf]
    %v281 = vld [vmem:[%s1 + $0x18] sm:$0xf]
    %v282 = vld [vmem:[%s1 + $0x1c] sm:$0xf]
    %v283 = vld [vmem:[%s1 + $0x20] sm:$0xf]
    %v284 = vld [vmem:[%s1 + $0x24] sm:$0xf]
    %v285 = vld [vmem:[%s1 + $0x28] sm:$0xf]
    %v286 = vld [vmem:[%s1 + $0x2c] sm:$0xf]
    %v287 = vld [vmem:[%s1 + $0x30] sm:$0xf]
    %v288 = vld [vmem:[%s1 + $0x34] sm:$0xf]
    %v289 = vld [vmem:[%s1 + $0x38] sm:$0xf]
    %v290 = vld [vmem:[%s1 + $0x3c] sm:$0xf]
    %v291 = vld [vmem:[%s1 + $0x40] sm:$0xf]
    %v292 = vld [vmem:[%s1 + $0x44] sm:$0xf]
    %v293 = vld [vmem:[%s1 + $0x48] sm:$0xf]
    %v294 = vld [vmem:[%s1 + $0x4c] sm:$0xf]
    %v295 = vld [vmem:[%s1 + $0x50] sm:$0xf]
    %v296 = vld [vmem:[%s1 + $0x54] sm:$0xf]
    %v297 = vld [vmem:[%s1 + $0x58] sm:$0xf]
    %v298 = vld [vmem:[%s1 + $0x5c] sm:$0xf]
    %v299 = vld [vmem:[%s1 + $0x60] sm:$0xf]
    %v300 = vld [vmem:[%s1 + $0x64] sm:$0xf]
    %v301 = vld [vmem:[%s1 + $0x68] sm:$0xf]
    %v302 = vld [vmem:[%s1 + $0x6c] sm:$0xf]
    %v303 = vld [vmem:[%s1 + $0x70] sm:$0xf]
    %v304 = vld [vmem:[%s1 + $0x74] sm:$0xf]
    %v305 = vld [vmem:[%s1 + $0x78] sm:$0xf]
    %v306 = vld [vmem:[%s1 + $0x7c] sm:$0xf]
    %v307 = vld [vmem:[%s1 + $0x80] sm:$0xf]
    %v308 = vld [vmem:[%s1 + $0x84] sm:$0xf]
    %v309 = vld [vmem:[%s1 + $0x88] sm:$0xf]
    %v310 = vld [vmem:[%s1 + $0x8c] sm:$0xf]
    %v311 = vld [vmem:[%s1 + $0x90] sm:$0xf]
    %v312 = vld [vmem:[%s1 + $0x94] sm:$0xf]
    %v313 = vld [vmem:[%s1 + $0x98] sm:$0xf]
    %v314 = vld [vmem:[%s1 + $0x9c] sm:$0xf]
    %v315 = vld [vmem:[%s1 + $0xa0] sm:$0xf]
    %v316 = vld [vmem:[%s1 + $0xa4] sm:$0xf]
    %v317 = vld [vmem:[%s1 + $0xa8] sm:$0xf]
    %v318 = vld [vmem:[%s1 + $0xac] sm:$0xf]
    %v319 = vld [vmem:[%s1 + $0xb0] sm:$0xf]
    %v320 = vld [vmem:[%s1 + $0xb4] sm:$0xf]
    %v321 = vld [vmem:[%s1 + $0xb8] sm:$0xf]
    %v322 = vld [vmem:[%s1 + $0xbc] sm:$0xf]
    %v323 = vld [vmem:[%s1 + $0xc0] sm:$0xf]
    %v324 = vld [vmem:[%s1 + $0xc4] sm:$0xf]
    %v325 = vld [vmem:[%s1 + $0xc8] sm:$0xf]
    %v326 = vld [vmem:[%s1 + $0xcc] sm:$0xf]
    %v327 = vld [vmem:[%s1 + $0xd0] sm:$0xf]
    %v328 = vld [vmem:[%s1 + $0xd4] sm:$0xf]
    %v329 = vld [vmem:[%s1 + $0xd8] sm:$0xf]
    %v330 = vld [vmem:[%s1 + $0xdc] sm:$0xf]
    %v331 = vld [vmem:[%s1 + $0xe0] sm:$0xf]
    %v332 = vld [vmem:[%s1 + $0xe4] sm:$0xf]
    %v333 = vld [vmem:[%s1 + $0xe8] sm:$0xf]
    %v334 = vld [vmem:[%s1 + $0xec] sm:$0xf]
    %v335 = vld [vmem:[%s1 + $0xf0] sm:$0xf]
    %v336 = vld [vmem:[%s1 + $0xf4] sm:$0xf]
    %v337 = vld [vmem:[%s1 + $0xf8] sm:$0xf]
    %v338 = vld [vmem:[%s1 + $0xfc] sm:$0xf]
    %v595 = vunpack.c.l.b16 %v19
    %v596 = vunpack.c.h.b16 %v19
    %v597 = vunpack.c.l.b16 %v20
    %v598 = vunpack.c.h.b16 %v20
    %v599 = vunpack.c.l.b16 %v21
    %v600 = vunpack.c.h.b16 %v21
    %v601 = vunpack.c.l.b16 %v22
    %v602 = vunpack.c.h.b16 %v22
    %v603 = vunpack.c.l.b16 %v23
    %v604 = vunpack.c.h.b16 %v23
    %v605 = vunpack.c.l.b16 %v24
    %v606 = vunpack.c.h.b16 %v24
    %v607 = vunpack.c.l.b16 %v25
    %v608 = vunpack.c.h.b16 %v25
    %v609 = vunpack.c.l.b16 %v26
    %v610 = vunpack.c.h.b16 %v26
    %v611 = vunpack.c.l.b16 %v27
    %v612 = vunpack.c.h.b16 %v27
    %v613 = vunpack.c.l.b16 %v28
    %v614 = vunpack.c.h.b16 %v28
    %v615 = vunpack.c.l.b16 %v29
    %v616 = vunpack.c.h.b16 %v29
    %v617 = vunpack.c.l.b16 %v30
    %v618 = vunpack.c.h.b16 %v30
    %v619 = vunpack.c.l.b16 %v31
    %v620 = vunpack.c.h.b16 %v31
    %v621 = vunpack.c.l.b16 %v32
    %v622 = vunpack.c.h.b16 %v32
    %v623 = vunpack.c.l.b16 %v33
    %v624 = vunpack.c.h.b16 %v33
    %v625 = vunpack.c.l.b16 %v34
    %v626 = vunpack.c.h.b16 %v34
    %v627 = vunpack.c.l.b16 %v35
    %v628 = vunpack.c.h.b16 %v35
    %v629 = vunpack.c.l.b16 %v36
    %v630 = vunpack.c.h.b16 %v36
    %v631 = vunpack.c.l.b16 %v37
    %v632 = vunpack.c.h.b16 %v37
    %v633 = vunpack.c.l.b16 %v38
    %v634 = vunpack.c.h.b16 %v38
    %v635 = vunpack.c.l.b16 %v39
    %v636 = vunpack.c.h.b16 %v39
    %v637 = vunpack.c.l.b16 %v40
    %v638 = vunpack.c.h.b16 %v40
    %v639 = vunpack.c.l.b16 %v41
    %v640 = vunpack.c.h.b16 %v41
    %v641 = vunpack.c.l.b16 %v42
    %v642 = vunpack.c.h.b16 %v42
    %v643 = vunpack.c.l.b16 %v43
    %v644 = vunpack.c.h.b16 %v43
    %v645 = vunpack.c.l.b16 %v44
    %v646 = vunpack.c.h.b16 %v44
    %v647 = vunpack.c.l.b16 %v45
    %v648 = vunpack.c.h.b16 %v45
    %v649 = vunpack.c.l.b16 %v46
    %v650 = vunpack.c.h.b16 %v46
    %v651 = vunpack.c.l.b16 %v47
    %v652 = vunpack.c.h.b16 %v47
    %v653 = vunpack.c.l.b16 %v48
    %v654 = vunpack.c.h.b16 %v48
    %v655 = vunpack.c.l.b16 %v49
    %v656 = vunpack.c.h.b16 %v49
    %v657 = vunpack.c.l.b16 %v50
    %v658 = vunpack.c.h.b16 %v50
    %v659 = vunpack.c.l.b16 %v51
    %v660 = vunpack.c.h.b16 %v51
    %v661 = vunpack.c.l.b16 %v52
    %v662 = vunpack.c.h.b16 %v52
    %v663 = vunpack.c.l.b16 %v53
    %v664 = vunpack.c.h.b16 %v53
    %v665 = vunpack.c.l.b16 %v54
    %v666 = vunpack.c.h.b16 %v54
    %v667 = vunpack.c.l.b16 %v55
    %v668 = vunpack.c.h.b16 %v55
    %v669 = vunpack.c.l.b16 %v56
    %v670 = vunpack.c.h.b16 %v56
    %v671 = vunpack.c.l.b16 %v57
    %v672 = vunpack.c.h.b16 %v57
    %v673 = vunpack.c.l.b16 %v58
    %v674 = vunpack.c.h.b16 %v58
    %v675 = vunpack.c.l.b16 %v59
    %v676 = vunpack.c.h.b16 %v59
    %v677 = vunpack.c.l.b16 %v60
    %v678 = vunpack.c.h.b16 %v60
    %v679 = vunpack.c.l.b16 %v61
    %v680 = vunpack.c.h.b16 %v61
    %v681 = vunpack.c.l.b16 %v62
    %v682 = vunpack.c.h.b16 %v62
    %v683 = vunpack.c.l.b16 %v63
    %v684 = vunpack.c.h.b16 %v63
    %v685 = vunpack.c.l.b16 %v64
    %v686 = vunpack.c.h.b16 %v64
    %v687 = vunpack.c.l.b16 %v65
    %v688 = vunpack.c.h.b16 %v65
    %v689 = vunpack.c.l.b16 %v66
    %v690 = vunpack.c.h.b16 %v66
    %v691 = vunpack.c.l.b16 %v67
    %v692 = vunpack.c.h.b16 %v67
    %v693 = vunpack.c.l.b16 %v68
    %v694 = vunpack.c.h.b16 %v68
    %v695 = vunpack.c.l.b16 %v69
    %v696 = vunpack.c.h.b16 %v69
    %v697 = vunpack.c.l.b16 %v70
    %v698 = vunpack.c.h.b16 %v70
    %v699 = vunpack.c.l.b16 %v71
    %v700 = vunpack.c.h.b16 %v71
    %v701 = vunpack.c.l.b16 %v72
    %v702 = vunpack.c.h.b16 %v72
    %v703 = vunpack.c.l.b16 %v73
    %v704 = vunpack.c.h.b16 %v73
    %v705 = vunpack.c.l.b16 %v74
    %v706 = vunpack.c.h.b16 %v74
    %v707 = vunpack.c.l.b16 %v75
    %v708 = vunpack.c.h.b16 %v75
    %v709 = vunpack.c.l.b16 %v76
    %v710 = vunpack.c.h.b16 %v76
    %v711 = vunpack.c.l.b16 %v77
    %v712 = vunpack.c.h.b16 %v77
    %v713 = vunpack.c.l.b16 %v78
    %v714 = vunpack.c.h.b16 %v78
    %v715 = vunpack.c.l.b16 %v79
    %v716 = vunpack.c.h.b16 %v79
    %v717 = vunpack.c.l.b16 %v80
    %v718 = vunpack.c.h.b16 %v80
    %v719 = vunpack.c.l.b16 %v81
    %v720 = vunpack.c.h.b16 %v81
    %v721 = vunpack.c.l.b16 %v82
    %v722 = vunpack.c.h.b16 %v82
    %v723 = vunpack.c.l.b16 %v83
    %v724 = vunpack.c.h.b16 %v83
    %v725 = vunpack.c.l.b16 %v84
    %v726 = vunpack.c.h.b16 %v84
    %v727 = vunpack.c.l.b16 %v85
    %v728 = vunpack.c.h.b16 %v85
    %v729 = vunpack.c.l.b16 %v86
    %v730 = vunpack.c.h.b16 %v86
    %v731 = vunpack.c.l.b16 %v87
    %v732 = vunpack.c.h.b16 %v87
    %v733 = vunpack.c.l.b16 %v88
    %v734 = vunpack.c.h.b16 %v88
    %v735 = vunpack.c.l.b16 %v89
    %v736 = vunpack.c.h.b16 %v89
    %v737 = vunpack.c.l.b16 %v90
    %v738 = vunpack.c.h.b16 %v90
    %v739 = vunpack.c.l.b16 %v91
    %v740 = vunpack.c.h.b16 %v91
    %v741 = vunpack.c.l.b16 %v92
    %v742 = vunpack.c.h.b16 %v92
    %v743 = vunpack.c.l.b16 %v93
    %v744 = vunpack.c.h.b16 %v93
    %v745 = vunpack.c.l.b16 %v94
    %v746 = vunpack.c.h.b16 %v94
    %v747 = vunpack.c.l.b16 %v95
    %v748 = vunpack.c.h.b16 %v95
    %v749 = vunpack.c.l.b16 %v96
    %v750 = vunpack.c.h.b16 %v96
    %v751 = vunpack.c.l.b16 %v97
    %v752 = vunpack.c.h.b16 %v97
    %v753 = vunpack.c.l.b16 %v98
    %v754 = vunpack.c.h.b16 %v98
    %v755 = vunpack.c.l.b16 %v99
    %v756 = vunpack.c.h.b16 %v99
    %v757 = vunpack.c.l.b16 %v100
    %v758 = vunpack.c.h.b16 %v100
    %v759 = vunpack.c.l.b16 %v101
    %v760 = vunpack.c.h.b16 %v101
    %v761 = vunpack.c.l.b16 %v102
    %v762 = vunpack.c.h.b16 %v102
    %v763 = vunpack.c.l.b16 %v103
    %v764 = vunpack.c.h.b16 %v103
    %v765 = vunpack.c.l.b16 %v104
    %v766 = vunpack.c.h.b16 %v104
    %v767 = vunpack.c.l.b16 %v105
    %v768 = vunpack.c.h.b16 %v105
    %v769 = vunpack.c.l.b16 %v106
    %v770 = vunpack.c.h.b16 %v106
    %v771 = vunpack.c.l.b16 %v107
    %v772 = vunpack.c.h.b16 %v107
    %v773 = vunpack.c.l.b16 %v108
    %v774 = vunpack.c.h.b16 %v108
    %v775 = vunpack.c.l.b16 %v109
    %v776 = vunpack.c.h.b16 %v109
    %v777 = vunpack.c.l.b16 %v110
    %v778 = vunpack.c.h.b16 %v110
    %v779 = vunpack.c.l.b16 %v111
    %v780 = vunpack.c.h.b16 %v111
    %v781 = vunpack.c.l.b16 %v112
    %v782 = vunpack.c.h.b16 %v112
    %v783 = vunpack.c.l.b16 %v113
    %v784 = vunpack.c.h.b16 %v113
    %v785 = vunpack.c.l.b16 %v114
    %v786 = vunpack.c.h.b16 %v114
    %v787 = vunpack.c.l.b16 %v115
    %v788 = vunpack.c.h.b16 %v115
    %v789 = vunpack.c.l.b16 %v116
    %v790 = vunpack.c.h.b16 %v116
    %v791 = vunpack.c.l.b16 %v117
    %v792 = vunpack.c.h.b16 %v117
    %v793 = vunpack.c.l.b16 %v118
    %v794 = vunpack.c.h.b16 %v118
    %v795 = vunpack.c.l.b16 %v119
    %v796 = vunpack.c.h.b16 %v119
    %v797 = vunpack.c.l.b16 %v120
    %v798 = vunpack.c.h.b16 %v120
    %v799 = vunpack.c.l.b16 %v121
    %v800 = vunpack.c.h.b16 %v121
    %v801 = vunpack.c.l.b16 %v122
    %v802 = vunpack.c.h.b16 %v122
    %v803 = vunpack.c.l.b16 %v123
    %v804 = vunpack.c.h.b16 %v123
    %v805 = vunpack.c.l.b16 %v124
    %v806 = vunpack.c.h.b16 %v124
    %v807 = vunpack.c.l.b16 %v125
    %v808 = vunpack.c.h.b16 %v125
    %v809 = vunpack.c.l.b16 %v126
    %v810 = vunpack.c.h.b16 %v126
    %v811 = vunpack.c.l.b16 %v127
    %v812 = vunpack.c.h.b16 %v127
    %v813 = vunpack.c.l.b16 %v128
    %v814 = vunpack.c.h.b16 %v128
    %v815 = vunpack.c.l.b16 %v129
    %v816 = vunpack.c.h.b16 %v129
    %v817 = vunpack.c.l.b16 %v130
    %v818 = vunpack.c.h.b16 %v130
    %v819 = vunpack.c.l.b16 %v131
    %v820 = vunpack.c.h.b16 %v131
    %v821 = vunpack.c.l.b16 %v132
    %v822 = vunpack.c.h.b16 %v132
    %v823 = vunpack.c.l.b16 %v133
    %v824 = vunpack.c.h.b16 %v133
    %v825 = vunpack.c.l.b16 %v134
    %v826 = vunpack.c.h.b16 %v134
    %v827 = vunpack.c.l.b16 %v135
    %v828 = vunpack.c.h.b16 %v135
    %v829 = vunpack.c.l.b16 %v136
    %v830 = vunpack.c.h.b16 %v136
    %v831 = vunpack.c.l.b16 %v137
    %v832 = vunpack.c.h.b16 %v137
    %v833 = vunpack.c.l.b16 %v138
    %v834 = vunpack.c.h.b16 %v138
    %v835 = vunpack.c.l.b16 %v139
    %v836 = vunpack.c.h.b16 %v139
    %v837 = vunpack.c.l.b16 %v140
    %v838 = vunpack.c.h.b16 %v140
    %v839 = vunpack.c.l.b16 %v141
    %v840 = vunpack.c.h.b16 %v141
    %v841 = vunpack.c.l.b16 %v142
    %v842 = vunpack.c.h.b16 %v142
    %v843 = vunpack.c.l.b16 %v143
    %v844 = vunpack.c.h.b16 %v143
    %v845 = vunpack.c.l.b16 %v144
    %v846 = vunpack.c.h.b16 %v144
    %v847 = vunpack.c.l.b16 %v145
    %v848 = vunpack.c.h.b16 %v145
    %v849 = vunpack.c.l.b16 %v146
    %v850 = vunpack.c.h.b16 %v146
    %v851 = vunpack.c.l.b16 %v147
    %v852 = vunpack.c.h.b16 %v147
    %v853 = vunpack.c.l.b16 %v148
    %v854 = vunpack.c.h.b16 %v148
    %v855 = vunpack.c.l.b16 %v149
    %v856 = vunpack.c.h.b16 %v149
    %v857 = vunpack.c.l.b16 %v150
    %v858 = vunpack.c.h.b16 %v150
    %v859 = vunpack.c.l.b16 %v151
    %v860 = vunpack.c.h.b16 %v151
    %v861 = vunpack.c.l.b16 %v152
    %v862 = vunpack.c.h.b16 %v152
    %v863 = vunpack.c.l.b16 %v153
    %v864 = vunpack.c.h.b16 %v153
    %v865 = vunpack.c.l.b16 %v154
    %v866 = vunpack.c.h.b16 %v154
    %v867 = vunpack.c.l.b16 %v155
    %v868 = vunpack.c.h.b16 %v155
    %v869 = vunpack.c.l.b16 %v156
    %v870 = vunpack.c.h.b16 %v156
    %v871 = vunpack.c.l.b16 %v157
    %v872 = vunpack.c.h.b16 %v157
    %v873 = vunpack.c.l.b16 %v158
    %v874 = vunpack.c.h.b16 %v158
    %v875 = vunpack.c.l.b16 %v159
    %v876 = vunpack.c.h.b16 %v159
    %v877 = vunpack.c.l.b16 %v160
    %v878 = vunpack.c.h.b16 %v160
    %v879 = vunpack.c.l.b16 %v161
    %v880 = vunpack.c.h.b16 %v161
    %v881 = vunpack.c.l.b16 %v162
    %v882 = vunpack.c.h.b16 %v162
    %v883 = vunpack.c.l.b16 %v163
    %v884 = vunpack.c.h.b16 %v163
    %v885 = vunpack.c.l.b16 %v164
    %v886 = vunpack.c.h.b16 %v164
    %v887 = vunpack.c.l.b16 %v165
    %v888 = vunpack.c.h.b16 %v165
    %v889 = vunpack.c.l.b16 %v166
    %v890 = vunpack.c.h.b16 %v166
    %v891 = vunpack.c.l.b16 %v167
    %v892 = vunpack.c.h.b16 %v167
    %v893 = vunpack.c.l.b16 %v168
    %v894 = vunpack.c.h.b16 %v168
    %v895 = vunpack.c.l.b16 %v169
    %v896 = vunpack.c.h.b16 %v169
    %v897 = vunpack.c.l.b16 %v170
    %v898 = vunpack.c.h.b16 %v170
    %v899 = vunpack.c.l.b16 %v171
    %v900 = vunpack.c.h.b16 %v171
    %v901 = vunpack.c.l.b16 %v172
    %v902 = vunpack.c.h.b16 %v172
    %v903 = vunpack.c.l.b16 %v173
    %v904 = vunpack.c.h.b16 %v173
    %v905 = vunpack.c.l.b16 %v174
    %v906 = vunpack.c.h.b16 %v174
    %v907 = vunpack.c.l.b16 %v175
    %v908 = vunpack.c.h.b16 %v175
    %v909 = vunpack.c.l.b16 %v176
    %v910 = vunpack.c.h.b16 %v176
    %v911 = vunpack.c.l.b16 %v177
    %v912 = vunpack.c.h.b16 %v177
    %v913 = vunpack.c.l.b16 %v178
    %v914 = vunpack.c.h.b16 %v178
    %v915 = vunpack.c.l.b16 %v179
    %v916 = vunpack.c.h.b16 %v179
    %v917 = vunpack.c.l.b16 %v180
    %v918 = vunpack.c.h.b16 %v180
    %v919 = vunpack.c.l.b16 %v181
    %v920 = vunpack.c.h.b16 %v181
    %v921 = vunpack.c.l.b16 %v182
    %v922 = vunpack.c.h.b16 %v182
    %v923 = vunpack.c.l.b16 %v183
    %v924 = vunpack.c.h.b16 %v183
    %v925 = vunpack.c.l.b16 %v184
    %v926 = vunpack.c.h.b16 %v184
    %v927 = vunpack.c.l.b16 %v185
    %v928 = vunpack.c.h.b16 %v185
    %v929 = vunpack.c.l.b16 %v186
    %v930 = vunpack.c.h.b16 %v186
    %v931 = vunpack.c.l.b16 %v187
    %v932 = vunpack.c.h.b16 %v187
    %v933 = vunpack.c.l.b16 %v188
    %v934 = vunpack.c.h.b16 %v188
    %v935 = vunpack.c.l.b16 %v189
    %v936 = vunpack.c.h.b16 %v189
    %v937 = vunpack.c.l.b16 %v190
    %v938 = vunpack.c.h.b16 %v190
    %v939 = vunpack.c.l.b16 %v191
    %v940 = vunpack.c.h.b16 %v191
    %v941 = vunpack.c.l.b16 %v192
    %v942 = vunpack.c.h.b16 %v192
    %v943 = vunpack.c.l.b16 %v193
    %v944 = vunpack.c.h.b16 %v193
    %v945 = vunpack.c.l.b16 %v194
    %v946 = vunpack.c.h.b16 %v194
    %v947 = vunpack.c.l.b16 %v195
    %v948 = vunpack.c.h.b16 %v195
    %v949 = vunpack.c.l.b16 %v196
    %v950 = vunpack.c.h.b16 %v196
    %v951 = vunpack.c.l.b16 %v197
    %v952 = vunpack.c.h.b16 %v197
    %v953 = vunpack.c.l.b16 %v198
    %v954 = vunpack.c.h.b16 %v198
    %v955 = vunpack.c.l.b16 %v199
    %v956 = vunpack.c.h.b16 %v199
    %v957 = vunpack.c.l.b16 %v200
    %v958 = vunpack.c.h.b16 %v200
    %v959 = vunpack.c.l.b16 %v201
    %v960 = vunpack.c.h.b16 %v201
    %v961 = vunpack.c.l.b16 %v202
    %v962 = vunpack.c.h.b16 %v202
    %v963 = vunpack.c.l.b16 %v203
    %v964 = vunpack.c.h.b16 %v203
    %v965 = vunpack.c.l.b16 %v204
    %v966 = vunpack.c.h.b16 %v204
    %v967 = vunpack.c.l.b16 %v205
    %v968 = vunpack.c.h.b16 %v205
    %v969 = vunpack.c.l.b16 %v206
    %v970 = vunpack.c.h.b16 %v206
    %v971 = vunpack.c.l.b16 %v207
    %v972 = vunpack.c.h.b16 %v207
    %v973 = vunpack.c.l.b16 %v208
    %v974 = vunpack.c.h.b16 %v208
    %v975 = vunpack.c.l.b16 %v209
    %v976 = vunpack.c.h.b16 %v209
    %v977 = vunpack.c.l.b16 %v210
    %v978 = vunpack.c.h.b16 %v210
    %v979 = vunpack.c.l.b16 %v211
    %v980 = vunpack.c.h.b16 %v211
    %v981 = vunpack.c.l.b16 %v212
    %v982 = vunpack.c.h.b16 %v212
    %v983 = vunpack.c.l.b16 %v213
    %v984 = vunpack.c.h.b16 %v213
    %v985 = vunpack.c.l.b16 %v214
    %v986 = vunpack.c.h.b16 %v214
    %v987 = vunpack.c.l.b16 %v215
    %v988 = vunpack.c.h.b16 %v215
    %v989 = vunpack.c.l.b16 %v216
    %v990 = vunpack.c.h.b16 %v216
    %v991 = vunpack.c.l.b16 %v217
    %v992 = vunpack.c.h.b16 %v217
    %v993 = vunpack.c.l.b16 %v218
    %v994 = vunpack.c.h.b16 %v218
    %v995 = vunpack.c.l.b16 %v219
    %v996 = vunpack.c.h.b16 %v219
    %v997 = vunpack.c.l.b16 %v220
    %v998 = vunpack.c.h.b16 %v220
    %v999 = vunpack.c.l.b16 %v221
    %v1000 = vunpack.c.h.b16 %v221
    %v1001 = vunpack.c.l.b16 %v222
    %v1002 = vunpack.c.h.b16 %v222
    %v1003 = vunpack.c.l.b16 %v223
    %v1004 = vunpack.c.h.b16 %v223
    %v1005 = vunpack.c.l.b16 %v224
    %v1006 = vunpack.c.h.b16 %v224
    %v1007 = vunpack.c.l.b16 %v225
    %v1008 = vunpack.c.h.b16 %v225
    %v1009 = vunpack.c.l.b16 %v226
    %v1010 = vunpack.c.h.b16 %v226
    %v1011 = vunpack.c.l.b16 %v227
    %v1012 = vunpack.c.h.b16 %v227
    %v1013 = vunpack.c.l.b16 %v228
    %v1014 = vunpack.c.h.b16 %v228
    %v1015 = vunpack.c.l.b16 %v229
    %v1016 = vunpack.c.h.b16 %v229
    %v1017 = vunpack.c.l.b16 %v230
    %v1018 = vunpack.c.h.b16 %v230
    %v1019 = vunpack.c.l.b16 %v231
    %v1020 = vunpack.c.h.b16 %v231
    %v1021 = vunpack.c.l.b16 %v232
    %v1022 = vunpack.c.h.b16 %v232
    %v1023 = vunpack.c.l.b16 %v233
    %v1024 = vunpack.c.h.b16 %v233
    %v1025 = vunpack.c.l.b16 %v234
    %v1026 = vunpack.c.h.b16 %v234
    %v1027 = vunpack.c.l.b16 %v235
    %v1028 = vunpack.c.h.b16 %v235
    %v1029 = vunpack.c.l.b16 %v236
    %v1030 = vunpack.c.h.b16 %v236
    %v1031 = vunpack.c.l.b16 %v237
    %v1032 = vunpack.c.h.b16 %v237
    %v1033 = vunpack.c.l.b16 %v238
    %v1034 = vunpack.c.h.b16 %v238
    %v1035 = vunpack.c.l.b16 %v239
    %v1036 = vunpack.c.h.b16 %v239
    %v1037 = vunpack.c.l.b16 %v240
    %v1038 = vunpack.c.h.b16 %v240
    %v1039 = vunpack.c.l.b16 %v241
    %v1040 = vunpack.c.h.b16 %v241
    %v1041 = vunpack.c.l.b16 %v242
    %v1042 = vunpack.c.h.b16 %v242
    %v1043 = vunpack.c.l.b16 %v243
    %v1044 = vunpack.c.h.b16 %v243
    %v1045 = vunpack.c.l.b16 %v244
    %v1046 = vunpack.c.h.b16 %v244
    %v1047 = vunpack.c.l.b16 %v245
    %v1048 = vunpack.c.h.b16 %v245
    %v1049 = vunpack.c.l.b16 %v246
    %v1050 = vunpack.c.h.b16 %v246
    %v1051 = vunpack.c.l.b16 %v247
    %v1052 = vunpack.c.h.b16 %v247
    %v1053 = vunpack.c.l.b16 %v248
    %v1054 = vunpack.c.h.b16 %v248
    %v1055 = vunpack.c.l.b16 %v249
    %v1056 = vunpack.c.h.b16 %v249
    %v1057 = vunpack.c.l.b16 %v250
    %v1058 = vunpack.c.h.b16 %v250
    %v1059 = vunpack.c.l.b16 %v251
    %v1060 = vunpack.c.h.b16 %v251
    %v1061 = vunpack.c.l.b16 %v252
    %v1062 = vunpack.c.h.b16 %v252
    %v1063 = vunpack.c.l.b16 %v253
    %v1064 = vunpack.c.h.b16 %v253
    %v1065 = vunpack.c.l.b16 %v254
    %v1066 = vunpack.c.h.b16 %v254
    %v1067 = vunpack.c.l.b16 %v255
    %v1068 = vunpack.c.h.b16 %v255
    %v1069 = vunpack.c.l.b16 %v256
    %v1070 = vunpack.c.h.b16 %v256
    %v1071 = vunpack.c.l.b16 %v257
    %v1072 = vunpack.c.h.b16 %v257
    %v1073 = vunpack.c.l.b16 %v258
    %v1074 = vunpack.c.h.b16 %v258
    %v1075 = vunpack.c.l.b16 %v259
    %v1076 = vunpack.c.h.b16 %v259
    %v1077 = vunpack.c.l.b16 %v260
    %v1078 = vunpack.c.h.b16 %v260
    %v1079 = vunpack.c.l.b16 %v261
    %v1080 = vunpack.c.h.b16 %v261
    %v1081 = vunpack.c.l.b16 %v262
    %v1082 = vunpack.c.h.b16 %v262
    %v1083 = vunpack.c.l.b16 %v263
    %v1084 = vunpack.c.h.b16 %v263
    %v1085 = vunpack.c.l.b16 %v264
    %v1086 = vunpack.c.h.b16 %v264
    %v1087 = vunpack.c.l.b16 %v265
    %v1088 = vunpack.c.h.b16 %v265
    %v1089 = vunpack.c.l.b16 %v266
    %v1090 = vunpack.c.h.b16 %v266
    %v1091 = vunpack.c.l.b16 %v267
    %v1092 = vunpack.c.h.b16 %v267
    %v1093 = vunpack.c.l.b16 %v268
    %v1094 = vunpack.c.h.b16 %v268
    %v1095 = vunpack.c.l.b16 %v269
    %v1096 = vunpack.c.h.b16 %v269
    %v1097 = vunpack.c.l.b16 %v270
    %v1098 = vunpack.c.h.b16 %v270
    %v1099 = vunpack.c.l.b16 %v271
    %v1100 = vunpack.c.h.b16 %v271
    %v1101 = vunpack.c.l.b16 %v272
    %v1102 = vunpack.c.h.b16 %v272
    %v1103 = vunpack.c.l.b16 %v273
    %v1104 = vunpack.c.h.b16 %v273
    %v1105 = vunpack.c.l.b16 %v274
    %v1106 = vunpack.c.h.b16 %v274
    %v1107 = vpack.c.b16 %v599, %v595
    %v1108 = vpack.c.b16 %v600, %v596
    %v1109 = vpack.c.b16 %v601, %v597
    %v1110 = vpack.c.b16 %v602, %v598
    %v1111 = vpack.c.b16 %v607, %v603
    %v1112 = vpack.c.b16 %v608, %v604
    %v1113 = vpack.c.b16 %v609, %v605
    %v1114 = vpack.c.b16 %v610, %v606
    %v1115 = vpack.c.b16 %v615, %v611
    %v1116 = vpack.c.b16 %v616, %v612
    %v1117 = vpack.c.b16 %v617, %v613
    %v1118 = vpack.c.b16 %v618, %v614
    %v1119 = vpack.c.b16 %v623, %v619
    %v1120 = vpack.c.b16 %v624, %v620
    %v1121 = vpack.c.b16 %v625, %v621
    %v1122 = vpack.c.b16 %v626, %v622
    %v1123 = vpack.c.b16 %v631, %v627
    %v1124 = vpack.c.b16 %v632, %v628
    %v1125 = vpack.c.b16 %v633, %v629
    %v1126 = vpack.c.b16 %v634, %v630
    %v1127 = vpack.c.b16 %v639, %v635
    %v1128 = vpack.c.b16 %v640, %v636
    %v1129 = vpack.c.b16 %v641, %v637
    %v1130 = vpack.c.b16 %v642, %v638
    %v1131 = vpack.c.b16 %v647, %v643
    %v1132 = vpack.c.b16 %v648, %v644
    %v1133 = vpack.c.b16 %v649, %v645
    %v1134 = vpack.c.b16 %v650, %v646
    %v1135 = vpack.c.b16 %v655, %v651
    %v1136 = vpack.c.b16 %v656, %v652
    %v1137 = vpack.c.b16 %v657, %v653
    %v1138 = vpack.c.b16 %v658, %v654
    %v1139 = vpack.c.b16 %v663, %v659
    %v1140 = vpack.c.b16 %v664, %v660
    %v1141 = vpack.c.b16 %v665, %v661
    %v1142 = vpack.c.b16 %v666, %v662
    %v1143 = vpack.c.b16 %v671, %v667
    %v1144 = vpack.c.b16 %v672, %v668
    %v1145 = vpack.c.b16 %v673, %v669
    %v1146 = vpack.c.b16 %v674, %v670
    %v1147 = vpack.c.b16 %v679, %v675
    %v1148 = vpack.c.b16 %v680, %v676
    %v1149 = vpack.c.b16 %v681, %v677
    %v1150 = vpack.c.b16 %v682, %v678
    %v1151 = vpack.c.b16 %v687, %v683
    %v1152 = vpack.c.b16 %v688, %v684
    %v1153 = vpack.c.b16 %v689, %v685
    %v1154 = vpack.c.b16 %v690, %v686
    %v1155 = vpack.c.b16 %v695, %v691
    %v1156 = vpack.c.b16 %v696, %v692
    %v1157 = vpack.c.b16 %v697, %v693
    %v1158 = vpack.c.b16 %v698, %v694
    %v1159 = vpack.c.b16 %v703, %v699
    %v1160 = vpack.c.b16 %v704, %v700
    %v1161 = vpack.c.b16 %v705, %v701
    %v1162 = vpack.c.b16 %v706, %v702
    %v1163 = vpack.c.b16 %v711, %v707
    %v1164 = vpack.c.b16 %v712, %v708
    %v1165 = vpack.c.b16 %v713, %v709
    %v1166 = vpack.c.b16 %v714, %v710
    %v1167 = vpack.c.b16 %v719, %v715
    %v1168 = vpack.c.b16 %v720, %v716
    %v1169 = vpack.c.b16 %v721, %v717
    %v1170 = vpack.c.b16 %v722, %v718
    %v1171 = vpack.c.b16 %v727, %v723
    %v1172 = vpack.c.b16 %v728, %v724
    %v1173 = vpack.c.b16 %v729, %v725
    %v1174 = vpack.c.b16 %v730, %v726
    %v1175 = vpack.c.b16 %v735, %v731
    %v1176 = vpack.c.b16 %v736, %v732
    %v1177 = vpack.c.b16 %v737, %v733
    %v1178 = vpack.c.b16 %v738, %v734
    %v1179 = vpack.c.b16 %v743, %v739
    %v1180 = vpack.c.b16 %v744, %v740
    %v1181 = vpack.c.b16 %v745, %v741
    %v1182 = vpack.c.b16 %v746, %v742
    %v1183 = vpack.c.b16 %v751, %v747
    %v1184 = vpack.c.b16 %v752, %v748
    %v1185 = vpack.c.b16 %v753, %v749
    %v1186 = vpack.c.b16 %v754, %v750
    %v1187 = vpack.c.b16 %v759, %v755
    %v1188 = vpack.c.b16 %v760, %v756
    %v1189 = vpack.c.b16 %v761, %v757
    %v1190 = vpack.c.b16 %v762, %v758
    %v1191 = vpack.c.b16 %v767, %v763
    %v1192 = vpack.c.b16 %v768, %v764
    %v1193 = vpack.c.b16 %v769, %v765
    %v1194 = vpack.c.b16 %v770, %v766
    %v1195 = vpack.c.b16 %v775, %v771
    %v1196 = vpack.c.b16 %v776, %v772
    %v1197 = vpack.c.b16 %v777, %v773
    %v1198 = vpack.c.b16 %v778, %v774
    %v1199 = vpack.c.b16 %v783, %v779
    %v1200 = vpack.c.b16 %v784, %v780
    %v1201 = vpack.c.b16 %v785, %v781
    %v1202 = vpack.c.b16 %v786, %v782
    %v1203 = vpack.c.b16 %v791, %v787
    %v1204 = vpack.c.b16 %v792, %v788
    %v1205 = vpack.c.b16 %v793, %v789
    %v1206 = vpack.c.b16 %v794, %v790
    %v1207 = vpack.c.b16 %v799, %v795
    %v1208 = vpack.c.b16 %v800, %v796
    %v1209 = vpack.c.b16 %v801, %v797
    %v1210 = vpack.c.b16 %v802, %v798
    %v1211 = vpack.c.b16 %v807, %v803
    %v1212 = vpack.c.b16 %v808, %v804
    %v1213 = vpack.c.b16 %v809, %v805
    %v1214 = vpack.c.b16 %v810, %v806
    %v1215 = vpack.c.b16 %v815, %v811
    %v1216 = vpack.c.b16 %v816, %v812
    %v1217 = vpack.c.b16 %v817, %v813
    %v1218 = vpack.c.b16 %v818, %v814
    %v1219 = vpack.c.b16 %v823, %v819
    %v1220 = vpack.c.b16 %v824, %v820
    %v1221 = vpack.c.b16 %v825, %v821
    %v1222 = vpack.c.b16 %v826, %v822
    %v1223 = vpack.c.b16 %v831, %v827
    %v1224 = vpack.c.b16 %v832, %v828
    %v1225 = vpack.c.b16 %v833, %v829
    %v1226 = vpack.c.b16 %v834, %v830
    %v1227 = vpack.c.b16 %v839, %v835
    %v1228 = vpack.c.b16 %v840, %v836
    %v1229 = vpack.c.b16 %v841, %v837
    %v1230 = vpack.c.b16 %v842, %v838
    %v1231 = vpack.c.b16 %v847, %v843
    %v1232 = vpack.c.b16 %v848, %v844
    %v1233 = vpack.c.b16 %v849, %v845
    %v1234 = vpack.c.b16 %v850, %v846
    %v1235 = vpack.c.b16 %v855, %v851
    %v1236 = vpack.c.b16 %v856, %v852
    %v1237 = vpack.c.b16 %v857, %v853
    %v1238 = vpack.c.b16 %v858, %v854
    %v1239 = vpack.c.b16 %v863, %v859
    %v1240 = vpack.c.b16 %v864, %v860
    %v1241 = vpack.c.b16 %v865, %v861
    %v1242 = vpack.c.b16 %v866, %v862
    %v1243 = vpack.c.b16 %v871, %v867
    %v1244 = vpack.c.b16 %v872, %v868
    %v1245 = vpack.c.b16 %v873, %v869
    %v1246 = vpack.c.b16 %v874, %v870
    %v1247 = vpack.c.b16 %v879, %v875
    %v1248 = vpack.c.b16 %v880, %v876
    %v1249 = vpack.c.b16 %v881, %v877
    %v1250 = vpack.c.b16 %v882, %v878
    %v1251 = vpack.c.b16 %v887, %v883
    %v1252 = vpack.c.b16 %v888, %v884
    %v1253 = vpack.c.b16 %v889, %v885
    %v1254 = vpack.c.b16 %v890, %v886
    %v1255 = vpack.c.b16 %v895, %v891
    %v1256 = vpack.c.b16 %v896, %v892
    %v1257 = vpack.c.b16 %v897, %v893
    %v1258 = vpack.c.b16 %v898, %v894
    %v1259 = vpack.c.b16 %v903, %v899
    %v1260 = vpack.c.b16 %v904, %v900
    %v1261 = vpack.c.b16 %v905, %v901
    %v1262 = vpack.c.b16 %v906, %v902
    %v1263 = vpack.c.b16 %v911, %v907
    %v1264 = vpack.c.b16 %v912, %v908
    %v1265 = vpack.c.b16 %v913, %v909
    %v1266 = vpack.c.b16 %v914, %v910
    %v1267 = vpack.c.b16 %v919, %v915
    %v1268 = vpack.c.b16 %v920, %v916
    %v1269 = vpack.c.b16 %v921, %v917
    %v1270 = vpack.c.b16 %v922, %v918
    %v1271 = vpack.c.b16 %v927, %v923
    %v1272 = vpack.c.b16 %v928, %v924
    %v1273 = vpack.c.b16 %v929, %v925
    %v1274 = vpack.c.b16 %v930, %v926
    %v1275 = vpack.c.b16 %v935, %v931
    %v1276 = vpack.c.b16 %v936, %v932
    %v1277 = vpack.c.b16 %v937, %v933
    %v1278 = vpack.c.b16 %v938, %v934
    %v1279 = vpack.c.b16 %v943, %v939
    %v1280 = vpack.c.b16 %v944, %v940
    %v1281 = vpack.c.b16 %v945, %v941
    %v1282 = vpack.c.b16 %v946, %v942
    %v1283 = vpack.c.b16 %v951, %v947
    %v1284 = vpack.c.b16 %v952, %v948
    %v1285 = vpack.c.b16 %v953, %v949
    %v1286 = vpack.c.b16 %v954, %v950
    %v1287 = vpack.c.b16 %v959, %v955
    %v1288 = vpack.c.b16 %v960, %v956
    %v1289 = vpack.c.b16 %v961, %v957
    %v1290 = vpack.c.b16 %v962, %v958
    %v1291 = vpack.c.b16 %v967, %v963
    %v1292 = vpack.c.b16 %v968, %v964
    %v1293 = vpack.c.b16 %v969, %v965
    %v1294 = vpack.c.b16 %v970, %v966
    %v1295 = vpack.c.b16 %v975, %v971
    %v1296 = vpack.c.b16 %v976, %v972
    %v1297 = vpack.c.b16 %v977, %v973
    %v1298 = vpack.c.b16 %v978, %v974
    %v1299 = vpack.c.b16 %v983, %v979
    %v1300 = vpack.c.b16 %v984, %v980
    %v1301 = vpack.c.b16 %v985, %v981
    %v1302 = vpack.c.b16 %v986, %v982
    %v1303 = vpack.c.b16 %v991, %v987
    %v1304 = vpack.c.b16 %v992, %v988
    %v1305 = vpack.c.b16 %v993, %v989
    %v1306 = vpack.c.b16 %v994, %v990
    %v1307 = vpack.c.b16 %v999, %v995
    %v1308 = vpack.c.b16 %v1000, %v996
    %v1309 = vpack.c.b16 %v1001, %v997
    %v1310 = vpack.c.b16 %v1002, %v998
    %v1311 = vpack.c.b16 %v1007, %v1003
    %v1312 = vpack.c.b16 %v1008, %v1004
    %v1313 = vpack.c.b16 %v1009, %v1005
    %v1314 = vpack.c.b16 %v1010, %v1006
    %v1315 = vpack.c.b16 %v1015, %v1011
    %v1316 = vpack.c.b16 %v1016, %v1012
    %v1317 = vpack.c.b16 %v1017, %v1013
    %v1318 = vpack.c.b16 %v1018, %v1014
    %v1319 = vpack.c.b16 %v1023, %v1019
    %v1320 = vpack.c.b16 %v1024, %v1020
    %v1321 = vpack.c.b16 %v1025, %v1021
    %v1322 = vpack.c.b16 %v1026, %v1022
    %v1323 = vpack.c.b16 %v1031, %v1027
    %v1324 = vpack.c.b16 %v1032, %v1028
    %v1325 = vpack.c.b16 %v1033, %v1029
    %v1326 = vpack.c.b16 %v1034, %v1030
    %v1327 = vpack.c.b16 %v1039, %v1035
    %v1328 = vpack.c.b16 %v1040, %v1036
    %v1329 = vpack.c.b16 %v1041, %v1037
    %v1330 = vpack.c.b16 %v1042, %v1038
    %v1331 = vpack.c.b16 %v1047, %v1043
    %v1332 = vpack.c.b16 %v1048, %v1044
    %v1333 = vpack.c.b16 %v1049, %v1045
    %v1334 = vpack.c.b16 %v1050, %v1046
    %v1335 = vpack.c.b16 %v1055, %v1051
    %v1336 = vpack.c.b16 %v1056, %v1052
    %v1337 = vpack.c.b16 %v1057, %v1053
    %v1338 = vpack.c.b16 %v1058, %v1054
    %v1339 = vpack.c.b16 %v1063, %v1059
    %v1340 = vpack.c.b16 %v1064, %v1060
    %v1341 = vpack.c.b16 %v1065, %v1061
    %v1342 = vpack.c.b16 %v1066, %v1062
    %v1343 = vpack.c.b16 %v1071, %v1067
    %v1344 = vpack.c.b16 %v1072, %v1068
    %v1345 = vpack.c.b16 %v1073, %v1069
    %v1346 = vpack.c.b16 %v1074, %v1070
    %v1347 = vpack.c.b16 %v1079, %v1075
    %v1348 = vpack.c.b16 %v1080, %v1076
    %v1349 = vpack.c.b16 %v1081, %v1077
    %v1350 = vpack.c.b16 %v1082, %v1078
    %v1351 = vpack.c.b16 %v1087, %v1083
    %v1352 = vpack.c.b16 %v1088, %v1084
    %v1353 = vpack.c.b16 %v1089, %v1085
    %v1354 = vpack.c.b16 %v1090, %v1086
    %v1355 = vpack.c.b16 %v1095, %v1091
    %v1356 = vpack.c.b16 %v1096, %v1092
    %v1357 = vpack.c.b16 %v1097, %v1093
    %v1358 = vpack.c.b16 %v1098, %v1094
    %v1359 = vpack.c.b16 %v1103, %v1099
    %v1360 = vpack.c.b16 %v1104, %v1100
    %v1361 = vpack.c.b16 %v1105, %v1101
    %v1362 = vpack.c.b16 %v1106, %v1102
    %v1683 = vunpack.c.l.b16 %v275
    %v1684 = vunpack.c.l.b16 %v276
    %v1685 = vunpack.c.l.b16 %v277
    %v1686 = vunpack.c.l.b16 %v278
    %v1687 = vunpack.c.l.b16 %v279
    %v1688 = vunpack.c.l.b16 %v280
    %v1689 = vunpack.c.l.b16 %v281
    %v1690 = vunpack.c.l.b16 %v282
    %v1691 = vunpack.c.l.b16 %v283
    %v1692 = vunpack.c.l.b16 %v284
    %v1693 = vunpack.c.l.b16 %v285
    %v1694 = vunpack.c.l.b16 %v286
    %v1695 = vunpack.c.l.b16 %v287
    %v1696 = vunpack.c.l.b16 %v288
    %v1697 = vunpack.c.l.b16 %v289
    %v1698 = vunpack.c.l.b16 %v290
    %v1699 = vunpack.c.l.b16 %v291
    %v1700 = vunpack.c.l.b16 %v292
    %v1701 = vunpack.c.l.b16 %v293
    %v1702 = vunpack.c.l.b16 %v294
    %v1703 = vunpack.c.l.b16 %v295
    %v1704 = vunpack.c.l.b16 %v296
    %v1705 = vunpack.c.l.b16 %v297
    %v1706 = vunpack.c.l.b16 %v298
    %v1707 = vunpack.c.l.b16 %v299
    %v1708 = vunpack.c.l.b16 %v300
    %v1709 = vunpack.c.l.b16 %v301
    %v1710 = vunpack.c.l.b16 %v302
    %v1711 = vunpack.c.l.b16 %v303
    %v1712 = vunpack.c.l.b16 %v304
    %v1713 = vunpack.c.l.b16 %v305
    %v1714 = vunpack.c.l.b16 %v306
    %v1715 = vunpack.c.l.b16 %v307
    %v1716 = vunpack.c.l.b16 %v308
    %v1717 = vunpack.c.l.b16 %v309
    %v1718 = vunpack.c.l.b16 %v310
    %v1719 = vunpack.c.l.b16 %v311
    %v1720 = vunpack.c.l.b16 %v312
    %v1721 = vunpack.c.l.b16 %v313
    %v1722 = vunpack.c.l.b16 %v314
    %v1723 = vunpack.c.l.b16 %v315
    %v1724 = vunpack.c.l.b16 %v316
    %v1725 = vunpack.c.l.b16 %v317
    %v1726 = vunpack.c.l.b16 %v318
    %v1727 = vunpack.c.l.b16 %v319
    %v1728 = vunpack.c.l.b16 %v320
    %v1729 = vunpack.c.l.b16 %v321
    %v1730 = vunpack.c.l.b16 %v322
    %v1731 = vunpack.c.l.b16 %v323
    %v1732 = vunpack.c.l.b16 %v324
    %v1733 = vunpack.c.l.b16 %v325
    %v1734 = vunpack.c.l.b16 %v326
    %v1735 = vunpack.c.l.b16 %v327
    %v1736 = vunpack.c.l.b16 %v328
    %v1737 = vunpack.c.l.b16 %v329
    %v1738 = vunpack.c.l.b16 %v330
    %v1739 = vunpack.c.l.b16 %v331
    %v1740 = vunpack.c.l.b16 %v332
    %v1741 = vunpack.c.l.b16 %v333
    %v1742 = vunpack.c.l.b16 %v334
    %v1743 = vunpack.c.l.b16 %v335
    %v1744 = vunpack.c.l.b16 %v336
    %v1745 = vunpack.c.l.b16 %v337
    %v1746 = vunpack.c.l.b16 %v338
    %v1747 = vpack.c.b16 %v1684, %v1683
    %v1748 = vpack.c.b16 %v1686, %v1685
    %v1749 = vpack.c.b16 %v1688, %v1687
    %v1750 = vpack.c.b16 %v1690, %v1689
    %v1751 = vpack.c.b16 %v1692, %v1691
    %v1752 = vpack.c.b16 %v1694, %v1693
    %v1753 = vpack.c.b16 %v1696, %v1695
    %v1754 = vpack.c.b16 %v1698, %v1697
    %v1755 = vpack.c.b16 %v1700, %v1699
    %v1756 = vpack.c.b16 %v1702, %v1701
    %v1757 = vpack.c.b16 %v1704, %v1703
    %v1758 = vpack.c.b16 %v1706, %v1705
    %v1759 = vpack.c.b16 %v1708, %v1707
    %v1760 = vpack.c.b16 %v1710, %v1709
    %v1761 = vpack.c.b16 %v1712, %v1711
    %v1762 = vpack.c.b16 %v1714, %v1713
    %v1763 = vpack.c.b16 %v1716, %v1715
    %v1764 = vpack.c.b16 %v1718, %v1717
    %v1765 = vpack.c.b16 %v1720, %v1719
    %v1766 = vpack.c.b16 %v1722, %v1721
    %v1767 = vpack.c.b16 %v1724, %v1723
    %v1768 = vpack.c.b16 %v1726, %v1725
    %v1769 = vpack.c.b16 %v1728, %v1727
    %v1770 = vpack.c.b16 %v1730, %v1729
    %v1771 = vpack.c.b16 %v1732, %v1731
    %v1772 = vpack.c.b16 %v1734, %v1733
    %v1773 = vpack.c.b16 %v1736, %v1735
    %v1774 = vpack.c.b16 %v1738, %v1737
    %v1775 = vpack.c.b16 %v1740, %v1739
    %v1776 = vpack.c.b16 %v1742, %v1741
    %v1777 = vpack.c.b16 %v1744, %v1743
    %v1778 = vpack.c.b16 %v1746, %v1745
    %1811 = vmatprep.subr.bf16.mxu0 0
    %1812 = vmatpush1.bf16.msra.mxu0 %v1747
    %1813 = vmatprep.subr.bf16.mxu0 0
    %1814 = vmatpush1.bf16.msra.mxu0 %v1748
    %1815 = vmatprep.subr.bf16.mxu0 0
    %1816 = vmatpush1.bf16.msra.mxu0 %v1749
    %1817 = vmatprep.subr.bf16.mxu0 0
    %1818 = vmatpush1.bf16.msra.mxu0 %v1750
    %1819 = vmatprep.subr.bf16.mxu0 0
    %1820 = vmatpush1.bf16.msra.mxu0 %v1751
    %1821 = vmatprep.subr.bf16.mxu0 0
    %1822 = vmatpush1.bf16.msra.mxu0 %v1752
    %1823 = vmatprep.subr.bf16.mxu0 0
    %1824 = vmatpush1.bf16.msra.mxu0 %v1753
    %1825 = vmatprep.subr.bf16.mxu0 0
    %1826 = vmatpush1.bf16.msra.mxu0 %v1754
    %1827 = vmatprep.subr.bf16.mxu0 0
    %1828 = vmatpush1.bf16.msra.mxu0 %v1755
    %1829 = vmatprep.subr.bf16.mxu0 0
    %1830 = vmatpush1.bf16.msra.mxu0 %v1756
    %1831 = vmatprep.subr.bf16.mxu0 0
    %1832 = vmatpush1.bf16.msra.mxu0 %v1757
    %1833 = vmatprep.subr.bf16.mxu0 0
    %1834 = vmatpush1.bf16.msra.mxu0 %v1758
    %1835 = vmatprep.subr.bf16.mxu0 0
    %1836 = vmatpush1.bf16.msra.mxu0 %v1759
    %1837 = vmatprep.subr.bf16.mxu0 0
    %1838 = vmatpush1.bf16.msra.mxu0 %v1760
    %1839 = vmatprep.subr.bf16.mxu0 0
    %1840 = vmatpush1.bf16.msra.mxu0 %v1761
    %1841 = vmatprep.subr.bf16.mxu0 0
    %1842 = vmatpush1.bf16.msra.mxu0 %v1762
    %1843 = vmatprep.mubr.bf16.mxu0 %v1108
    %1844 = vmatmul.mubr.bf16.gmra.mrb[0].mxu0 %v1107
    %v1845 = vpop.f32.mrb[0].mxu0
    %v1846 = vadd.f32 0.0, %v1845
    %v1847 = vpop.f32.mrb[0].mxu0
    %v1848 = vpop.f32.mrb[0].mxu0
    %v1849 = vadd.f32 0.0, %v1848
    %v1850 = vpop.f32.mrb[0].mxu0
    %1851 = vmatprep.mubr.bf16.mxu0 %v1112
    %1852 = vmatmul.mubr.bf16.gmra.mrb[0].mxu0 %v1111
    %v1853 = vpop.f32.mrb[0].mxu0
    %v1854 = vadd.f32 0.0, %v1853
    %v1855 = vpop.f32.mrb[0].mxu0
    %v1856 = vpop.f32.mrb[0].mxu0
    %v1857 = vadd.f32 0.0, %v1856
    %v1858 = vpop.f32.mrb[0].mxu0
    %1859 = vmatprep.mubr.bf16.mxu0 %v1116
    %1860 = vmatmul.mubr.bf16.gmra.mrb[0].mxu0 %v1115
    %v1861 = vpop.f32.mrb[0].mxu0
    %v1862 = vadd.f32 0.0, %v1861
    %v1863 = vpop.f32.mrb[0].mxu0
    %v1864 = vpop.f32.mrb[0].mxu0
    %v1865 = vadd.f32 0.0, %v1864
    %v1866 = vpop.f32.mrb[0].mxu0
    %1867 = vmatprep.mubr.bf16.mxu0 %v1120
    %1868 = vmatmul.mubr.bf16.gmra.mrb[0].mxu0 %v1119
    %v1869 = vpop.f32.mrb[0].mxu0
    %v1870 = vadd.f32 0.0, %v1869
    %v1871 = vpop.f32.mrb[0].mxu0
    %v1872 = vpop.f32.mrb[0].mxu0
    %v1873 = vadd.f32 0.0, %v1872
    %v1874 = vpop.f32.mrb[0].mxu0
    %1875 = vmatprep.mubr.bf16.mxu0 %v1124
    %1876 = vmatmul.mubr.bf16.gmra.mrb[0].mxu0 %v1123
    %v1877 = vpop.f32.mrb[0].mxu0
    %v1878 = vadd.f32 0.0, %v1877
    %v1879 = vpop.f32.mrb[0].mxu0
    %v1880 = vpop.f32.mrb[0].mxu0
    %v1881 = vadd.f32 0.0, %v1880
    %v1882 = vpop.f32.mrb[0].mxu0
    %1883 = vmatprep.mubr.bf16.mxu0 %v1128
    %1884 = vmatmul.mubr.bf16.gmra.mrb[0].mxu0 %v1127
    %v1885 = vpop.f32.mrb[0].mxu0
    %v1886 = vadd.f32 0.0, %v1885
    %v1887 = vpop.f32.mrb[0].mxu0
    %v1888 = vpop.f32.mrb[0].mxu0
    %v1889 = vadd.f32 0.0, %v1888
    %v1890 = vpop.f32.mrb[0].mxu0
    %1891 = vmatprep.mubr.bf16.mxu0 %v1132
    %1892 = vmatmul.mubr.bf16.gmra.mrb[0].mxu0 %v1131
    %v1893 = vpop.f32.mrb[0].mxu0
    %v1894 = vadd.f32 0.0, %v1893
    %v1895 = vpop.f32.mrb[0].mxu0
    %v1896 = vpop.f32.mrb[0].mxu0
    %v1897 = vadd.f32 0.0, %v1896
    %v1898 = vpop.f32.mrb[0].mxu0
    %1899 = vmatprep.mubr.bf16.mxu0 %v1136
    %1900 = vmatmul.mubr.bf16.gmra.mrb[0].mxu0 %v1135
    %v1901 = vpop.f32.mrb[0].mxu0
    %v1902 = vadd.f32 0.0, %v1901
    %v1903 = vpop.f32.mrb[0].mxu0
    %v1904 = vpop.f32.mrb[0].mxu0
    %v1905 = vadd.f32 0.0, %v1904
    %v1906 = vpop.f32.mrb[0].mxu0
    %1907 = vmatprep.mubr.bf16.mxu0 %v1140
    %1908 = vmatmul.mubr.bf16.gmra.mrb[0].mxu0 %v1139
    %v1909 = vpop.f32.mrb[0].mxu0
    %v1910 = vadd.f32 0.0, %v1909
    %v1911 = vpop.f32.mrb[0].mxu0
    %v1912 = vpop.f32.mrb[0].mxu0
    %v1913 = vadd.f32 0.0, %v1912
    %v1914 = vpop.f32.mrb[0].mxu0
    %1915 = vmatprep.mubr.bf16.mxu0 %v1144
    %1916 = vmatmul.mubr.bf16.gmra.mrb[0].mxu0 %v1143
    %v1917 = vpop.f32.mrb[0].mxu0
    %v1918 = vadd.f32 0.0, %v1917
    %v1919 = vpop.f32.mrb[0].mxu0
    %v1920 = vpop.f32.mrb[0].mxu0
    %v1921 = vadd.f32 0.0, %v1920
    %v1922 = vpop.f32.mrb[0].mxu0
    %1923 = vmatprep.mubr.bf16.mxu0 %v1148
    %1924 = vmatmul.mubr.bf16.gmra.mrb[0].mxu0 %v1147
    %v1925 = vpop.f32.mrb[0].mxu0
    %v1926 = vadd.f32 0.0, %v1925
    %v1927 = vpop.f32.mrb[0].mxu0
    %v1928 = vpop.f32.mrb[0].mxu0
    %v1929 = vadd.f32 0.0, %v1928
    %v1930 = vpop.f32.mrb[0].mxu0
    %1931 = vmatprep.mubr.bf16.mxu0 %v1152
    %1932 = vmatmul.mubr.bf16.gmra.mrb[0].mxu0 %v1151
    %v1933 = vpop.f32.mrb[0].mxu0
    %v1934 = vadd.f32 0.0, %v1933
    %v1935 = vpop.f32.mrb[0].mxu0
    %v1936 = vpop.f32.mrb[0].mxu0
    %v1937 = vadd.f32 0.0, %v1936
    %v1938 = vpop.f32.mrb[0].mxu0
    %1939 = vmatprep.mubr.bf16.mxu0 %v1156
    %1940 = vmatmul.mubr.bf16.gmra.mrb[0].mxu0 %v1155
    %v1941 = vpop.f32.mrb[0].mxu0
    %v1942 = vadd.f32 0.0, %v1941
    %v1943 = vpop.f32.mrb[0].mxu0
    %v1944 = vpop.f32.mrb[0].mxu0
    %v1945 = vadd.f32 0.0, %v1944
    %v1946 = vpop.f32.mrb[0].mxu0
    %1947 = vmatprep.mubr.bf16.mxu0 %v1160
    %1948 = vmatmul.mubr.bf16.gmra.mrb[0].mxu0 %v1159
    %v1949 = vpop.f32.mrb[0].mxu0
    %v1950 = vadd.f32 0.0, %v1949
    %v1951 = vpop.f32.mrb[0].mxu0
    %v1952 = vpop.f32.mrb[0].mxu0
    %v1953 = vadd.f32 0.0, %v1952
    %v1954 = vpop.f32.mrb[0].mxu0
    %1955 = vmatprep.mubr.bf16.mxu0 %v1164
    %1956 = vmatmul.mubr.bf16.gmra.mrb[0].mxu0 %v1163
    %v1957 = vpop.f32.mrb[0].mxu0
    %v1958 = vadd.f32 0.0, %v1957
    %v1959 = vpop.f32.mrb[0].mxu0
    %v1960 = vpop.f32.mrb[0].mxu0
    %v1961 = vadd.f32 0.0, %v1960
    %v1962 = vpop.f32.mrb[0].mxu0
    %1963 = vmatprep.mubr.bf16.mxu0 %v1168
    %1964 = vmatmul.mubr.bf16.gmra.mrb[0].mxu0 %v1167
    %v1965 = vpop.f32.mrb[0].mxu0
    %v1966 = vadd.f32 0.0, %v1965
    %v1967 = vpop.f32.mrb[0].mxu0
    %v1968 = vpop.f32.mrb[0].mxu0
    %v1969 = vadd.f32 0.0, %v1968
    %v1970 = vpop.f32.mrb[0].mxu0
    %1971 = vmatprep.mubr.bf16.mxu0 %v1172
    %1972 = vmatmul.mubr.bf16.gmra.mrb[0].mxu0 %v1171
    %v1973 = vpop.f32.mrb[0].mxu0
    %v1974 = vadd.f32 0.0, %v1973
    %v1975 = vpop.f32.mrb[0].mxu0
    %v1976 = vpop.f32.mrb[0].mxu0
    %v1977 = vadd.f32 0.0, %v1976
    %v1978 = vpop.f32.mrb[0].mxu0
    %1979 = vmatprep.mubr.bf16.mxu0 %v1176
    %1980 = vmatmul.mubr.bf16.gmra.mrb[0].mxu0 %v1175
    %v1981 = vpop.f32.mrb[0].mxu0
    %v1982 = vadd.f32 0.0, %v1981
    %v1983 = vpop.f32.mrb[0].mxu0
    %v1984 = vpop.f32.mrb[0].mxu0
    %v1985 = vadd.f32 0.0, %v1984
    %v1986 = vpop.f32.mrb[0].mxu0
    %1987 = vmatprep.mubr.bf16.mxu0 %v1180
    %1988 = vmatmul.mubr.bf16.gmra.mrb[0].mxu0 %v1179
    %v1989 = vpop.f32.mrb[0].mxu0
    %v1990 = vadd.f32 0.0, %v1989
    %v1991 = vpop.f32.mrb[0].mxu0
    %v1992 = vpop.f32.mrb[0].mxu0
    %v1993 = vadd.f32 0.0, %v1992
    %v1994 = vpop.f32.mrb[0].mxu0
    %1995 = vmatprep.mubr.bf16.mxu0 %v1184
    %1996 = vmatmul.mubr.bf16.gmra.mrb[0].mxu0 %v1183
    %v1997 = vpop.f32.mrb[0].mxu0
    %v1998 = vadd.f32 0.0, %v1997
    %v1999 = vpop.f32.mrb[0].mxu0
    %v2000 = vpop.f32.mrb[0].mxu0
    %v2001 = vadd.f32 0.0, %v2000
    %v2002 = vpop.f32.mrb[0].mxu0
    %2003 = vmatprep.mubr.bf16.mxu0 %v1188
    %2004 = vmatmul.mubr.bf16.gmra.mrb[0].mxu0 %v1187
    %v2005 = vpop.f32.mrb[0].mxu0
    %v2006 = vadd.f32 0.0, %v2005
    %v2007 = vpop.f32.mrb[0].mxu0
    %v2008 = vpop.f32.mrb[0].mxu0
    %v2009 = vadd.f32 0.0, %v2008
    %v2010 = vpop.f32.mrb[0].mxu0
    %2011 = vmatprep.mubr.bf16.mxu0 %v1192
    %2012 = vmatmul.mubr.bf16.gmra.mrb[0].mxu0 %v1191
    %v2013 = vpop.f32.mrb[0].mxu0
    %v2014 = vadd.f32 0.0, %v2013
    %v2015 = vpop.f32.mrb[0].mxu0
    %v2016 = vpop.f32.mrb[0].mxu0
    %v2017 = vadd.f32 0.0, %v2016
    %v2018 = vpop.f32.mrb[0].mxu0
    %2019 = vmatprep.mubr.bf16.mxu0 %v1196
    %2020 = vmatmul.mubr.bf16.gmra.mrb[0].mxu0 %v1195
    %v2021 = vpop.f32.mrb[0].mxu0
    %v2022 = vadd.f32 0.0, %v2021
    %v2023 = vpop.f32.mrb[0].mxu0
    %v2024 = vpop.f32.mrb[0].mxu0
    %v2025 = vadd.f32 0.0, %v2024
    %v2026 = vpop.f32.mrb[0].mxu0
    %2027 = vmatprep.mubr.bf16.mxu0 %v1200
    %2028 = vmatmul.mubr.bf16.gmra.mrb[0].mxu0 %v1199
    %v2029 = vpop.f32.mrb[0].mxu0
    %v2030 = vadd.f32 0.0, %v2029
    %v2031 = vpop.f32.mrb[0].mxu0
    %v2032 = vpop.f32.mrb[0].mxu0
    %v2033 = vadd.f32 0.0, %v2032
    %v2034 = vpop.f32.mrb[0].mxu0
    %2035 = vmatprep.mubr.bf16.mxu0 %v1204
    %2036 = vmatmul.mubr.bf16.gmra.mrb[0].mxu0 %v1203
    %v2037 = vpop.f32.mrb[0].mxu0
    %v2038 = vadd.f32 0.0, %v2037
    %v2039 = vpop.f32.mrb[0].mxu0
    %v2040 = vpop.f32.mrb[0].mxu0
    %v2041 = vadd.f32 0.0, %v2040
    %v2042 = vpop.f32.mrb[0].mxu0
    %2043 = vmatprep.mubr.bf16.mxu0 %v1208
    %2044 = vmatmul.mubr.bf16.gmra.mrb[0].mxu0 %v1207
    %v2045 = vpop.f32.mrb[0].mxu0
    %v2046 = vadd.f32 0.0, %v2045
    %v2047 = vpop.f32.mrb[0].mxu0
    %v2048 = vpop.f32.mrb[0].mxu0
    %v2049 = vadd.f32 0.0, %v2048
    %v2050 = vpop.f32.mrb[0].mxu0
    %2051 = vmatprep.mubr.bf16.mxu0 %v1212
    %2052 = vmatmul.mubr.bf16.gmra.mrb[0].mxu0 %v1211
    %v2053 = vpop.f32.mrb[0].mxu0
    %v2054 = vadd.f32 0.0, %v2053
    %v2055 = vpop.f32.mrb[0].mxu0
    %v2056 = vpop.f32.mrb[0].mxu0
    %v2057 = vadd.f32 0.0, %v2056
    %v2058 = vpop.f32.mrb[0].mxu0
    %2059 = vmatprep.mubr.bf16.mxu0 %v1216
    %2060 = vmatmul.mubr.bf16.gmra.mrb[0].mxu0 %v1215
    %v2061 = vpop.f32.mrb[0].mxu0
    %v2062 = vadd.f32 0.0, %v2061
    %v2063 = vpop.f32.mrb[0].mxu0
    %v2064 = vpop.f32.mrb[0].mxu0
    %v2065 = vadd.f32 0.0, %v2064
    %v2066 = vpop.f32.mrb[0].mxu0
    %2067 = vmatprep.mubr.bf16.mxu0 %v1220
    %2068 = vmatmul.mubr.bf16.gmra.mrb[0].mxu0 %v1219
    %v2069 = vpop.f32.mrb[0].mxu0
    %v2070 = vadd.f32 0.0, %v2069
    %v2071 = vpop.f32.mrb[0].mxu0
    %v2072 = vpop.f32.mrb[0].mxu0
    %v2073 = vadd.f32 0.0, %v2072
    %v2074 = vpop.f32.mrb[0].mxu0
    %2075 = vmatprep.mubr.bf16.mxu0 %v1224
    %2076 = vmatmul.mubr.bf16.gmra.mrb[0].mxu0 %v1223
    %v2077 = vpop.f32.mrb[0].mxu0
    %v2078 = vadd.f32 0.0, %v2077
    %v2079 = vpop.f32.mrb[0].mxu0
    %v2080 = vpop.f32.mrb[0].mxu0
    %v2081 = vadd.f32 0.0, %v2080
    %v2082 = vpop.f32.mrb[0].mxu0
    %2083 = vmatprep.mubr.bf16.mxu0 %v1228
    %2084 = vmatmul.mubr.bf16.gmra.mrb[0].mxu0 %v1227
    %v2085 = vpop.f32.mrb[0].mxu0
    %v2086 = vadd.f32 0.0, %v2085
    %v2087 = vpop.f32.mrb[0].mxu0
    %v2088 = vpop.f32.mrb[0].mxu0
    %v2089 = vadd.f32 0.0, %v2088
    %v2090 = vpop.f32.mrb[0].mxu0
    %2091 = vmatprep.mubr.bf16.mxu0 %v1232
    %2092 = vmatmul.mubr.bf16.gmra.mrb[0].mxu0 %v1231
    %v2093 = vpop.f32.mrb[0].mxu0
    %v2094 = vadd.f32 0.0, %v2093
    %v2095 = vpop.f32.mrb[0].mxu0
    %v2096 = vpop.f32.mrb[0].mxu0
    %v2097 = vadd.f32 0.0, %v2096
    %v2098 = vpop.f32.mrb[0].mxu0
    %2099 = vmatprep.mubr.bf16.mxu0 %v1236
    %2100 = vmatmul.mubr.bf16.gmra.mrb[0].mxu0 %v1235
    %v2101 = vpop.f32.mrb[0].mxu0
    %v2102 = vadd.f32 0.0, %v2101
    %v2103 = vpop.f32.mrb[0].mxu0
    %v2104 = vpop.f32.mrb[0].mxu0
    %v2105 = vadd.f32 0.0, %v2104
    %v2106 = vpop.f32.mrb[0].mxu0
    %2107 = vmatprep.mubr.bf16.mxu0 %v1240
    %2108 = vmatmul.mubr.bf16.gmra.mrb[0].mxu0 %v1239
    %v2109 = vpop.f32.mrb[0].mxu0
    %v2110 = vadd.f32 0.0, %v2109
    %v2111 = vpop.f32.mrb[0].mxu0
    %v2112 = vpop.f32.mrb[0].mxu0
    %v2113 = vadd.f32 0.0, %v2112
    %v2114 = vpop.f32.mrb[0].mxu0
    %2115 = vmatprep.mubr.bf16.mxu0 %v1244
    %2116 = vmatmul.mubr.bf16.gmra.mrb[0].mxu0 %v1243
    %v2117 = vpop.f32.mrb[0].mxu0
    %v2118 = vadd.f32 0.0, %v2117
    %v2119 = vpop.f32.mrb[0].mxu0
    %v2120 = vpop.f32.mrb[0].mxu0
    %v2121 = vadd.f32 0.0, %v2120
    %v2122 = vpop.f32.mrb[0].mxu0
    %2123 = vmatprep.mubr.bf16.mxu0 %v1248
    %2124 = vmatmul.mubr.bf16.gmra.mrb[0].mxu0 %v1247
    %v2125 = vpop.f32.mrb[0].mxu0
    %v2126 = vadd.f32 0.0, %v2125
    %v2127 = vpop.f32.mrb[0].mxu0
    %v2128 = vpop.f32.mrb[0].mxu0
    %v2129 = vadd.f32 0.0, %v2128
    %v2130 = vpop.f32.mrb[0].mxu0
    %2131 = vmatprep.mubr.bf16.mxu0 %v1252
    %2132 = vmatmul.mubr.bf16.gmra.mrb[0].mxu0 %v1251
    %v2133 = vpop.f32.mrb[0].mxu0
    %v2134 = vadd.f32 0.0, %v2133
    %v2135 = vpop.f32.mrb[0].mxu0
    %v2136 = vpop.f32.mrb[0].mxu0
    %v2137 = vadd.f32 0.0, %v2136
    %v2138 = vpop.f32.mrb[0].mxu0
    %2139 = vmatprep.mubr.bf16.mxu0 %v1256
    %2140 = vmatmul.mubr.bf16.gmra.mrb[0].mxu0 %v1255
    %v2141 = vpop.f32.mrb[0].mxu0
    %v2142 = vadd.f32 0.0, %v2141
    %v2143 = vpop.f32.mrb[0].mxu0
    %v2144 = vpop.f32.mrb[0].mxu0
    %v2145 = vadd.f32 0.0, %v2144
    %v2146 = vpop.f32.mrb[0].mxu0
    %2147 = vmatprep.mubr.bf16.mxu0 %v1260
    %2148 = vmatmul.mubr.bf16.gmra.mrb[0].mxu0 %v1259
    %v2149 = vpop.f32.mrb[0].mxu0
    %v2150 = vadd.f32 0.0, %v2149
    %v2151 = vpop.f32.mrb[0].mxu0
    %v2152 = vpop.f32.mrb[0].mxu0
    %v2153 = vadd.f32 0.0, %v2152
    %v2154 = vpop.f32.mrb[0].mxu0
    %2155 = vmatprep.mubr.bf16.mxu0 %v1264
    %2156 = vmatmul.mubr.bf16.gmra.mrb[0].mxu0 %v1263
    %v2157 = vpop.f32.mrb[0].mxu0
    %v2158 = vadd.f32 0.0, %v2157
    %v2159 = vpop.f32.mrb[0].mxu0
    %v2160 = vpop.f32.mrb[0].mxu0
    %v2161 = vadd.f32 0.0, %v2160
    %v2162 = vpop.f32.mrb[0].mxu0
    %2163 = vmatprep.mubr.bf16.mxu0 %v1268
    %2164 = vmatmul.mubr.bf16.gmra.mrb[0].mxu0 %v1267
    %v2165 = vpop.f32.mrb[0].mxu0
    %v2166 = vadd.f32 0.0, %v2165
    %v2167 = vpop.f32.mrb[0].mxu0
    %v2168 = vpop.f32.mrb[0].mxu0
    %v2169 = vadd.f32 0.0, %v2168
    %v2170 = vpop.f32.mrb[0].mxu0
    %2171 = vmatprep.mubr.bf16.mxu0 %v1272
    %2172 = vmatmul.mubr.bf16.gmra.mrb[0].mxu0 %v1271
    %v2173 = vpop.f32.mrb[0].mxu0
    %v2174 = vadd.f32 0.0, %v2173
    %v2175 = vpop.f32.mrb[0].mxu0
    %v2176 = vpop.f32.mrb[0].mxu0
    %v2177 = vadd.f32 0.0, %v2176
    %v2178 = vpop.f32.mrb[0].mxu0
    %2179 = vmatprep.mubr.bf16.mxu0 %v1276
    %2180 = vmatmul.mubr.bf16.gmra.mrb[0].mxu0 %v1275
    %v2181 = vpop.f32.mrb[0].mxu0
    %v2182 = vadd.f32 0.0, %v2181
    %v2183 = vpop.f32.mrb[0].mxu0
    %v2184 = vpop.f32.mrb[0].mxu0
    %v2185 = vadd.f32 0.0, %v2184
    %v2186 = vpop.f32.mrb[0].mxu0
    %2187 = vmatprep.mubr.bf16.mxu0 %v1280
    %2188 = vmatmul.mubr.bf16.gmra.mrb[0].mxu0 %v1279
    %v2189 = vpop.f32.mrb[0].mxu0
    %v2190 = vadd.f32 0.0, %v2189
    %v2191 = vpop.f32.mrb[0].mxu0
    %v2192 = vpop.f32.mrb[0].mxu0
    %v2193 = vadd.f32 0.0, %v2192
    %v2194 = vpop.f32.mrb[0].mxu0
    %2195 = vmatprep.mubr.bf16.mxu0 %v1284
    %2196 = vmatmul.mubr.bf16.gmra.mrb[0].mxu0 %v1283
    %v2197 = vpop.f32.mrb[0].mxu0
    %v2198 = vadd.f32 0.0, %v2197
    %v2199 = vpop.f32.mrb[0].mxu0
    %v2200 = vpop.f32.mrb[0].mxu0
    %v2201 = vadd.f32 0.0, %v2200
    %v2202 = vpop.f32.mrb[0].mxu0
    %2203 = vmatprep.mubr.bf16.mxu0 %v1288
    %2204 = vmatmul.mubr.bf16.gmra.mrb[0].mxu0 %v1287
    %v2205 = vpop.f32.mrb[0].mxu0
    %v2206 = vadd.f32 0.0, %v2205
    %v2207 = vpop.f32.mrb[0].mxu0
    %v2208 = vpop.f32.mrb[0].mxu0
    %v2209 = vadd.f32 0.0, %v2208
    %v2210 = vpop.f32.mrb[0].mxu0
    %2211 = vmatprep.mubr.bf16.mxu0 %v1292
    %2212 = vmatmul.mubr.bf16.gmra.mrb[0].mxu0 %v1291
    %v2213 = vpop.f32.mrb[0].mxu0
    %v2214 = vadd.f32 0.0, %v2213
    %v2215 = vpop.f32.mrb[0].mxu0
    %v2216 = vpop.f32.mrb[0].mxu0
    %v2217 = vadd.f32 0.0, %v2216
    %v2218 = vpop.f32.mrb[0].mxu0
    %2219 = vmatprep.mubr.bf16.mxu0 %v1296
    %2220 = vmatmul.mubr.bf16.gmra.mrb[0].mxu0 %v1295
    %v2221 = vpop.f32.mrb[0].mxu0
    %v2222 = vadd.f32 0.0, %v2221
    %v2223 = vpop.f32.mrb[0].mxu0
    %v2224 = vpop.f32.mrb[0].mxu0
    %v2225 = vadd.f32 0.0, %v2224
    %v2226 = vpop.f32.mrb[0].mxu0
    %2227 = vmatprep.mubr.bf16.mxu0 %v1300
    %2228 = vmatmul.mubr.bf16.gmra.mrb[0].mxu0 %v1299
    %v2229 = vpop.f32.mrb[0].mxu0
    %v2230 = vadd.f32 0.0, %v2229
    %v2231 = vpop.f32.mrb[0].mxu0
    %v2232 = vpop.f32.mrb[0].mxu0
    %v2233 = vadd.f32 0.0, %v2232
    %v2234 = vpop.f32.mrb[0].mxu0
    %2235 = vmatprep.mubr.bf16.mxu0 %v1304
    %2236 = vmatmul.mubr.bf16.gmra.mrb[0].mxu0 %v1303
    %v2237 = vpop.f32.mrb[0].mxu0
    %v2238 = vadd.f32 0.0, %v2237
    %v2239 = vpop.f32.mrb[0].mxu0
    %v2240 = vpop.f32.mrb[0].mxu0
    %v2241 = vadd.f32 0.0, %v2240
    %v2242 = vpop.f32.mrb[0].mxu0
    %2243 = vmatprep.mubr.bf16.mxu0 %v1308
    %2244 = vmatmul.mubr.bf16.gmra.mrb[0].mxu0 %v1307
    %v2245 = vpop.f32.mrb[0].mxu0
    %v2246 = vadd.f32 0.0, %v2245
    %v2247 = vpop.f32.mrb[0].mxu0
    %v2248 = vpop.f32.mrb[0].mxu0
    %v2249 = vadd.f32 0.0, %v2248
    %v2250 = vpop.f32.mrb[0].mxu0
    %2251 = vmatprep.mubr.bf16.mxu0 %v1312
    %2252 = vmatmul.mubr.bf16.gmra.mrb[0].mxu0 %v1311
    %v2253 = vpop.f32.mrb[0].mxu0
    %v2254 = vadd.f32 0.0, %v2253
    %v2255 = vpop.f32.mrb[0].mxu0
    %v2256 = vpop.f32.mrb[0].mxu0
    %v2257 = vadd.f32 0.0, %v2256
    %v2258 = vpop.f32.mrb[0].mxu0
    %2259 = vmatprep.mubr.bf16.mxu0 %v1316
    %2260 = vmatmul.mubr.bf16.gmra.mrb[0].mxu0 %v1315
    %v2261 = vpop.f32.mrb[0].mxu0
    %v2262 = vadd.f32 0.0, %v2261
    %v2263 = vpop.f32.mrb[0].mxu0
    %v2264 = vpop.f32.mrb[0].mxu0
    %v2265 = vadd.f32 0.0, %v2264
    %v2266 = vpop.f32.mrb[0].mxu0
    %2267 = vmatprep.mubr.bf16.mxu0 %v1320
    %2268 = vmatmul.mubr.bf16.gmra.mrb[0].mxu0 %v1319
    %v2269 = vpop.f32.mrb[0].mxu0
    %v2270 = vadd.f32 0.0, %v2269
    %v2271 = vpop.f32.mrb[0].mxu0
    %v2272 = vpop.f32.mrb[0].mxu0
    %v2273 = vadd.f32 0.0, %v2272
    %v2274 = vpop.f32.mrb[0].mxu0
    %2275 = vmatprep.mubr.bf16.mxu0 %v1324
    %2276 = vmatmul.mubr.bf16.gmra.mrb[0].mxu0 %v1323
    %v2277 = vpop.f32.mrb[0].mxu0
    %v2278 = vadd.f32 0.0, %v2277
    %v2279 = vpop.f32.mrb[0].mxu0
    %v2280 = vpop.f32.mrb[0].mxu0
    %v2281 = vadd.f32 0.0, %v2280
    %v2282 = vpop.f32.mrb[0].mxu0
    %2283 = vmatprep.mubr.bf16.mxu0 %v1328
    %2284 = vmatmul.mubr.bf16.gmra.mrb[0].mxu0 %v1327
    %v2285 = vpop.f32.mrb[0].mxu0
    %v2286 = vadd.f32 0.0, %v2285
    %v2287 = vpop.f32.mrb[0].mxu0
    %v2288 = vpop.f32.mrb[0].mxu0
    %v2289 = vadd.f32 0.0, %v2288
    %v2290 = vpop.f32.mrb[0].mxu0
    %2291 = vmatprep.mubr.bf16.mxu0 %v1332
    %2292 = vmatmul.mubr.bf16.gmra.mrb[0].mxu0 %v1331
    %v2293 = vpop.f32.mrb[0].mxu0
    %v2294 = vadd.f32 0.0, %v2293
    %v2295 = vpop.f32.mrb[0].mxu0
    %v2296 = vpop.f32.mrb[0].mxu0
    %v2297 = vadd.f32 0.0, %v2296
    %v2298 = vpop.f32.mrb[0].mxu0
    %2299 = vmatprep.mubr.bf16.mxu0 %v1336
    %2300 = vmatmul.mubr.bf16.gmra.mrb[0].mxu0 %v1335
    %v2301 = vpop.f32.mrb[0].mxu0
    %v2302 = vadd.f32 0.0, %v2301
    %v2303 = vpop.f32.mrb[0].mxu0
    %v2304 = vpop.f32.mrb[0].mxu0
    %v2305 = vadd.f32 0.0, %v2304
    %v2306 = vpop.f32.mrb[0].mxu0
    %2307 = vmatprep.mubr.bf16.mxu0 %v1340
    %2308 = vmatmul.mubr.bf16.gmra.mrb[0].mxu0 %v1339
    %v2309 = vpop.f32.mrb[0].mxu0
    %v2310 = vadd.f32 0.0, %v2309
    %v2311 = vpop.f32.mrb[0].mxu0
    %v2312 = vpop.f32.mrb[0].mxu0
    %v2313 = vadd.f32 0.0, %v2312
    %v2314 = vpop.f32.mrb[0].mxu0
    %2315 = vmatprep.mubr.bf16.mxu0 %v1344
    %2316 = vmatmul.mubr.bf16.gmra.mrb[0].mxu0 %v1343
    %v2317 = vpop.f32.mrb[0].mxu0
    %v2318 = vadd.f32 0.0, %v2317
    %v2319 = vpop.f32.mrb[0].mxu0
    %v2320 = vpop.f32.mrb[0].mxu0
    %v2321 = vadd.f32 0.0, %v2320
    %v2322 = vpop.f32.mrb[0].mxu0
    %2323 = vmatprep.mubr.bf16.mxu0 %v1348
    %2324 = vmatmul.mubr.bf16.gmra.mrb[0].mxu0 %v1347
    %v2325 = vpop.f32.mrb[0].mxu0
    %v2326 = vadd.f32 0.0, %v2325
    %v2327 = vpop.f32.mrb[0].mxu0
    %v2328 = vpop.f32.mrb[0].mxu0
    %v2329 = vadd.f32 0.0, %v2328
    %v2330 = vpop.f32.mrb[0].mxu0
    %2331 = vmatprep.mubr.bf16.mxu0 %v1352
    %2332 = vmatmul.mubr.bf16.gmra.mrb[0].mxu0 %v1351
    %v2333 = vpop.f32.mrb[0].mxu0
    %v2334 = vadd.f32 0.0, %v2333
    %v2335 = vpop.f32.mrb[0].mxu0
    %v2336 = vpop.f32.mrb[0].mxu0
    %v2337 = vadd.f32 0.0, %v2336
    %v2338 = vpop.f32.mrb[0].mxu0
    %2339 = vmatprep.mubr.bf16.mxu0 %v1356
    %2340 = vmatmul.mubr.bf16.gmra.mrb[0].mxu0 %v1355
    %v2341 = vpop.f32.mrb[0].mxu0
    %v2342 = vadd.f32 0.0, %v2341
    %v2343 = vpop.f32.mrb[0].mxu0
    %v2344 = vpop.f32.mrb[0].mxu0
    %v2345 = vadd.f32 0.0, %v2344
    %v2346 = vpop.f32.mrb[0].mxu0
    %2347 = vmatprep.mubr.bf16.mxu0 %v1360
    %2348 = vmatmul.mubr.bf16.gmra.mrb[0].mxu0 %v1359
    %v2349 = vpop.f32.mrb[0].mxu0
    %v2350 = vadd.f32 0.0, %v2349
    %v2351 = vpop.f32.mrb[0].mxu0
    %v2352 = vpop.f32.mrb[0].mxu0
    %v2353 = vadd.f32 0.0, %v2352
    %v2354 = vpop.f32.mrb[0].mxu0
    %2355 = vdwg.mxu0
    %2356 = vmatprep.subr.bf16.mxu0 0
    %2357 = vmatpush1.bf16.msra.mxu0 %v1763
    %2358 = vmatprep.subr.bf16.mxu0 0
    %2359 = vmatpush1.bf16.msra.mxu0 %v1764
    %2360 = vmatprep.subr.bf16.mxu0 0
    %2361 = vmatpush1.bf16.msra.mxu0 %v1765
    %2362 = vmatprep.subr.bf16.mxu0 0
    %2363 = vmatpush1.bf16.msra.mxu0 %v1766
    %2364 = vmatprep.subr.bf16.mxu0 0
    %2365 = vmatpush1.bf16.msra.mxu0 %v1767
    %2366 = vmatprep.subr.bf16.mxu0 0
    %2367 = vmatpush1.bf16.msra.mxu0 %v1768
    %2368 = vmatprep.subr.bf16.mxu0 0
    %2369 = vmatpush1.bf16.msra.mxu0 %v1769
    %2370 = vmatprep.subr.bf16.mxu0 0
    %2371 = vmatpush1.bf16.msra.mxu0 %v1770
    %2372 = vmatprep.subr.bf16.mxu0 0
    %2373 = vmatpush1.bf16.msra.mxu0 %v1771
    %2374 = vmatprep.subr.bf16.mxu0 0
    %2375 = vmatpush1.bf16.msra.mxu0 %v1772
    %2376 = vmatprep.subr.bf16.mxu0 0
    %2377 = vmatpush1.bf16.msra.mxu0 %v1773
    %2378 = vmatprep.subr.bf16.mxu0 0
    %2379 = vmatpush1.bf16.msra.mxu0 %v1774
    %2380 = vmatprep.subr.bf16.mxu0 0
    %2381 = vmatpush1.bf16.msra.mxu0 %v1775
    %2382 = vmatprep.subr.bf16.mxu0 0
    %2383 = vmatpush1.bf16.msra.mxu0 %v1776
    %2384 = vmatprep.subr.bf16.mxu0 0
    %2385 = vmatpush1.bf16.msra.mxu0 %v1777
    %2386 = vmatprep.subr.bf16.mxu0 0
    %2387 = vmatpush1.bf16.msra.mxu0 %v1778
    %2388 = vmatprep.mubr.bf16.mxu0 %v1110
    %2389 = vmatmul.mubr.bf16.gmra.mrb[0].mxu0 %v1109
    %v2390 = vpop.f32.mrb[0].mxu0
    %v2391 = vadd.f32 %v1846, %v2390
    %v2392 = vpop.f32.mrb[0].mxu0
    %v2393 = vpop.f32.mrb[0].mxu0
    %v2394 = vadd.f32 %v1849, %v2393
    %v2395 = vpop.f32.mrb[0].mxu0
    %2396 = vmatprep.mubr.bf16.mxu0 %v1114
    %2397 = vmatmul.mubr.bf16.gmra.mrb[0].mxu0 %v1113
    %v2398 = vpop.f32.mrb[0].mxu0
    %v2399 = vadd.f32 %v1854, %v2398
    %v2400 = vpop.f32.mrb[0].mxu0
    %v2401 = vpop.f32.mrb[0].mxu0
    %v2402 = vadd.f32 %v1857, %v2401
    %v2403 = vpop.f32.mrb[0].mxu0
    %2404 = vmatprep.mubr.bf16.mxu0 %v1118
    %2405 = vmatmul.mubr.bf16.gmra.mrb[0].mxu0 %v1117
    %v2406 = vpop.f32.mrb[0].mxu0
    %v2407 = vadd.f32 %v1862, %v2406
    %v2408 = vpop.f32.mrb[0].mxu0
    %v2409 = vpop.f32.mrb[0].mxu0
    %v2410 = vadd.f32 %v1865, %v2409
    %v2411 = vpop.f32.mrb[0].mxu0
    %2412 = vmatprep.mubr.bf16.mxu0 %v1122
    %2413 = vmatmul.mubr.bf16.gmra.mrb[0].mxu0 %v1121
    %v2414 = vpop.f32.mrb[0].mxu0
    %v2415 = vadd.f32 %v1870, %v2414
    %v2416 = vpop.f32.mrb[0].mxu0
    %v2417 = vpop.f32.mrb[0].mxu0
    %v2418 = vadd.f32 %v1873, %v2417
    %v2419 = vpop.f32.mrb[0].mxu0
    %2420 = vmatprep.mubr.bf16.mxu0 %v1126
    %2421 = vmatmul.mubr.bf16.gmra.mrb[0].mxu0 %v1125
    %v2422 = vpop.f32.mrb[0].mxu0
    %v2423 = vadd.f32 %v1878, %v2422
    %v2424 = vpop.f32.mrb[0].mxu0
    %v2425 = vpop.f32.mrb[0].mxu0
    %v2426 = vadd.f32 %v1881, %v2425
    %v2427 = vpop.f32.mrb[0].mxu0
    %2428 = vmatprep.mubr.bf16.mxu0 %v1130
    %2429 = vmatmul.mubr.bf16.gmra.mrb[0].mxu0 %v1129
    %v2430 = vpop.f32.mrb[0].mxu0
    %v2431 = vadd.f32 %v1886, %v2430
    %v2432 = vpop.f32.mrb[0].mxu0
    %v2433 = vpop.f32.mrb[0].mxu0
    %v2434 = vadd.f32 %v1889, %v2433
    %v2435 = vpop.f32.mrb[0].mxu0
    %2436 = vmatprep.mubr.bf16.mxu0 %v1134
    %2437 = vmatmul.mubr.bf16.gmra.mrb[0].mxu0 %v1133
    %v2438 = vpop.f32.mrb[0].mxu0
    %v2439 = vadd.f32 %v1894, %v2438
    %v2440 = vpop.f32.mrb[0].mxu0
    %v2441 = vpop.f32.mrb[0].mxu0
    %v2442 = vadd.f32 %v1897, %v2441
    %v2443 = vpop.f32.mrb[0].mxu0
    %2444 = vmatprep.mubr.bf16.mxu0 %v1138
    %2445 = vmatmul.mubr.bf16.gmra.mrb[0].mxu0 %v1137
    %v2446 = vpop.f32.mrb[0].mxu0
    %v2447 = vadd.f32 %v1902, %v2446
    %v2448 = vpop.f32.mrb[0].mxu0
    %v2449 = vpop.f32.mrb[0].mxu0
    %v2450 = vadd.f32 %v1905, %v2449
    %v2451 = vpop.f32.mrb[0].mxu0
    %2452 = vmatprep.mubr.bf16.mxu0 %v1142
    %2453 = vmatmul.mubr.bf16.gmra.mrb[0].mxu0 %v1141
    %v2454 = vpop.f32.mrb[0].mxu0
    %v2455 = vadd.f32 %v1910, %v2454
    %v2456 = vpop.f32.mrb[0].mxu0
    %v2457 = vpop.f32.mrb[0].mxu0
    %v2458 = vadd.f32 %v1913, %v2457
    %v2459 = vpop.f32.mrb[0].mxu0
    %2460 = vmatprep.mubr.bf16.mxu0 %v1146
    %2461 = vmatmul.mubr.bf16.gmra.mrb[0].mxu0 %v1145
    %v2462 = vpop.f32.mrb[0].mxu0
    %v2463 = vadd.f32 %v1918, %v2462
    %v2464 = vpop.f32.mrb[0].mxu0
    %v2465 = vpop.f32.mrb[0].mxu0
    %v2466 = vadd.f32 %v1921, %v2465
    %v2467 = vpop.f32.mrb[0].mxu0
    %2468 = vmatprep.mubr.bf16.mxu0 %v1150
    %2469 = vmatmul.mubr.bf16.gmra.mrb[0].mxu0 %v1149
    %v2470 = vpop.f32.mrb[0].mxu0
    %v2471 = vadd.f32 %v1926, %v2470
    %v2472 = vpop.f32.mrb[0].mxu0
    %v2473 = vpop.f32.mrb[0].mxu0
    %v2474 = vadd.f32 %v1929, %v2473
    %v2475 = vpop.f32.mrb[0].mxu0
    %2476 = vmatprep.mubr.bf16.mxu0 %v1154
    %2477 = vmatmul.mubr.bf16.gmra.mrb[0].mxu0 %v1153
    %v2478 = vpop.f32.mrb[0].mxu0
    %v2479 = vadd.f32 %v1934, %v2478
    %v2480 = vpop.f32.mrb[0].mxu0
    %v2481 = vpop.f32.mrb[0].mxu0
    %v2482 = vadd.f32 %v1937, %v2481
    %v2483 = vpop.f32.mrb[0].mxu0
    %2484 = vmatprep.mubr.bf16.mxu0 %v1158
    %2485 = vmatmul.mubr.bf16.gmra.mrb[0].mxu0 %v1157
    %v2486 = vpop.f32.mrb[0].mxu0
    %v2487 = vadd.f32 %v1942, %v2486
    %v2488 = vpop.f32.mrb[0].mxu0
    %v2489 = vpop.f32.mrb[0].mxu0
    %v2490 = vadd.f32 %v1945, %v2489
    %v2491 = vpop.f32.mrb[0].mxu0
    %2492 = vmatprep.mubr.bf16.mxu0 %v1162
    %2493 = vmatmul.mubr.bf16.gmra.mrb[0].mxu0 %v1161
    %v2494 = vpop.f32.mrb[0].mxu0
    %v2495 = vadd.f32 %v1950, %v2494
    %v2496 = vpop.f32.mrb[0].mxu0
    %v2497 = vpop.f32.mrb[0].mxu0
    %v2498 = vadd.f32 %v1953, %v2497
    %v2499 = vpop.f32.mrb[0].mxu0
    %2500 = vmatprep.mubr.bf16.mxu0 %v1166
    %2501 = vmatmul.mubr.bf16.gmra.mrb[0].mxu0 %v1165
    %v2502 = vpop.f32.mrb[0].mxu0
    %v2503 = vadd.f32 %v1958, %v2502
    %v2504 = vpop.f32.mrb[0].mxu0
    %v2505 = vpop.f32.mrb[0].mxu0
    %v2506 = vadd.f32 %v1961, %v2505
    %v2507 = vpop.f32.mrb[0].mxu0
    %2508 = vmatprep.mubr.bf16.mxu0 %v1170
    %2509 = vmatmul.mubr.bf16.gmra.mrb[0].mxu0 %v1169
    %v2510 = vpop.f32.mrb[0].mxu0
    %v2511 = vadd.f32 %v1966, %v2510
    %v2512 = vpop.f32.mrb[0].mxu0
    %v2513 = vpop.f32.mrb[0].mxu0
    %v2514 = vadd.f32 %v1969, %v2513
    %v2515 = vpop.f32.mrb[0].mxu0
    %2516 = vmatprep.mubr.bf16.mxu0 %v1174
    %2517 = vmatmul.mubr.bf16.gmra.mrb[0].mxu0 %v1173
    %v2518 = vpop.f32.mrb[0].mxu0
    %v2519 = vadd.f32 %v1974, %v2518
    %v2520 = vpop.f32.mrb[0].mxu0
    %v2521 = vpop.f32.mrb[0].mxu0
    %v2522 = vadd.f32 %v1977, %v2521
    %v2523 = vpop.f32.mrb[0].mxu0
    %2524 = vmatprep.mubr.bf16.mxu0 %v1178
    %2525 = vmatmul.mubr.bf16.gmra.mrb[0].mxu0 %v1177
    %v2526 = vpop.f32.mrb[0].mxu0
    %v2527 = vadd.f32 %v1982, %v2526
    %v2528 = vpop.f32.mrb[0].mxu0
    %v2529 = vpop.f32.mrb[0].mxu0
    %v2530 = vadd.f32 %v1985, %v2529
    %v2531 = vpop.f32.mrb[0].mxu0
    %2532 = vmatprep.mubr.bf16.mxu0 %v1182
    %2533 = vmatmul.mubr.bf16.gmra.mrb[0].mxu0 %v1181
    %v2534 = vpop.f32.mrb[0].mxu0
    %v2535 = vadd.f32 %v1990, %v2534
    %v2536 = vpop.f32.mrb[0].mxu0
    %v2537 = vpop.f32.mrb[0].mxu0
    %v2538 = vadd.f32 %v1993, %v2537
    %v2539 = vpop.f32.mrb[0].mxu0
    %2540 = vmatprep.mubr.bf16.mxu0 %v1186
    %2541 = vmatmul.mubr.bf16.gmra.mrb[0].mxu0 %v1185
    %v2542 = vpop.f32.mrb[0].mxu0
    %v2543 = vadd.f32 %v1998, %v2542
    %v2544 = vpop.f32.mrb[0].mxu0
    %v2545 = vpop.f32.mrb[0].mxu0
    %v2546 = vadd.f32 %v2001, %v2545
    %v2547 = vpop.f32.mrb[0].mxu0
    %2548 = vmatprep.mubr.bf16.mxu0 %v1190
    %2549 = vmatmul.mubr.bf16.gmra.mrb[0].mxu0 %v1189
    %v2550 = vpop.f32.mrb[0].mxu0
    %v2551 = vadd.f32 %v2006, %v2550
    %v2552 = vpop.f32.mrb[0].mxu0
    %v2553 = vpop.f32.mrb[0].mxu0
    %v2554 = vadd.f32 %v2009, %v2553
    %v2555 = vpop.f32.mrb[0].mxu0
    %2556 = vmatprep.mubr.bf16.mxu0 %v1194
    %2557 = vmatmul.mubr.bf16.gmra.mrb[0].mxu0 %v1193
    %v2558 = vpop.f32.mrb[0].mxu0
    %v2559 = vadd.f32 %v2014, %v2558
    %v2560 = vpop.f32.mrb[0].mxu0
    %v2561 = vpop.f32.mrb[0].mxu0
    %v2562 = vadd.f32 %v2017, %v2561
    %v2563 = vpop.f32.mrb[0].mxu0
    %2564 = vmatprep.mubr.bf16.mxu0 %v1198
    %2565 = vmatmul.mubr.bf16.gmra.mrb[0].mxu0 %v1197
    %v2566 = vpop.f32.mrb[0].mxu0
    %v2567 = vadd.f32 %v2022, %v2566
    %v2568 = vpop.f32.mrb[0].mxu0
    %v2569 = vpop.f32.mrb[0].mxu0
    %v2570 = vadd.f32 %v2025, %v2569
    %v2571 = vpop.f32.mrb[0].mxu0
    %2572 = vmatprep.mubr.bf16.mxu0 %v1202
    %2573 = vmatmul.mubr.bf16.gmra.mrb[0].mxu0 %v1201
    %v2574 = vpop.f32.mrb[0].mxu0
    %v2575 = vadd.f32 %v2030, %v2574
    %v2576 = vpop.f32.mrb[0].mxu0
    %v2577 = vpop.f32.mrb[0].mxu0
    %v2578 = vadd.f32 %v2033, %v2577
    %v2579 = vpop.f32.mrb[0].mxu0
    %2580 = vmatprep.mubr.bf16.mxu0 %v1206
    %2581 = vmatmul.mubr.bf16.gmra.mrb[0].mxu0 %v1205
    %v2582 = vpop.f32.mrb[0].mxu0
    %v2583 = vadd.f32 %v2038, %v2582
    %v2584 = vpop.f32.mrb[0].mxu0
    %v2585 = vpop.f32.mrb[0].mxu0
    %v2586 = vadd.f32 %v2041, %v2585
    %v2587 = vpop.f32.mrb[0].mxu0
    %2588 = vmatprep.mubr.bf16.mxu0 %v1210
    %2589 = vmatmul.mubr.bf16.gmra.mrb[0].mxu0 %v1209
    %v2590 = vpop.f32.mrb[0].mxu0
    %v2591 = vadd.f32 %v2046, %v2590
    %v2592 = vpop.f32.mrb[0].mxu0
    %v2593 = vpop.f32.mrb[0].mxu0
    %v2594 = vadd.f32 %v2049, %v2593
    %v2595 = vpop.f32.mrb[0].mxu0
    %2596 = vmatprep.mubr.bf16.mxu0 %v1214
    %2597 = vmatmul.mubr.bf16.gmra.mrb[0].mxu0 %v1213
    %v2598 = vpop.f32.mrb[0].mxu0
    %v2599 = vadd.f32 %v2054, %v2598
    %v2600 = vpop.f32.mrb[0].mxu0
    %v2601 = vpop.f32.mrb[0].mxu0
    %v2602 = vadd.f32 %v2057, %v2601
    %v2603 = vpop.f32.mrb[0].mxu0
    %2604 = vmatprep.mubr.bf16.mxu0 %v1218
    %2605 = vmatmul.mubr.bf16.gmra.mrb[0].mxu0 %v1217
    %v2606 = vpop.f32.mrb[0].mxu0
    %v2607 = vadd.f32 %v2062, %v2606
    %v2608 = vpop.f32.mrb[0].mxu0
    %v2609 = vpop.f32.mrb[0].mxu0
    %v2610 = vadd.f32 %v2065, %v2609
    %v2611 = vpop.f32.mrb[0].mxu0
    %2612 = vmatprep.mubr.bf16.mxu0 %v1222
    %2613 = vmatmul.mubr.bf16.gmra.mrb[0].mxu0 %v1221
    %v2614 = vpop.f32.mrb[0].mxu0
    %v2615 = vadd.f32 %v2070, %v2614
    %v2616 = vpop.f32.mrb[0].mxu0
    %v2617 = vpop.f32.mrb[0].mxu0
    %v2618 = vadd.f32 %v2073, %v2617
    %v2619 = vpop.f32.mrb[0].mxu0
    %2620 = vmatprep.mubr.bf16.mxu0 %v1226
    %2621 = vmatmul.mubr.bf16.gmra.mrb[0].mxu0 %v1225
    %v2622 = vpop.f32.mrb[0].mxu0
    %v2623 = vadd.f32 %v2078, %v2622
    %v2624 = vpop.f32.mrb[0].mxu0
    %v2625 = vpop.f32.mrb[0].mxu0
    %v2626 = vadd.f32 %v2081, %v2625
    %v2627 = vpop.f32.mrb[0].mxu0
    %2628 = vmatprep.mubr.bf16.mxu0 %v1230
    %2629 = vmatmul.mubr.bf16.gmra.mrb[0].mxu0 %v1229
    %v2630 = vpop.f32.mrb[0].mxu0
    %v2631 = vadd.f32 %v2086, %v2630
    %v2632 = vpop.f32.mrb[0].mxu0
    %v2633 = vpop.f32.mrb[0].mxu0
    %v2634 = vadd.f32 %v2089, %v2633
    %v2635 = vpop.f32.mrb[0].mxu0
    %2636 = vmatprep.mubr.bf16.mxu0 %v1234
    %2637 = vmatmul.mubr.bf16.gmra.mrb[0].mxu0 %v1233
    %v2638 = vpop.f32.mrb[0].mxu0
    %v2639 = vadd.f32 %v2094, %v2638
    %v2640 = vpop.f32.mrb[0].mxu0
    %v2641 = vpop.f32.mrb[0].mxu0
    %v2642 = vadd.f32 %v2097, %v2641
    %v2643 = vpop.f32.mrb[0].mxu0
    %2644 = vmatprep.mubr.bf16.mxu0 %v1238
    %2645 = vmatmul.mubr.bf16.gmra.mrb[0].mxu0 %v1237
    %v2646 = vpop.f32.mrb[0].mxu0
    %v2647 = vadd.f32 %v2102, %v2646
    %v2648 = vpop.f32.mrb[0].mxu0
    %v2649 = vpop.f32.mrb[0].mxu0
    %v2650 = vadd.f32 %v2105, %v2649
    %v2651 = vpop.f32.mrb[0].mxu0
    %2652 = vmatprep.mubr.bf16.mxu0 %v1242
    %2653 = vmatmul.mubr.bf16.gmra.mrb[0].mxu0 %v1241
    %v2654 = vpop.f32.mrb[0].mxu0
    %v2655 = vadd.f32 %v2110, %v2654
    %v2656 = vpop.f32.mrb[0].mxu0
    %v2657 = vpop.f32.mrb[0].mxu0
    %v2658 = vadd.f32 %v2113, %v2657
    %v2659 = vpop.f32.mrb[0].mxu0
    %2660 = vmatprep.mubr.bf16.mxu0 %v1246
    %2661 = vmatmul.mubr.bf16.gmra.mrb[0].mxu0 %v1245
    %v2662 = vpop.f32.mrb[0].mxu0
    %v2663 = vadd.f32 %v2118, %v2662
    %v2664 = vpop.f32.mrb[0].mxu0
    %v2665 = vpop.f32.mrb[0].mxu0
    %v2666 = vadd.f32 %v2121, %v2665
    %v2667 = vpop.f32.mrb[0].mxu0
    %2668 = vmatprep.mubr.bf16.mxu0 %v1250
    %2669 = vmatmul.mubr.bf16.gmra.mrb[0].mxu0 %v1249
    %v2670 = vpop.f32.mrb[0].mxu0
    %v2671 = vadd.f32 %v2126, %v2670
    %v2672 = vpop.f32.mrb[0].mxu0
    %v2673 = vpop.f32.mrb[0].mxu0
    %v2674 = vadd.f32 %v2129, %v2673
    %v2675 = vpop.f32.mrb[0].mxu0
    %2676 = vmatprep.mubr.bf16.mxu0 %v1254
    %2677 = vmatmul.mubr.bf16.gmra.mrb[0].mxu0 %v1253
    %v2678 = vpop.f32.mrb[0].mxu0
    %v2679 = vadd.f32 %v2134, %v2678
    %v2680 = vpop.f32.mrb[0].mxu0
    %v2681 = vpop.f32.mrb[0].mxu0
    %v2682 = vadd.f32 %v2137, %v2681
    %v2683 = vpop.f32.mrb[0].mxu0
    %2684 = vmatprep.mubr.bf16.mxu0 %v1258
    %2685 = vmatmul.mubr.bf16.gmra.mrb[0].mxu0 %v1257
    %v2686 = vpop.f32.mrb[0].mxu0
    %v2687 = vadd.f32 %v2142, %v2686
    %v2688 = vpop.f32.mrb[0].mxu0
    %v2689 = vpop.f32.mrb[0].mxu0
    %v2690 = vadd.f32 %v2145, %v2689
    %v2691 = vpop.f32.mrb[0].mxu0
    %2692 = vmatprep.mubr.bf16.mxu0 %v1262
    %2693 = vmatmul.mubr.bf16.gmra.mrb[0].mxu0 %v1261
    %v2694 = vpop.f32.mrb[0].mxu0
    %v2695 = vadd.f32 %v2150, %v2694
    %v2696 = vpop.f32.mrb[0].mxu0
    %v2697 = vpop.f32.mrb[0].mxu0
    %v2698 = vadd.f32 %v2153, %v2697
    %v2699 = vpop.f32.mrb[0].mxu0
    %2700 = vmatprep.mubr.bf16.mxu0 %v1266
    %2701 = vmatmul.mubr.bf16.gmra.mrb[0].mxu0 %v1265
    %v2702 = vpop.f32.mrb[0].mxu0
    %v2703 = vadd.f32 %v2158, %v2702
    %v2704 = vpop.f32.mrb[0].mxu0
    %v2705 = vpop.f32.mrb[0].mxu0
    %v2706 = vadd.f32 %v2161, %v2705
    %v2707 = vpop.f32.mrb[0].mxu0
    %2708 = vmatprep.mubr.bf16.mxu0 %v1270
    %2709 = vmatmul.mubr.bf16.gmra.mrb[0].mxu0 %v1269
    %v2710 = vpop.f32.mrb[0].mxu0
    %v2711 = vadd.f32 %v2166, %v2710
    %v2712 = vpop.f32.mrb[0].mxu0
    %v2713 = vpop.f32.mrb[0].mxu0
    %v2714 = vadd.f32 %v2169, %v2713
    %v2715 = vpop.f32.mrb[0].mxu0
    %2716 = vmatprep.mubr.bf16.mxu0 %v1274
    %2717 = vmatmul.mubr.bf16.gmra.mrb[0].mxu0 %v1273
    %v2718 = vpop.f32.mrb[0].mxu0
    %v2719 = vadd.f32 %v2174, %v2718
    %v2720 = vpop.f32.mrb[0].mxu0
    %v2721 = vpop.f32.mrb[0].mxu0
    %v2722 = vadd.f32 %v2177, %v2721
    %v2723 = vpop.f32.mrb[0].mxu0
    %2724 = vmatprep.mubr.bf16.mxu0 %v1278
    %2725 = vmatmul.mubr.bf16.gmra.mrb[0].mxu0 %v1277
    %v2726 = vpop.f32.mrb[0].mxu0
    %v2727 = vadd.f32 %v2182, %v2726
    %v2728 = vpop.f32.mrb[0].mxu0
    %v2729 = vpop.f32.mrb[0].mxu0
    %v2730 = vadd.f32 %v2185, %v2729
    %v2731 = vpop.f32.mrb[0].mxu0
    %2732 = vmatprep.mubr.bf16.mxu0 %v1282
    %2733 = vmatmul.mubr.bf16.gmra.mrb[0].mxu0 %v1281
    %v2734 = vpop.f32.mrb[0].mxu0
    %v2735 = vadd.f32 %v2190, %v2734
    %v2736 = vpop.f32.mrb[0].mxu0
    %v2737 = vpop.f32.mrb[0].mxu0
    %v2738 = vadd.f32 %v2193, %v2737
    %v2739 = vpop.f32.mrb[0].mxu0
    %2740 = vmatprep.mubr.bf16.mxu0 %v1286
    %2741 = vmatmul.mubr.bf16.gmra.mrb[0].mxu0 %v1285
    %v2742 = vpop.f32.mrb[0].mxu0
    %v2743 = vadd.f32 %v2198, %v2742
    %v2744 = vpop.f32.mrb[0].mxu0
    %v2745 = vpop.f32.mrb[0].mxu0
    %v2746 = vadd.f32 %v2201, %v2745
    %v2747 = vpop.f32.mrb[0].mxu0
    %2748 = vmatprep.mubr.bf16.mxu0 %v1290
    %2749 = vmatmul.mubr.bf16.gmra.mrb[0].mxu0 %v1289
    %v2750 = vpop.f32.mrb[0].mxu0
    %v2751 = vadd.f32 %v2206, %v2750
    %v2752 = vpop.f32.mrb[0].mxu0
    %v2753 = vpop.f32.mrb[0].mxu0
    %v2754 = vadd.f32 %v2209, %v2753
    %v2755 = vpop.f32.mrb[0].mxu0
    %2756 = vmatprep.mubr.bf16.mxu0 %v1294
    %2757 = vmatmul.mubr.bf16.gmra.mrb[0].mxu0 %v1293
    %v2758 = vpop.f32.mrb[0].mxu0
    %v2759 = vadd.f32 %v2214, %v2758
    %v2760 = vpop.f32.mrb[0].mxu0
    %v2761 = vpop.f32.mrb[0].mxu0
    %v2762 = vadd.f32 %v2217, %v2761
    %v2763 = vpop.f32.mrb[0].mxu0
    %2764 = vmatprep.mubr.bf16.mxu0 %v1298
    %2765 = vmatmul.mubr.bf16.gmra.mrb[0].mxu0 %v1297
    %v2766 = vpop.f32.mrb[0].mxu0
    %v2767 = vadd.f32 %v2222, %v2766
    %v2768 = vpop.f32.mrb[0].mxu0
    %v2769 = vpop.f32.mrb[0].mxu0
    %v2770 = vadd.f32 %v2225, %v2769
    %v2771 = vpop.f32.mrb[0].mxu0
    %2772 = vmatprep.mubr.bf16.mxu0 %v1302
    %2773 = vmatmul.mubr.bf16.gmra.mrb[0].mxu0 %v1301
    %v2774 = vpop.f32.mrb[0].mxu0
    %v2775 = vadd.f32 %v2230, %v2774
    %v2776 = vpop.f32.mrb[0].mxu0
    %v2777 = vpop.f32.mrb[0].mxu0
    %v2778 = vadd.f32 %v2233, %v2777
    %v2779 = vpop.f32.mrb[0].mxu0
    %2780 = vmatprep.mubr.bf16.mxu0 %v1306
    %2781 = vmatmul.mubr.bf16.gmra.mrb[0].mxu0 %v1305
    %v2782 = vpop.f32.mrb[0].mxu0
    %v2783 = vadd.f32 %v2238, %v2782
    %v2784 = vpop.f32.mrb[0].mxu0
    %v2785 = vpop.f32.mrb[0].mxu0
    %v2786 = vadd.f32 %v2241, %v2785
    %v2787 = vpop.f32.mrb[0].mxu0
    %2788 = vmatprep.mubr.bf16.mxu0 %v1310
    %2789 = vmatmul.mubr.bf16.gmra.mrb[0].mxu0 %v1309
    %v2790 = vpop.f32.mrb[0].mxu0
    %v2791 = vadd.f32 %v2246, %v2790
    %v2792 = vpop.f32.mrb[0].mxu0
    %v2793 = vpop.f32.mrb[0].mxu0
    %v2794 = vadd.f32 %v2249, %v2793
    %v2795 = vpop.f32.mrb[0].mxu0
    %2796 = vmatprep.mubr.bf16.mxu0 %v1314
    %2797 = vmatmul.mubr.bf16.gmra.mrb[0].mxu0 %v1313
    %v2798 = vpop.f32.mrb[0].mxu0
    %v2799 = vadd.f32 %v2254, %v2798
    %v2800 = vpop.f32.mrb[0].mxu0
    %v2801 = vpop.f32.mrb[0].mxu0
    %v2802 = vadd.f32 %v2257, %v2801
    %v2803 = vpop.f32.mrb[0].mxu0
    %2804 = vmatprep.mubr.bf16.mxu0 %v1318
    %2805 = vmatmul.mubr.bf16.gmra.mrb[0].mxu0 %v1317
    %v2806 = vpop.f32.mrb[0].mxu0
    %v2807 = vadd.f32 %v2262, %v2806
    %v2808 = vpop.f32.mrb[0].mxu0
    %v2809 = vpop.f32.mrb[0].mxu0
    %v2810 = vadd.f32 %v2265, %v2809
    %v2811 = vpop.f32.mrb[0].mxu0
    %2812 = vmatprep.mubr.bf16.mxu0 %v1322
    %2813 = vmatmul.mubr.bf16.gmra.mrb[0].mxu0 %v1321
    %v2814 = vpop.f32.mrb[0].mxu0
    %v2815 = vadd.f32 %v2270, %v2814
    %v2816 = vpop.f32.mrb[0].mxu0
    %v2817 = vpop.f32.mrb[0].mxu0
    %v2818 = vadd.f32 %v2273, %v2817
    %v2819 = vpop.f32.mrb[0].mxu0
    %2820 = vmatprep.mubr.bf16.mxu0 %v1326
    %2821 = vmatmul.mubr.bf16.gmra.mrb[0].mxu0 %v1325
    %v2822 = vpop.f32.mrb[0].mxu0
    %v2823 = vadd.f32 %v2278, %v2822
    %v2824 = vpop.f32.mrb[0].mxu0
    %v2825 = vpop.f32.mrb[0].mxu0
    %v2826 = vadd.f32 %v2281, %v2825
    %v2827 = vpop.f32.mrb[0].mxu0
    %2828 = vmatprep.mubr.bf16.mxu0 %v1330
    %2829 = vmatmul.mubr.bf16.gmra.mrb[0].mxu0 %v1329
    %v2830 = vpop.f32.mrb[0].mxu0
    %v2831 = vadd.f32 %v2286, %v2830
    %v2832 = vpop.f32.mrb[0].mxu0
    %v2833 = vpop.f32.mrb[0].mxu0
    %v2834 = vadd.f32 %v2289, %v2833
    %v2835 = vpop.f32.mrb[0].mxu0
    %2836 = vmatprep.mubr.bf16.mxu0 %v1334
    %2837 = vmatmul.mubr.bf16.gmra.mrb[0].mxu0 %v1333
    %v2838 = vpop.f32.mrb[0].mxu0
    %v2839 = vadd.f32 %v2294, %v2838
    %v2840 = vpop.f32.mrb[0].mxu0
    %v2841 = vpop.f32.mrb[0].mxu0
    %v2842 = vadd.f32 %v2297, %v2841
    %v2843 = vpop.f32.mrb[0].mxu0
    %2844 = vmatprep.mubr.bf16.mxu0 %v1338
    %2845 = vmatmul.mubr.bf16.gmra.mrb[0].mxu0 %v1337
    %v2846 = vpop.f32.mrb[0].mxu0
    %v2847 = vadd.f32 %v2302, %v2846
    %v2848 = vpop.f32.mrb[0].mxu0
    %v2849 = vpop.f32.mrb[0].mxu0
    %v2850 = vadd.f32 %v2305, %v2849
    %v2851 = vpop.f32.mrb[0].mxu0
    %2852 = vmatprep.mubr.bf16.mxu0 %v1342
    %2853 = vmatmul.mubr.bf16.gmra.mrb[0].mxu0 %v1341
    %v2854 = vpop.f32.mrb[0].mxu0
    %v2855 = vadd.f32 %v2310, %v2854
    %v2856 = vpop.f32.mrb[0].mxu0
    %v2857 = vpop.f32.mrb[0].mxu0
    %v2858 = vadd.f32 %v2313, %v2857
    %v2859 = vpop.f32.mrb[0].mxu0
    %2860 = vmatprep.mubr.bf16.mxu0 %v1346
    %2861 = vmatmul.mubr.bf16.gmra.mrb[0].mxu0 %v1345
    %v2862 = vpop.f32.mrb[0].mxu0
    %v2863 = vadd.f32 %v2318, %v2862
    %v2864 = vpop.f32.mrb[0].mxu0
    %v2865 = vpop.f32.mrb[0].mxu0
    %v2866 = vadd.f32 %v2321, %v2865
    %v2867 = vpop.f32.mrb[0].mxu0
    %2868 = vmatprep.mubr.bf16.mxu0 %v1350
    %2869 = vmatmul.mubr.bf16.gmra.mrb[0].mxu0 %v1349
    %v2870 = vpop.f32.mrb[0].mxu0
    %v2871 = vadd.f32 %v2326, %v2870
    %v2872 = vpop.f32.mrb[0].mxu0
    %v2873 = vpop.f32.mrb[0].mxu0
    %v2874 = vadd.f32 %v2329, %v2873
    %v2875 = vpop.f32.mrb[0].mxu0
    %2876 = vmatprep.mubr.bf16.mxu0 %v1354
    %2877 = vmatmul.mubr.bf16.gmra.mrb[0].mxu0 %v1353
    %v2878 = vpop.f32.mrb[0].mxu0
    %v2879 = vadd.f32 %v2334, %v2878
    %v2880 = vpop.f32.mrb[0].mxu0
    %v2881 = vpop.f32.mrb[0].mxu0
    %v2882 = vadd.f32 %v2337, %v2881
    %v2883 = vpop.f32.mrb[0].mxu0
    %2884 = vmatprep.mubr.bf16.mxu0 %v1358
    %2885 = vmatmul.mubr.bf16.gmra.mrb[0].mxu0 %v1357
    %v2886 = vpop.f32.mrb[0].mxu0
    %v2887 = vadd.f32 %v2342, %v2886
    %v2888 = vpop.f32.mrb[0].mxu0
    %v2889 = vpop.f32.mrb[0].mxu0
    %v2890 = vadd.f32 %v2345, %v2889
    %v2891 = vpop.f32.mrb[0].mxu0
    %2892 = vmatprep.mubr.bf16.mxu0 %v1362
    %2893 = vmatmul.mubr.bf16.gmra.mrb[0].mxu0 %v1361
    %v2894 = vpop.f32.mrb[0].mxu0
    %v2895 = vadd.f32 %v2350, %v2894
    %v2896 = vpop.f32.mrb[0].mxu0
    %v2897 = vpop.f32.mrb[0].mxu0
    %v2898 = vadd.f32 %v2353, %v2897
    %v2899 = vpop.f32.mrb[0].mxu0
    %2900 = vdwg.mxu0
    %vm2901 = vcmask 261120
    %v2902 = vsel %vm2901, %v2391, 0.0
    %v2903 = vsel %vm2901, %v2394, 0.0
    %v2904 = vadd.f32 %v2902, %v2903
    %v2905 = vsel %vm2901, %v2399, 0.0
    %v2906 = vadd.f32 %v2904, %v2905
    %v2907 = vsel %vm2901, %v2402, 0.0
    %v2908 = vadd.f32 %v2906, %v2907
    %v2909 = vsel %vm2901, %v2407, 0.0
    %v2910 = vadd.f32 %v2908, %v2909
    %v2911 = vsel %vm2901, %v2410, 0.0
    %v2912 = vadd.f32 %v2910, %v2911
    %v2913 = vsel %vm2901, %v2415, 0.0
    %v2914 = vadd.f32 %v2912, %v2913
    %v2915 = vsel %vm2901, %v2418, 0.0
    %v2916 = vadd.f32 %v2914, %v2915
    %v2917 = vsel %vm2901, %v2423, 0.0
    %v2918 = vadd.f32 %v2916, %v2917
    %v2919 = vsel %vm2901, %v2426, 0.0
    %v2920 = vadd.f32 %v2918, %v2919
    %v2921 = vsel %vm2901, %v2431, 0.0
    %v2922 = vadd.f32 %v2920, %v2921
    %v2923 = vsel %vm2901, %v2434, 0.0
    %v2924 = vadd.f32 %v2922, %v2923
    %v2925 = vsel %vm2901, %v2439, 0.0
    %v2926 = vadd.f32 %v2924, %v2925
    %v2927 = vsel %vm2901, %v2442, 0.0
    %v2928 = vadd.f32 %v2926, %v2927
    %v2929 = vsel %vm2901, %v2447, 0.0
    %v2930 = vadd.f32 %v2928, %v2929
    %v2931 = vsel %vm2901, %v2450, 0.0
    %v2932 = vadd.f32 %v2930, %v2931
    %v2933 = vsel %vm2901, %v2455, 0.0
    %v2934 = vadd.f32 %v2932, %v2933
    %v2935 = vsel %vm2901, %v2458, 0.0
    %v2936 = vadd.f32 %v2934, %v2935
    %v2937 = vsel %vm2901, %v2463, 0.0
    %v2938 = vadd.f32 %v2936, %v2937
    %v2939 = vsel %vm2901, %v2466, 0.0
    %v2940 = vadd.f32 %v2938, %v2939
    %v2941 = vsel %vm2901, %v2471, 0.0
    %v2942 = vadd.f32 %v2940, %v2941
    %v2943 = vsel %vm2901, %v2474, 0.0
    %v2944 = vadd.f32 %v2942, %v2943
    %v2945 = vsel %vm2901, %v2479, 0.0
    %v2946 = vadd.f32 %v2944, %v2945
    %v2947 = vsel %vm2901, %v2482, 0.0
    %v2948 = vadd.f32 %v2946, %v2947
    %v2949 = vsel %vm2901, %v2487, 0.0
    %v2950 = vadd.f32 %v2948, %v2949
    %v2951 = vsel %vm2901, %v2490, 0.0
    %v2952 = vadd.f32 %v2950, %v2951
    %v2953 = vsel %vm2901, %v2495, 0.0
    %v2954 = vadd.f32 %v2952, %v2953
    %v2955 = vsel %vm2901, %v2498, 0.0
    %v2956 = vadd.f32 %v2954, %v2955
    %v2957 = vsel %vm2901, %v2503, 0.0
    %v2958 = vadd.f32 %v2956, %v2957
    %v2959 = vsel %vm2901, %v2506, 0.0
    %v2960 = vadd.f32 %v2958, %v2959
    %v2961 = vsel %vm2901, %v2511, 0.0
    %v2962 = vadd.f32 %v2960, %v2961
    %v2963 = vsel %vm2901, %v2514, 0.0
    %v2964 = vadd.f32 %v2962, %v2963
    %v2965 = vsel %vm2901, %v2519, 0.0
    %v2966 = vadd.f32 %v2964, %v2965
    %v2967 = vsel %vm2901, %v2522, 0.0
    %v2968 = vadd.f32 %v2966, %v2967
    %v2969 = vsel %vm2901, %v2527, 0.0
    %v2970 = vadd.f32 %v2968, %v2969
    %v2971 = vsel %vm2901, %v2530, 0.0
    %v2972 = vadd.f32 %v2970, %v2971
    %v2973 = vsel %vm2901, %v2535, 0.0
    %v2974 = vadd.f32 %v2972, %v2973
    %v2975 = vsel %vm2901, %v2538, 0.0
    %v2976 = vadd.f32 %v2974, %v2975
    %v2977 = vsel %vm2901, %v2543, 0.0
    %v2978 = vadd.f32 %v2976, %v2977
    %v2979 = vsel %vm2901, %v2546, 0.0
    %v2980 = vadd.f32 %v2978, %v2979
    %v2981 = vsel %vm2901, %v2551, 0.0
    %v2982 = vadd.f32 %v2980, %v2981
    %v2983 = vsel %vm2901, %v2554, 0.0
    %v2984 = vadd.f32 %v2982, %v2983
    %v2985 = vsel %vm2901, %v2559, 0.0
    %v2986 = vadd.f32 %v2984, %v2985
    %v2987 = vsel %vm2901, %v2562, 0.0
    %v2988 = vadd.f32 %v2986, %v2987
    %v2989 = vsel %vm2901, %v2567, 0.0
    %v2990 = vadd.f32 %v2988, %v2989
    %v2991 = vsel %vm2901, %v2570, 0.0
    %v2992 = vadd.f32 %v2990, %v2991
    %v2993 = vsel %vm2901, %v2575, 0.0
    %v2994 = vadd.f32 %v2992, %v2993
    %v2995 = vsel %vm2901, %v2578, 0.0
    %v2996 = vadd.f32 %v2994, %v2995
    %v2997 = vsel %vm2901, %v2583, 0.0
    %v2998 = vadd.f32 %v2996, %v2997
    %v2999 = vsel %vm2901, %v2586, 0.0
    %v3000 = vadd.f32 %v2998, %v2999
    %v3001 = vsel %vm2901, %v2591, 0.0
    %v3002 = vadd.f32 %v3000, %v3001
    %v3003 = vsel %vm2901, %v2594, 0.0
    %v3004 = vadd.f32 %v3002, %v3003
    %v3005 = vsel %vm2901, %v2599, 0.0
    %v3006 = vadd.f32 %v3004, %v3005
    %v3007 = vsel %vm2901, %v2602, 0.0
    %v3008 = vadd.f32 %v3006, %v3007
    %v3009 = vsel %vm2901, %v2607, 0.0
    %v3010 = vadd.f32 %v3008, %v3009
    %v3011 = vsel %vm2901, %v2610, 0.0
    %v3012 = vadd.f32 %v3010, %v3011
    %v3013 = vsel %vm2901, %v2615, 0.0
    %v3014 = vadd.f32 %v3012, %v3013
    %v3015 = vsel %vm2901, %v2618, 0.0
    %v3016 = vadd.f32 %v3014, %v3015
    %v3017 = vsel %vm2901, %v2623, 0.0
    %v3018 = vadd.f32 %v3016, %v3017
    %v3019 = vsel %vm2901, %v2626, 0.0
    %v3020 = vadd.f32 %v3018, %v3019
    %v3021 = vsel %vm2901, %v2631, 0.0
    %v3022 = vadd.f32 %v3020, %v3021
    %v3023 = vsel %vm2901, %v2634, 0.0
    %v3024 = vadd.f32 %v3022, %v3023
    %v3025 = vsel %vm2901, %v2639, 0.0
    %v3026 = vadd.f32 %v3024, %v3025
    %v3027 = vsel %vm2901, %v2642, 0.0
    %v3028 = vadd.f32 %v3026, %v3027
    %v3029 = vsel %vm2901, %v2647, 0.0
    %v3030 = vadd.f32 %v3028, %v3029
    %v3031 = vsel %vm2901, %v2650, 0.0
    %v3032 = vadd.f32 %v3030, %v3031
    %v3033 = vsel %vm2901, %v2655, 0.0
    %v3034 = vadd.f32 %v3032, %v3033
    %v3035 = vsel %vm2901, %v2658, 0.0
    %v3036 = vadd.f32 %v3034, %v3035
    %v3037 = vsel %vm2901, %v2663, 0.0
    %v3038 = vadd.f32 %v3036, %v3037
    %v3039 = vsel %vm2901, %v2666, 0.0
    %v3040 = vadd.f32 %v3038, %v3039
    %v3041 = vsel %vm2901, %v2671, 0.0
    %v3042 = vadd.f32 %v3040, %v3041
    %v3043 = vsel %vm2901, %v2674, 0.0
    %v3044 = vadd.f32 %v3042, %v3043
    %v3045 = vsel %vm2901, %v2679, 0.0
    %v3046 = vadd.f32 %v3044, %v3045
    %v3047 = vsel %vm2901, %v2682, 0.0
    %v3048 = vadd.f32 %v3046, %v3047
    %v3049 = vsel %vm2901, %v2687, 0.0
    %v3050 = vadd.f32 %v3048, %v3049
    %v3051 = vsel %vm2901, %v2690, 0.0
    %v3052 = vadd.f32 %v3050, %v3051
    %v3053 = vsel %vm2901, %v2695, 0.0
    %v3054 = vadd.f32 %v3052, %v3053
    %v3055 = vsel %vm2901, %v2698, 0.0
    %v3056 = vadd.f32 %v3054, %v3055
    %v3057 = vsel %vm2901, %v2703, 0.0
    %v3058 = vadd.f32 %v3056, %v3057
    %v3059 = vsel %vm2901, %v2706, 0.0
    %v3060 = vadd.f32 %v3058, %v3059
    %v3061 = vsel %vm2901, %v2711, 0.0
    %v3062 = vadd.f32 %v3060, %v3061
    %v3063 = vsel %vm2901, %v2714, 0.0
    %v3064 = vadd.f32 %v3062, %v3063
    %v3065 = vsel %vm2901, %v2719, 0.0
    %v3066 = vadd.f32 %v3064, %v3065
    %v3067 = vsel %vm2901, %v2722, 0.0
    %v3068 = vadd.f32 %v3066, %v3067
    %v3069 = vsel %vm2901, %v2727, 0.0
    %v3070 = vadd.f32 %v3068, %v3069
    %v3071 = vsel %vm2901, %v2730, 0.0
    %v3072 = vadd.f32 %v3070, %v3071
    %v3073 = vsel %vm2901, %v2735, 0.0
    %v3074 = vadd.f32 %v3072, %v3073
    %v3075 = vsel %vm2901, %v2738, 0.0
    %v3076 = vadd.f32 %v3074, %v3075
    %v3077 = vsel %vm2901, %v2743, 0.0
    %v3078 = vadd.f32 %v3076, %v3077
    %v3079 = vsel %vm2901, %v2746, 0.0
    %v3080 = vadd.f32 %v3078, %v3079
    %v3081 = vsel %vm2901, %v2751, 0.0
    %v3082 = vadd.f32 %v3080, %v3081
    %v3083 = vsel %vm2901, %v2754, 0.0
    %v3084 = vadd.f32 %v3082, %v3083
    %v3085 = vsel %vm2901, %v2759, 0.0
    %v3086 = vadd.f32 %v3084, %v3085
    %v3087 = vsel %vm2901, %v2762, 0.0
    %v3088 = vadd.f32 %v3086, %v3087
    %v3089 = vsel %vm2901, %v2767, 0.0
    %v3090 = vadd.f32 %v3088, %v3089
    %v3091 = vsel %vm2901, %v2770, 0.0
    %v3092 = vadd.f32 %v3090, %v3091
    %v3093 = vsel %vm2901, %v2775, 0.0
    %v3094 = vadd.f32 %v3092, %v3093
    %v3095 = vsel %vm2901, %v2778, 0.0
    %v3096 = vadd.f32 %v3094, %v3095
    %v3097 = vsel %vm2901, %v2783, 0.0
    %v3098 = vadd.f32 %v3096, %v3097
    %v3099 = vsel %vm2901, %v2786, 0.0
    %v3100 = vadd.f32 %v3098, %v3099
    %v3101 = vsel %vm2901, %v2791, 0.0
    %v3102 = vadd.f32 %v3100, %v3101
    %v3103 = vsel %vm2901, %v2794, 0.0
    %v3104 = vadd.f32 %v3102, %v3103
    %v3105 = vsel %vm2901, %v2799, 0.0
    %v3106 = vadd.f32 %v3104, %v3105
    %v3107 = vsel %vm2901, %v2802, 0.0
    %v3108 = vadd.f32 %v3106, %v3107
    %v3109 = vsel %vm2901, %v2807, 0.0
    %v3110 = vadd.f32 %v3108, %v3109
    %v3111 = vsel %vm2901, %v2810, 0.0
    %v3112 = vadd.f32 %v3110, %v3111
    %v3113 = vsel %vm2901, %v2815, 0.0
    %v3114 = vadd.f32 %v3112, %v3113
    %v3115 = vsel %vm2901, %v2818, 0.0
    %v3116 = vadd.f32 %v3114, %v3115
    %v3117 = vsel %vm2901, %v2823, 0.0
    %v3118 = vadd.f32 %v3116, %v3117
    %v3119 = vsel %vm2901, %v2826, 0.0
    %v3120 = vadd.f32 %v3118, %v3119
    %v3121 = vsel %vm2901, %v2831, 0.0
    %v3122 = vadd.f32 %v3120, %v3121
    %v3123 = vsel %vm2901, %v2834, 0.0
    %v3124 = vadd.f32 %v3122, %v3123
    %v3125 = vsel %vm2901, %v2839, 0.0
    %v3126 = vadd.f32 %v3124, %v3125
    %v3127 = vsel %vm2901, %v2842, 0.0
    %v3128 = vadd.f32 %v3126, %v3127
    %v3129 = vsel %vm2901, %v2847, 0.0
    %v3130 = vadd.f32 %v3128, %v3129
    %v3131 = vsel %vm2901, %v2850, 0.0
    %v3132 = vadd.f32 %v3130, %v3131
    %v3133 = vsel %vm2901, %v2855, 0.0
    %v3134 = vadd.f32 %v3132, %v3133
    %v3135 = vsel %vm2901, %v2858, 0.0
    %v3136 = vadd.f32 %v3134, %v3135
    %v3137 = vsel %vm2901, %v2863, 0.0
    %v3138 = vadd.f32 %v3136, %v3137
    %v3139 = vsel %vm2901, %v2866, 0.0
    %v3140 = vadd.f32 %v3138, %v3139
    %v3141 = vsel %vm2901, %v2871, 0.0
    %v3142 = vadd.f32 %v3140, %v3141
    %v3143 = vsel %vm2901, %v2874, 0.0
    %v3144 = vadd.f32 %v3142, %v3143
    %v3145 = vsel %vm2901, %v2879, 0.0
    %v3146 = vadd.f32 %v3144, %v3145
    %v3147 = vsel %vm2901, %v2882, 0.0
    %v3148 = vadd.f32 %v3146, %v3147
    %v3149 = vsel %vm2901, %v2887, 0.0
    %v3150 = vadd.f32 %v3148, %v3149
    %v3151 = vsel %vm2901, %v2890, 0.0
    %v3152 = vadd.f32 %v3150, %v3151
    %v3153 = vsel %vm2901, %v2895, 0.0
    %v3154 = vadd.f32 %v3152, %v3153
    %v3155 = vsel %vm2901, %v2898, 0.0
    %v3156 = vadd.f32 %v3154, %v3155
    %v3157 = vrot.slane %v3156, 4
    %v3158 = vadd.f32 %v3156, %v3157
    %v3159 = vrot.slane %v3158, 2
    %v3160 = vadd.f32 %v3158, %v3159
    %v3161 = vrot.slane %v3160, 1
    %v3162 = vadd.f32 %v3160, %v3161
    %v3163 = vrcp.pop 1024.0
    %v3164 = vmul.f32 %v3162, %v3163
    %v3165 = vsub.f32 %v2391, %v3164
    %v3166 = vsub.f32 %v2394, %v3164
    %v3167 = vsub.f32 %v2399, %v3164
    %v3168 = vsub.f32 %v2402, %v3164
    %v3169 = vsub.f32 %v2407, %v3164
    %v3170 = vsub.f32 %v2410, %v3164
    %v3171 = vsub.f32 %v2415, %v3164
    %v3172 = vsub.f32 %v2418, %v3164
    %v3173 = vsub.f32 %v2423, %v3164
    %v3174 = vsub.f32 %v2426, %v3164
    %v3175 = vsub.f32 %v2431, %v3164
    %v3176 = vsub.f32 %v2434, %v3164
    %v3177 = vsub.f32 %v2439, %v3164
    %v3178 = vsub.f32 %v2442, %v3164
    %v3179 = vsub.f32 %v2447, %v3164
    %v3180 = vsub.f32 %v2450, %v3164
    %v3181 = vsub.f32 %v2455, %v3164
    %v3182 = vsub.f32 %v2458, %v3164
    %v3183 = vsub.f32 %v2463, %v3164
    %v3184 = vsub.f32 %v2466, %v3164
    %v3185 = vsub.f32 %v2471, %v3164
    %v3186 = vsub.f32 %v2474, %v3164
    %v3187 = vsub.f32 %v2479, %v3164
    %v3188 = vsub.f32 %v2482, %v3164
    %v3189 = vsub.f32 %v2487, %v3164
    %v3190 = vsub.f32 %v2490, %v3164
    %v3191 = vsub.f32 %v2495, %v3164
    %v3192 = vsub.f32 %v2498, %v3164
    %v3193 = vsub.f32 %v2503, %v3164
    %v3194 = vsub.f32 %v2506, %v3164
    %v3195 = vsub.f32 %v2511, %v3164
    %v3196 = vsub.f32 %v2514, %v3164
    %v3197 = vsub.f32 %v2519, %v3164
    %v3198 = vsub.f32 %v2522, %v3164
    %v3199 = vsub.f32 %v2527, %v3164
    %v3200 = vsub.f32 %v2530, %v3164
    %v3201 = vsub.f32 %v2535, %v3164
    %v3202 = vsub.f32 %v2538, %v3164
    %v3203 = vsub.f32 %v2543, %v3164
    %v3204 = vsub.f32 %v2546, %v3164
    %v3205 = vsub.f32 %v2551, %v3164
    %v3206 = vsub.f32 %v2554, %v3164
    %v3207 = vsub.f32 %v2559, %v3164
    %v3208 = vsub.f32 %v2562, %v3164
    %v3209 = vsub.f32 %v2567, %v3164
    %v3210 = vsub.f32 %v2570, %v3164
    %v3211 = vsub.f32 %v2575, %v3164
    %v3212 = vsub.f32 %v2578, %v3164
    %v3213 = vsub.f32 %v2583, %v3164
    %v3214 = vsub.f32 %v2586, %v3164
    %v3215 = vsub.f32 %v2591, %v3164
    %v3216 = vsub.f32 %v2594, %v3164
    %v3217 = vsub.f32 %v2599, %v3164
    %v3218 = vsub.f32 %v2602, %v3164
    %v3219 = vsub.f32 %v2607, %v3164
    %v3220 = vsub.f32 %v2610, %v3164
    %v3221 = vsub.f32 %v2615, %v3164
    %v3222 = vsub.f32 %v2618, %v3164
    %v3223 = vsub.f32 %v2623, %v3164
    %v3224 = vsub.f32 %v2626, %v3164
    %v3225 = vsub.f32 %v2631, %v3164
    %v3226 = vsub.f32 %v2634, %v3164
    %v3227 = vsub.f32 %v2639, %v3164
    %v3228 = vsub.f32 %v2642, %v3164
    %v3229 = vsub.f32 %v2647, %v3164
    %v3230 = vsub.f32 %v2650, %v3164
    %v3231 = vsub.f32 %v2655, %v3164
    %v3232 = vsub.f32 %v2658, %v3164
    %v3233 = vsub.f32 %v2663, %v3164
    %v3234 = vsub.f32 %v2666, %v3164
    %v3235 = vsub.f32 %v2671, %v3164
    %v3236 = vsub.f32 %v2674, %v3164
    %v3237 = vsub.f32 %v2679, %v3164
    %v3238 = vsub.f32 %v2682, %v3164
    %v3239 = vsub.f32 %v2687, %v3164
    %v3240 = vsub.f32 %v2690, %v3164
    %v3241 = vsub.f32 %v2695, %v3164
    %v3242 = vsub.f32 %v2698, %v3164
    %v3243 = vsub.f32 %v2703, %v3164
    %v3244 = vsub.f32 %v2706, %v3164
    %v3245 = vsub.f32 %v2711, %v3164
    %v3246 = vsub.f32 %v2714, %v3164
    %v3247 = vsub.f32 %v2719, %v3164
    %v3248 = vsub.f32 %v2722, %v3164
    %v3249 = vsub.f32 %v2727, %v3164
    %v3250 = vsub.f32 %v2730, %v3164
    %v3251 = vsub.f32 %v2735, %v3164
    %v3252 = vsub.f32 %v2738, %v3164
    %v3253 = vsub.f32 %v2743, %v3164
    %v3254 = vsub.f32 %v2746, %v3164
    %v3255 = vsub.f32 %v2751, %v3164
    %v3256 = vsub.f32 %v2754, %v3164
    %v3257 = vsub.f32 %v2759, %v3164
    %v3258 = vsub.f32 %v2762, %v3164
    %v3259 = vsub.f32 %v2767, %v3164
    %v3260 = vsub.f32 %v2770, %v3164
    %v3261 = vsub.f32 %v2775, %v3164
    %v3262 = vsub.f32 %v2778, %v3164
    %v3263 = vsub.f32 %v2783, %v3164
    %v3264 = vsub.f32 %v2786, %v3164
    %v3265 = vsub.f32 %v2791, %v3164
    %v3266 = vsub.f32 %v2794, %v3164
    %v3267 = vsub.f32 %v2799, %v3164
    %v3268 = vsub.f32 %v2802, %v3164
    %v3269 = vsub.f32 %v2807, %v3164
    %v3270 = vsub.f32 %v2810, %v3164
    %v3271 = vsub.f32 %v2815, %v3164
    %v3272 = vsub.f32 %v2818, %v3164
    %v3273 = vsub.f32 %v2823, %v3164
    %v3274 = vsub.f32 %v2826, %v3164
    %v3275 = vsub.f32 %v2831, %v3164
    %v3276 = vsub.f32 %v2834, %v3164
    %v3277 = vsub.f32 %v2839, %v3164
    %v3278 = vsub.f32 %v2842, %v3164
    %v3279 = vsub.f32 %v2847, %v3164
    %v3280 = vsub.f32 %v2850, %v3164
    %v3281 = vsub.f32 %v2855, %v3164
    %v3282 = vsub.f32 %v2858, %v3164
    %v3283 = vsub.f32 %v2863, %v3164
    %v3284 = vsub.f32 %v2866, %v3164
    %v3285 = vsub.f32 %v2871, %v3164
    %v3286 = vsub.f32 %v2874, %v3164
    %v3287 = vsub.f32 %v2879, %v3164
    %v3288 = vsub.f32 %v2882, %v3164
    %v3289 = vsub.f32 %v2887, %v3164
    %v3290 = vsub.f32 %v2890, %v3164
    %v3291 = vsub.f32 %v2895, %v3164
    %v3292 = vsub.f32 %v2898, %v3164
    %v3293 = vmul.f32 %v3165, %v3165
    %v3294 = vmul.f32 %v3166, %v3166
    %v3295 = vmul.f32 %v3167, %v3167
    %v3296 = vmul.f32 %v3168, %v3168
    %v3297 = vmul.f32 %v3169, %v3169
    %v3298 = vmul.f32 %v3170, %v3170
    %v3299 = vmul.f32 %v3171, %v3171
    %v3300 = vmul.f32 %v3172, %v3172
    %v3301 = vmul.f32 %v3173, %v3173
    %v3302 = vmul.f32 %v3174, %v3174
    %v3303 = vmul.f32 %v3175, %v3175
    %v3304 = vmul.f32 %v3176, %v3176
    %v3305 = vmul.f32 %v3177, %v3177
    %v3306 = vmul.f32 %v3178, %v3178
    %v3307 = vmul.f32 %v3179, %v3179
    %v3308 = vmul.f32 %v3180, %v3180
    %v3309 = vmul.f32 %v3181, %v3181
    %v3310 = vmul.f32 %v3182, %v3182
    %v3311 = vmul.f32 %v3183, %v3183
    %v3312 = vmul.f32 %v3184, %v3184
    %v3313 = vmul.f32 %v3185, %v3185
    %v3314 = vmul.f32 %v3186, %v3186
    %v3315 = vmul.f32 %v3187, %v3187
    %v3316 = vmul.f32 %v3188, %v3188
    %v3317 = vmul.f32 %v3189, %v3189
    %v3318 = vmul.f32 %v3190, %v3190
    %v3319 = vmul.f32 %v3191, %v3191
    %v3320 = vmul.f32 %v3192, %v3192
    %v3321 = vmul.f32 %v3193, %v3193
    %v3322 = vmul.f32 %v3194, %v3194
    %v3323 = vmul.f32 %v3195, %v3195
    %v3324 = vmul.f32 %v3196, %v3196
    %v3325 = vmul.f32 %v3197, %v3197
    %v3326 = vmul.f32 %v3198, %v3198
    %v3327 = vmul.f32 %v3199, %v3199
    %v3328 = vmul.f32 %v3200, %v3200
    %v3329 = vmul.f32 %v3201, %v3201
    %v3330 = vmul.f32 %v3202, %v3202
    %v3331 = vmul.f32 %v3203, %v3203
    %v3332 = vmul.f32 %v3204, %v3204
    %v3333 = vmul.f32 %v3205, %v3205
    %v3334 = vmul.f32 %v3206, %v3206
    %v3335 = vmul.f32 %v3207, %v3207
    %v3336 = vmul.f32 %v3208, %v3208
    %v3337 = vmul.f32 %v3209, %v3209
    %v3338 = vmul.f32 %v3210, %v3210
    %v3339 = vmul.f32 %v3211, %v3211
    %v3340 = vmul.f32 %v3212, %v3212
    %v3341 = vmul.f32 %v3213, %v3213
    %v3342 = vmul.f32 %v3214, %v3214
    %v3343 = vmul.f32 %v3215, %v3215
    %v3344 = vmul.f32 %v3216, %v3216
    %v3345 = vmul.f32 %v3217, %v3217
    %v3346 = vmul.f32 %v3218, %v3218
    %v3347 = vmul.f32 %v3219, %v3219
    %v3348 = vmul.f32 %v3220, %v3220
    %v3349 = vmul.f32 %v3221, %v3221
    %v3350 = vmul.f32 %v3222, %v3222
    %v3351 = vmul.f32 %v3223, %v3223
    %v3352 = vmul.f32 %v3224, %v3224
    %v3353 = vmul.f32 %v3225, %v3225
    %v3354 = vmul.f32 %v3226, %v3226
    %v3355 = vmul.f32 %v3227, %v3227
    %v3356 = vmul.f32 %v3228, %v3228
    %v3357 = vmul.f32 %v3229, %v3229
    %v3358 = vmul.f32 %v3230, %v3230
    %v3359 = vmul.f32 %v3231, %v3231
    %v3360 = vmul.f32 %v3232, %v3232
    %v3361 = vmul.f32 %v3233, %v3233
    %v3362 = vmul.f32 %v3234, %v3234
    %v3363 = vmul.f32 %v3235, %v3235
    %v3364 = vmul.f32 %v3236, %v3236
    %v3365 = vmul.f32 %v3237, %v3237
    %v3366 = vmul.f32 %v3238, %v3238
    %v3367 = vmul.f32 %v3239, %v3239
    %v3368 = vmul.f32 %v3240, %v3240
    %v3369 = vmul.f32 %v3241, %v3241
    %v3370 = vmul.f32 %v3242, %v3242
    %v3371 = vmul.f32 %v3243, %v3243
    %v3372 = vmul.f32 %v3244, %v3244
    %v3373 = vmul.f32 %v3245, %v3245
    %v3374 = vmul.f32 %v3246, %v3246
    %v3375 = vmul.f32 %v3247, %v3247
    %v3376 = vmul.f32 %v3248, %v3248
    %v3377 = vmul.f32 %v3249, %v3249
    %v3378 = vmul.f32 %v3250, %v3250
    %v3379 = vmul.f32 %v3251, %v3251
    %v3380 = vmul.f32 %v3252, %v3252
    %v3381 = vmul.f32 %v3253, %v3253
    %v3382 = vmul.f32 %v3254, %v3254
    %v3383 = vmul.f32 %v3255, %v3255
    %v3384 = vmul.f32 %v3256, %v3256
    %v3385 = vmul.f32 %v3257, %v3257
    %v3386 = vmul.f32 %v3258, %v3258
    %v3387 = vmul.f32 %v3259, %v3259
    %v3388 = vmul.f32 %v3260, %v3260
    %v3389 = vmul.f32 %v3261, %v3261
    %v3390 = vmul.f32 %v3262, %v3262
    %v3391 = vmul.f32 %v3263, %v3263
    %v3392 = vmul.f32 %v3264, %v3264
    %v3393 = vmul.f32 %v3265, %v3265
    %v3394 = vmul.f32 %v3266, %v3266
    %v3395 = vmul.f32 %v3267, %v3267
    %v3396 = vmul.f32 %v3268, %v3268
    %v3397 = vmul.f32 %v3269, %v3269
    %v3398 = vmul.f32 %v3270, %v3270
    %v3399 = vmul.f32 %v3271, %v3271
    %v3400 = vmul.f32 %v3272, %v3272
    %v3401 = vmul.f32 %v3273, %v3273
    %v3402 = vmul.f32 %v3274, %v3274
    %v3403 = vmul.f32 %v3275, %v3275
    %v3404 = vmul.f32 %v3276, %v3276
    %v3405 = vmul.f32 %v3277, %v3277
    %v3406 = vmul.f32 %v3278, %v3278
    %v3407 = vmul.f32 %v3279, %v3279
    %v3408 = vmul.f32 %v3280, %v3280
    %v3409 = vmul.f32 %v3281, %v3281
    %v3410 = vmul.f32 %v3282, %v3282
    %v3411 = vmul.f32 %v3283, %v3283
    %v3412 = vmul.f32 %v3284, %v3284
    %v3413 = vmul.f32 %v3285, %v3285
    %v3414 = vmul.f32 %v3286, %v3286
    %v3415 = vmul.f32 %v3287, %v3287
    %v3416 = vmul.f32 %v3288, %v3288
    %v3417 = vmul.f32 %v3289, %v3289
    %v3418 = vmul.f32 %v3290, %v3290
    %v3419 = vmul.f32 %v3291, %v3291
    %v3420 = vmul.f32 %v3292, %v3292
    %v3421 = vsel %vm2901, %v3293, 0.0
    %v3422 = vsel %vm2901, %v3294, 0.0
    %v3423 = vadd.f32 %v3421, %v3422
    %v3424 = vsel %vm2901, %v3295, 0.0
    %v3425 = vadd.f32 %v3423, %v3424
    %v3426 = vsel %vm2901, %v3296, 0.0
    %v3427 = vadd.f32 %v3425, %v3426
    %v3428 = vsel %vm2901, %v3297, 0.0
    %v3429 = vadd.f32 %v3427, %v3428
    %v3430 = vsel %vm2901, %v3298, 0.0
    %v3431 = vadd.f32 %v3429, %v3430
    %v3432 = vsel %vm2901, %v3299, 0.0
    %v3433 = vadd.f32 %v3431, %v3432
    %v3434 = vsel %vm2901, %v3300, 0.0
    %v3435 = vadd.f32 %v3433, %v3434
    %v3436 = vsel %vm2901, %v3301, 0.0
    %v3437 = vadd.f32 %v3435, %v3436
    %v3438 = vsel %vm2901, %v3302, 0.0
    %v3439 = vadd.f32 %v3437, %v3438
    %v3440 = vsel %vm2901, %v3303, 0.0
    %v3441 = vadd.f32 %v3439, %v3440
    %v3442 = vsel %vm2901, %v3304, 0.0
    %v3443 = vadd.f32 %v3441, %v3442
    %v3444 = vsel %vm2901, %v3305, 0.0
    %v3445 = vadd.f32 %v3443, %v3444
    %v3446 = vsel %vm2901, %v3306, 0.0
    %v3447 = vadd.f32 %v3445, %v3446
    %v3448 = vsel %vm2901, %v3307, 0.0
    %v3449 = vadd.f32 %v3447, %v3448
    %v3450 = vsel %vm2901, %v3308, 0.0
    %v3451 = vadd.f32 %v3449, %v3450
    %v3452 = vsel %vm2901, %v3309, 0.0
    %v3453 = vadd.f32 %v3451, %v3452
    %v3454 = vsel %vm2901, %v3310, 0.0
    %v3455 = vadd.f32 %v3453, %v3454
    %v3456 = vsel %vm2901, %v3311, 0.0
    %v3457 = vadd.f32 %v3455, %v3456
    %v3458 = vsel %vm2901, %v3312, 0.0
    %v3459 = vadd.f32 %v3457, %v3458
    %v3460 = vsel %vm2901, %v3313, 0.0
    %v3461 = vadd.f32 %v3459, %v3460
    %v3462 = vsel %vm2901, %v3314, 0.0
    %v3463 = vadd.f32 %v3461, %v3462
    %v3464 = vsel %vm2901, %v3315, 0.0
    %v3465 = vadd.f32 %v3463, %v3464
    %v3466 = vsel %vm2901, %v3316, 0.0
    %v3467 = vadd.f32 %v3465, %v3466
    %v3468 = vsel %vm2901, %v3317, 0.0
    %v3469 = vadd.f32 %v3467, %v3468
    %v3470 = vsel %vm2901, %v3318, 0.0
    %v3471 = vadd.f32 %v3469, %v3470
    %v3472 = vsel %vm2901, %v3319, 0.0
    %v3473 = vadd.f32 %v3471, %v3472
    %v3474 = vsel %vm2901, %v3320, 0.0
    %v3475 = vadd.f32 %v3473, %v3474
    %v3476 = vsel %vm2901, %v3321, 0.0
    %v3477 = vadd.f32 %v3475, %v3476
    %v3478 = vsel %vm2901, %v3322, 0.0
    %v3479 = vadd.f32 %v3477, %v3478
    %v3480 = vsel %vm2901, %v3323, 0.0
    %v3481 = vadd.f32 %v3479, %v3480
    %v3482 = vsel %vm2901, %v3324, 0.0
    %v3483 = vadd.f32 %v3481, %v3482
    %v3484 = vsel %vm2901, %v3325, 0.0
    %v3485 = vadd.f32 %v3483, %v3484
    %v3486 = vsel %vm2901, %v3326, 0.0
    %v3487 = vadd.f32 %v3485, %v3486
    %v3488 = vsel %vm2901, %v3327, 0.0
    %v3489 = vadd.f32 %v3487, %v3488
    %v3490 = vsel %vm2901, %v3328, 0.0
    %v3491 = vadd.f32 %v3489, %v3490
    %v3492 = vsel %vm2901, %v3329, 0.0
    %v3493 = vadd.f32 %v3491, %v3492
    %v3494 = vsel %vm2901, %v3330, 0.0
    %v3495 = vadd.f32 %v3493, %v3494
    %v3496 = vsel %vm2901, %v3331, 0.0
    %v3497 = vadd.f32 %v3495, %v3496
    %v3498 = vsel %vm2901, %v3332, 0.0
    %v3499 = vadd.f32 %v3497, %v3498
    %v3500 = vsel %vm2901, %v3333, 0.0
    %v3501 = vadd.f32 %v3499, %v3500
    %v3502 = vsel %vm2901, %v3334, 0.0
    %v3503 = vadd.f32 %v3501, %v3502
    %v3504 = vsel %vm2901, %v3335, 0.0
    %v3505 = vadd.f32 %v3503, %v3504
    %v3506 = vsel %vm2901, %v3336, 0.0
    %v3507 = vadd.f32 %v3505, %v3506
    %v3508 = vsel %vm2901, %v3337, 0.0
    %v3509 = vadd.f32 %v3507, %v3508
    %v3510 = vsel %vm2901, %v3338, 0.0
    %v3511 = vadd.f32 %v3509, %v3510
    %v3512 = vsel %vm2901, %v3339, 0.0
    %v3513 = vadd.f32 %v3511, %v3512
    %v3514 = vsel %vm2901, %v3340, 0.0
    %v3515 = vadd.f32 %v3513, %v3514
    %v3516 = vsel %vm2901, %v3341, 0.0
    %v3517 = vadd.f32 %v3515, %v3516
    %v3518 = vsel %vm2901, %v3342, 0.0
    %v3519 = vadd.f32 %v3517, %v3518
    %v3520 = vsel %vm2901, %v3343, 0.0
    %v3521 = vadd.f32 %v3519, %v3520
    %v3522 = vsel %vm2901, %v3344, 0.0
    %v3523 = vadd.f32 %v3521, %v3522
    %v3524 = vsel %vm2901, %v3345, 0.0
    %v3525 = vadd.f32 %v3523, %v3524
    %v3526 = vsel %vm2901, %v3346, 0.0
    %v3527 = vadd.f32 %v3525, %v3526
    %v3528 = vsel %vm2901, %v3347, 0.0
    %v3529 = vadd.f32 %v3527, %v3528
    %v3530 = vsel %vm2901, %v3348, 0.0
    %v3531 = vadd.f32 %v3529, %v3530
    %v3532 = vsel %vm2901, %v3349, 0.0
    %v3533 = vadd.f32 %v3531, %v3532
    %v3534 = vsel %vm2901, %v3350, 0.0
    %v3535 = vadd.f32 %v3533, %v3534
    %v3536 = vsel %vm2901, %v3351, 0.0
    %v3537 = vadd.f32 %v3535, %v3536
    %v3538 = vsel %vm2901, %v3352, 0.0
    %v3539 = vadd.f32 %v3537, %v3538
    %v3540 = vsel %vm2901, %v3353, 0.0
    %v3541 = vadd.f32 %v3539, %v3540
    %v3542 = vsel %vm2901, %v3354, 0.0
    %v3543 = vadd.f32 %v3541, %v3542
    %v3544 = vsel %vm2901, %v3355, 0.0
    %v3545 = vadd.f32 %v3543, %v3544
    %v3546 = vsel %vm2901, %v3356, 0.0
    %v3547 = vadd.f32 %v3545, %v3546
    %v3548 = vsel %vm2901, %v3357, 0.0
    %v3549 = vadd.f32 %v3547, %v3548
    %v3550 = vsel %vm2901, %v3358, 0.0
    %v3551 = vadd.f32 %v3549, %v3550
    %v3552 = vsel %vm2901, %v3359, 0.0
    %v3553 = vadd.f32 %v3551, %v3552
    %v3554 = vsel %vm2901, %v3360, 0.0
    %v3555 = vadd.f32 %v3553, %v3554
    %v3556 = vsel %vm2901, %v3361, 0.0
    %v3557 = vadd.f32 %v3555, %v3556
    %v3558 = vsel %vm2901, %v3362, 0.0
    %v3559 = vadd.f32 %v3557, %v3558
    %v3560 = vsel %vm2901, %v3363, 0.0
    %v3561 = vadd.f32 %v3559, %v3560
    %v3562 = vsel %vm2901, %v3364, 0.0
    %v3563 = vadd.f32 %v3561, %v3562
    %v3564 = vsel %vm2901, %v3365, 0.0
    %v3565 = vadd.f32 %v3563, %v3564
    %v3566 = vsel %vm2901, %v3366, 0.0
    %v3567 = vadd.f32 %v3565, %v3566
    %v3568 = vsel %vm2901, %v3367, 0.0
    %v3569 = vadd.f32 %v3567, %v3568
    %v3570 = vsel %vm2901, %v3368, 0.0
    %v3571 = vadd.f32 %v3569, %v3570
    %v3572 = vsel %vm2901, %v3369, 0.0
    %v3573 = vadd.f32 %v3571, %v3572
    %v3574 = vsel %vm2901, %v3370, 0.0
    %v3575 = vadd.f32 %v3573, %v3574
    %v3576 = vsel %vm2901, %v3371, 0.0
    %v3577 = vadd.f32 %v3575, %v3576
    %v3578 = vsel %vm2901, %v3372, 0.0
    %v3579 = vadd.f32 %v3577, %v3578
    %v3580 = vsel %vm2901, %v3373, 0.0
    %v3581 = vadd.f32 %v3579, %v3580
    %v3582 = vsel %vm2901, %v3374, 0.0
    %v3583 = vadd.f32 %v3581, %v3582
    %v3584 = vsel %vm2901, %v3375, 0.0
    %v3585 = vadd.f32 %v3583, %v3584
    %v3586 = vsel %vm2901, %v3376, 0.0
    %v3587 = vadd.f32 %v3585, %v3586
    %v3588 = vsel %vm2901, %v3377, 0.0
    %v3589 = vadd.f32 %v3587, %v3588
    %v3590 = vsel %vm2901, %v3378, 0.0
    %v3591 = vadd.f32 %v3589, %v3590
    %v3592 = vsel %vm2901, %v3379, 0.0
    %v3593 = vadd.f32 %v3591, %v3592
    %v3594 = vsel %vm2901, %v3380, 0.0
    %v3595 = vadd.f32 %v3593, %v3594
    %v3596 = vsel %vm2901, %v3381, 0.0
    %v3597 = vadd.f32 %v3595, %v3596
    %v3598 = vsel %vm2901, %v3382, 0.0
    %v3599 = vadd.f32 %v3597, %v3598
    %v3600 = vsel %vm2901, %v3383, 0.0
    %v3601 = vadd.f32 %v3599, %v3600
    %v3602 = vsel %vm2901, %v3384, 0.0
    %v3603 = vadd.f32 %v3601, %v3602
    %v3604 = vsel %vm2901, %v3385, 0.0
    %v3605 = vadd.f32 %v3603, %v3604
    %v3606 = vsel %vm2901, %v3386, 0.0
    %v3607 = vadd.f32 %v3605, %v3606
    %v3608 = vsel %vm2901, %v3387, 0.0
    %v3609 = vadd.f32 %v3607, %v3608
    %v3610 = vsel %vm2901, %v3388, 0.0
    %v3611 = vadd.f32 %v3609, %v3610
    %v3612 = vsel %vm2901, %v3389, 0.0
    %v3613 = vadd.f32 %v3611, %v3612
    %v3614 = vsel %vm2901, %v3390, 0.0
    %v3615 = vadd.f32 %v3613, %v3614
    %v3616 = vsel %vm2901, %v3391, 0.0
    %v3617 = vadd.f32 %v3615, %v3616
    %v3618 = vsel %vm2901, %v3392, 0.0
    %v3619 = vadd.f32 %v3617, %v3618
    %v3620 = vsel %vm2901, %v3393, 0.0
    %v3621 = vadd.f32 %v3619, %v3620
    %v3622 = vsel %vm2901, %v3394, 0.0
    %v3623 = vadd.f32 %v3621, %v3622
    %v3624 = vsel %vm2901, %v3395, 0.0
    %v3625 = vadd.f32 %v3623, %v3624
    %v3626 = vsel %vm2901, %v3396, 0.0
    %v3627 = vadd.f32 %v3625, %v3626
    %v3628 = vsel %vm2901, %v3397, 0.0
    %v3629 = vadd.f32 %v3627, %v3628
    %v3630 = vsel %vm2901, %v3398, 0.0
    %v3631 = vadd.f32 %v3629, %v3630
    %v3632 = vsel %vm2901, %v3399, 0.0
    %v3633 = vadd.f32 %v3631, %v3632
    %v3634 = vsel %vm2901, %v3400, 0.0
    %v3635 = vadd.f32 %v3633, %v3634
    %v3636 = vsel %vm2901, %v3401, 0.0
    %v3637 = vadd.f32 %v3635, %v3636
    %v3638 = vsel %vm2901, %v3402, 0.0
    %v3639 = vadd.f32 %v3637, %v3638
    %v3640 = vsel %vm2901, %v3403, 0.0
    %v3641 = vadd.f32 %v3639, %v3640
    %v3642 = vsel %vm2901, %v3404, 0.0
    %v3643 = vadd.f32 %v3641, %v3642
    %v3644 = vsel %vm2901, %v3405, 0.0
    %v3645 = vadd.f32 %v3643, %v3644
    %v3646 = vsel %vm2901, %v3406, 0.0
    %v3647 = vadd.f32 %v3645, %v3646
    %v3648 = vsel %vm2901, %v3407, 0.0
    %v3649 = vadd.f32 %v3647, %v3648
    %v3650 = vsel %vm2901, %v3408, 0.0
    %v3651 = vadd.f32 %v3649, %v3650
    %v3652 = vsel %vm2901, %v3409, 0.0
    %v3653 = vadd.f32 %v3651, %v3652
    %v3654 = vsel %vm2901, %v3410, 0.0
    %v3655 = vadd.f32 %v3653, %v3654
    %v3656 = vsel %vm2901, %v3411, 0.0
    %v3657 = vadd.f32 %v3655, %v3656
    %v3658 = vsel %vm2901, %v3412, 0.0
    %v3659 = vadd.f32 %v3657, %v3658
    %v3660 = vsel %vm2901, %v3413, 0.0
    %v3661 = vadd.f32 %v3659, %v3660
    %v3662 = vsel %vm2901, %v3414, 0.0
    %v3663 = vadd.f32 %v3661, %v3662
    %v3664 = vsel %vm2901, %v3415, 0.0
    %v3665 = vadd.f32 %v3663, %v3664
    %v3666 = vsel %vm2901, %v3416, 0.0
    %v3667 = vadd.f32 %v3665, %v3666
    %v3668 = vsel %vm2901, %v3417, 0.0
    %v3669 = vadd.f32 %v3667, %v3668
    %v3670 = vsel %vm2901, %v3418, 0.0
    %v3671 = vadd.f32 %v3669, %v3670
    %v3672 = vsel %vm2901, %v3419, 0.0
    %v3673 = vadd.f32 %v3671, %v3672
    %v3674 = vsel %vm2901, %v3420, 0.0
    %v3675 = vadd.f32 %v3673, %v3674
    %v3676 = vrot.slane %v3675, 4
    %v3677 = vadd.f32 %v3675, %v3676
    %v3678 = vrot.slane %v3677, 2
    %v3679 = vadd.f32 %v3677, %v3678
    %v3680 = vrot.slane %v3679, 1
    %v3681 = vadd.f32 %v3679, %v3680
    %v3682 = vmul.f32 %v3681, %v3163
    %v3683 = vld [vmem:[%s2] sm:$0x1]
    %v3684 = vadd.f32 %v3682, 1e-05
    %v3685 = vrsqrt.pop %v3684
    %v3686 = vmul.f32 %v3683, %v3685
    %v3687 = vld [vmem:[%s3] sm:$0x1]
    %v3688 = vmul.f32 %v3164, %v3686
    %v3689 = vsub.f32 %v3687, %v3688
    %v3691 = vlaneseq
    %v3692 = vshrl.u32 %v3691, 7
    %v3693 = vsub.s32 0, %v3692
    %v3694 = vrot.slane %v3686, %v3693
    %v3696 = vmul.f32 %v2391, %v3694
    %v3697 = vmul.f32 %v2394, %v3694
    %v3698 = vmul.f32 %v2399, %v3694
    %v3699 = vmul.f32 %v2402, %v3694
    %v3700 = vmul.f32 %v2407, %v3694
    %v3701 = vmul.f32 %v2410, %v3694
    %v3702 = vmul.f32 %v2415, %v3694
    %v3703 = vmul.f32 %v2418, %v3694
    %v3704 = vmul.f32 %v2423, %v3694
    %v3705 = vmul.f32 %v2426, %v3694
    %v3706 = vmul.f32 %v2431, %v3694
    %v3707 = vmul.f32 %v2434, %v3694
    %v3708 = vmul.f32 %v2439, %v3694
    %v3709 = vmul.f32 %v2442, %v3694
    %v3710 = vmul.f32 %v2447, %v3694
    %v3711 = vmul.f32 %v2450, %v3694
    %v3712 = vmul.f32 %v2455, %v3694
    %v3713 = vmul.f32 %v2458, %v3694
    %v3714 = vmul.f32 %v2463, %v3694
    %v3715 = vmul.f32 %v2466, %v3694
    %v3716 = vmul.f32 %v2471, %v3694
    %v3717 = vmul.f32 %v2474, %v3694
    %v3718 = vmul.f32 %v2479, %v3694
    %v3719 = vmul.f32 %v2482, %v3694
    %v3720 = vmul.f32 %v2487, %v3694
    %v3721 = vmul.f32 %v2490, %v3694
    %v3722 = vmul.f32 %v2495, %v3694
    %v3723 = vmul.f32 %v2498, %v3694
    %v3724 = vmul.f32 %v2503, %v3694
    %v3725 = vmul.f32 %v2506, %v3694
    %v3726 = vmul.f32 %v2511, %v3694
    %v3727 = vmul.f32 %v2514, %v3694
    %v3728 = vmul.f32 %v2519, %v3694
    %v3729 = vmul.f32 %v2522, %v3694
    %v3730 = vmul.f32 %v2527, %v3694
    %v3731 = vmul.f32 %v2530, %v3694
    %v3732 = vmul.f32 %v2535, %v3694
    %v3733 = vmul.f32 %v2538, %v3694
    %v3734 = vmul.f32 %v2543, %v3694
    %v3735 = vmul.f32 %v2546, %v3694
    %v3736 = vmul.f32 %v2551, %v3694
    %v3737 = vmul.f32 %v2554, %v3694
    %v3738 = vmul.f32 %v2559, %v3694
    %v3739 = vmul.f32 %v2562, %v3694
    %v3740 = vmul.f32 %v2567, %v3694
    %v3741 = vmul.f32 %v2570, %v3694
    %v3742 = vmul.f32 %v2575, %v3694
    %v3743 = vmul.f32 %v2578, %v3694
    %v3744 = vmul.f32 %v2583, %v3694
    %v3745 = vmul.f32 %v2586, %v3694
    %v3746 = vmul.f32 %v2591, %v3694
    %v3747 = vmul.f32 %v2594, %v3694
    %v3748 = vmul.f32 %v2599, %v3694
    %v3749 = vmul.f32 %v2602, %v3694
    %v3750 = vmul.f32 %v2607, %v3694
    %v3751 = vmul.f32 %v2610, %v3694
    %v3752 = vmul.f32 %v2615, %v3694
    %v3753 = vmul.f32 %v2618, %v3694
    %v3754 = vmul.f32 %v2623, %v3694
    %v3755 = vmul.f32 %v2626, %v3694
    %v3756 = vmul.f32 %v2631, %v3694
    %v3757 = vmul.f32 %v2634, %v3694
    %v3758 = vmul.f32 %v2639, %v3694
    %v3759 = vmul.f32 %v2642, %v3694
    %v3760 = vmul.f32 %v2647, %v3694
    %v3761 = vmul.f32 %v2650, %v3694
    %v3762 = vmul.f32 %v2655, %v3694
    %v3763 = vmul.f32 %v2658, %v3694
    %v3764 = vmul.f32 %v2663, %v3694
    %v3765 = vmul.f32 %v2666, %v3694
    %v3766 = vmul.f32 %v2671, %v3694
    %v3767 = vmul.f32 %v2674, %v3694
    %v3768 = vmul.f32 %v2679, %v3694
    %v3769 = vmul.f32 %v2682, %v3694
    %v3770 = vmul.f32 %v2687, %v3694
    %v3771 = vmul.f32 %v2690, %v3694
    %v3772 = vmul.f32 %v2695, %v3694
    %v3773 = vmul.f32 %v2698, %v3694
    %v3774 = vmul.f32 %v2703, %v3694
    %v3775 = vmul.f32 %v2706, %v3694
    %v3776 = vmul.f32 %v2711, %v3694
    %v3777 = vmul.f32 %v2714, %v3694
    %v3778 = vmul.f32 %v2719, %v3694
    %v3779 = vmul.f32 %v2722, %v3694
    %v3780 = vmul.f32 %v2727, %v3694
    %v3781 = vmul.f32 %v2730, %v3694
    %v3782 = vmul.f32 %v2735, %v3694
    %v3783 = vmul.f32 %v2738, %v3694
    %v3784 = vmul.f32 %v2743, %v3694
    %v3785 = vmul.f32 %v2746, %v3694
    %v3786 = vmul.f32 %v2751, %v3694
    %v3787 = vmul.f32 %v2754, %v3694
    %v3788 = vmul.f32 %v2759, %v3694
    %v3789 = vmul.f32 %v2762, %v3694
    %v3790 = vmul.f32 %v2767, %v3694
    %v3791 = vmul.f32 %v2770, %v3694
    %v3792 = vmul.f32 %v2775, %v3694
    %v3793 = vmul.f32 %v2778, %v3694
    %v3794 = vmul.f32 %v2783, %v3694
    %v3795 = vmul.f32 %v2786, %v3694
    %v3796 = vmul.f32 %v2791, %v3694
    %v3797 = vmul.f32 %v2794, %v3694
    %v3798 = vmul.f32 %v2799, %v3694
    %v3799 = vmul.f32 %v2802, %v3694
    %v3800 = vmul.f32 %v2807, %v3694
    %v3801 = vmul.f32 %v2810, %v3694
    %v3802 = vmul.f32 %v2815, %v3694
    %v3803 = vmul.f32 %v2818, %v3694
    %v3804 = vmul.f32 %v2823, %v3694
    %v3805 = vmul.f32 %v2826, %v3694
    %v3806 = vmul.f32 %v2831, %v3694
    %v3807 = vmul.f32 %v2834, %v3694
    %v3808 = vmul.f32 %v2839, %v3694
    %v3809 = vmul.f32 %v2842, %v3694
    %v3810 = vmul.f32 %v2847, %v3694
    %v3811 = vmul.f32 %v2850, %v3694
    %v3812 = vmul.f32 %v2855, %v3694
    %v3813 = vmul.f32 %v2858, %v3694
    %v3814 = vmul.f32 %v2863, %v3694
    %v3815 = vmul.f32 %v2866, %v3694
    %v3816 = vmul.f32 %v2871, %v3694
    %v3817 = vmul.f32 %v2874, %v3694
    %v3818 = vmul.f32 %v2879, %v3694
    %v3819 = vmul.f32 %v2882, %v3694
    %v3820 = vmul.f32 %v2887, %v3694
    %v3821 = vmul.f32 %v2890, %v3694
    %v3822 = vmul.f32 %v2895, %v3694
    %v3823 = vmul.f32 %v2898, %v3694
    %v3825 = vlaneseq
    %v3826 = vshrl.u32 %v3825, 7
    %v3827 = vsub.s32 0, %v3826
    %v3828 = vrot.slane %v3689, %v3827
    %v3830 = vadd.f32 %v3696, %v3828
    %v3831 = vadd.f32 %v3697, %v3828
    %v3832 = vadd.f32 %v3698, %v3828
    %v3833 = vadd.f32 %v3699, %v3828
    %v3834 = vadd.f32 %v3700, %v3828
    %v3835 = vadd.f32 %v3701, %v3828
    %v3836 = vadd.f32 %v3702, %v3828
    %v3837 = vadd.f32 %v3703, %v3828
    %v3838 = vadd.f32 %v3704, %v3828
    %v3839 = vadd.f32 %v3705, %v3828
    %v3840 = vadd.f32 %v3706, %v3828
    %v3841 = vadd.f32 %v3707, %v3828
    %v3842 = vadd.f32 %v3708, %v3828
    %v3843 = vadd.f32 %v3709, %v3828
    %v3844 = vadd.f32 %v3710, %v3828
    %v3845 = vadd.f32 %v3711, %v3828
    %v3846 = vadd.f32 %v3712, %v3828
    %v3847 = vadd.f32 %v3713, %v3828
    %v3848 = vadd.f32 %v3714, %v3828
    %v3849 = vadd.f32 %v3715, %v3828
    %v3850 = vadd.f32 %v3716, %v3828
    %v3851 = vadd.f32 %v3717, %v3828
    %v3852 = vadd.f32 %v3718, %v3828
    %v3853 = vadd.f32 %v3719, %v3828
    %v3854 = vadd.f32 %v3720, %v3828
    %v3855 = vadd.f32 %v3721, %v3828
    %v3856 = vadd.f32 %v3722, %v3828
    %v3857 = vadd.f32 %v3723, %v3828
    %v3858 = vadd.f32 %v3724, %v3828
    %v3859 = vadd.f32 %v3725, %v3828
    %v3860 = vadd.f32 %v3726, %v3828
    %v3861 = vadd.f32 %v3727, %v3828
    %v3862 = vadd.f32 %v3728, %v3828
    %v3863 = vadd.f32 %v3729, %v3828
    %v3864 = vadd.f32 %v3730, %v3828
    %v3865 = vadd.f32 %v3731, %v3828
    %v3866 = vadd.f32 %v3732, %v3828
    %v3867 = vadd.f32 %v3733, %v3828
    %v3868 = vadd.f32 %v3734, %v3828
    %v3869 = vadd.f32 %v3735, %v3828
    %v3870 = vadd.f32 %v3736, %v3828
    %v3871 = vadd.f32 %v3737, %v3828
    %v3872 = vadd.f32 %v3738, %v3828
    %v3873 = vadd.f32 %v3739, %v3828
    %v3874 = vadd.f32 %v3740, %v3828
    %v3875 = vadd.f32 %v3741, %v3828
    %v3876 = vadd.f32 %v3742, %v3828
    %v3877 = vadd.f32 %v3743, %v3828
    %v3878 = vadd.f32 %v3744, %v3828
    %v3879 = vadd.f32 %v3745, %v3828
    %v3880 = vadd.f32 %v3746, %v3828
    %v3881 = vadd.f32 %v3747, %v3828
    %v3882 = vadd.f32 %v3748, %v3828
    %v3883 = vadd.f32 %v3749, %v3828
    %v3884 = vadd.f32 %v3750, %v3828
    %v3885 = vadd.f32 %v3751, %v3828
    %v3886 = vadd.f32 %v3752, %v3828
    %v3887 = vadd.f32 %v3753, %v3828
    %v3888 = vadd.f32 %v3754, %v3828
    %v3889 = vadd.f32 %v3755, %v3828
    %v3890 = vadd.f32 %v3756, %v3828
    %v3891 = vadd.f32 %v3757, %v3828
    %v3892 = vadd.f32 %v3758, %v3828
    %v3893 = vadd.f32 %v3759, %v3828
    %v3894 = vadd.f32 %v3760, %v3828
    %v3895 = vadd.f32 %v3761, %v3828
    %v3896 = vadd.f32 %v3762, %v3828
    %v3897 = vadd.f32 %v3763, %v3828
    %v3898 = vadd.f32 %v3764, %v3828
    %v3899 = vadd.f32 %v3765, %v3828
    %v3900 = vadd.f32 %v3766, %v3828
    %v3901 = vadd.f32 %v3767, %v3828
    %v3902 = vadd.f32 %v3768, %v3828
    %v3903 = vadd.f32 %v3769, %v3828
    %v3904 = vadd.f32 %v3770, %v3828
    %v3905 = vadd.f32 %v3771, %v3828
    %v3906 = vadd.f32 %v3772, %v3828
    %v3907 = vadd.f32 %v3773, %v3828
    %v3908 = vadd.f32 %v3774, %v3828
    %v3909 = vadd.f32 %v3775, %v3828
    %v3910 = vadd.f32 %v3776, %v3828
    %v3911 = vadd.f32 %v3777, %v3828
    %v3912 = vadd.f32 %v3778, %v3828
    %v3913 = vadd.f32 %v3779, %v3828
    %v3914 = vadd.f32 %v3780, %v3828
    %v3915 = vadd.f32 %v3781, %v3828
    %v3916 = vadd.f32 %v3782, %v3828
    %v3917 = vadd.f32 %v3783, %v3828
    %v3918 = vadd.f32 %v3784, %v3828
    %v3919 = vadd.f32 %v3785, %v3828
    %v3920 = vadd.f32 %v3786, %v3828
    %v3921 = vadd.f32 %v3787, %v3828
    %v3922 = vadd.f32 %v3788, %v3828
    %v3923 = vadd.f32 %v3789, %v3828
    %v3924 = vadd.f32 %v3790, %v3828
    %v3925 = vadd.f32 %v3791, %v3828
    %v3926 = vadd.f32 %v3792, %v3828
    %v3927 = vadd.f32 %v3793, %v3828
    %v3928 = vadd.f32 %v3794, %v3828
    %v3929 = vadd.f32 %v3795, %v3828
    %v3930 = vadd.f32 %v3796, %v3828
    %v3931 = vadd.f32 %v3797, %v3828
    %v3932 = vadd.f32 %v3798, %v3828
    %v3933 = vadd.f32 %v3799, %v3828
    %v3934 = vadd.f32 %v3800, %v3828
    %v3935 = vadd.f32 %v3801, %v3828
    %v3936 = vadd.f32 %v3802, %v3828
    %v3937 = vadd.f32 %v3803, %v3828
    %v3938 = vadd.f32 %v3804, %v3828
    %v3939 = vadd.f32 %v3805, %v3828
    %v3940 = vadd.f32 %v3806, %v3828
    %v3941 = vadd.f32 %v3807, %v3828
    %v3942 = vadd.f32 %v3808, %v3828
    %v3943 = vadd.f32 %v3809, %v3828
    %v3944 = vadd.f32 %v3810, %v3828
    %v3945 = vadd.f32 %v3811, %v3828
    %v3946 = vadd.f32 %v3812, %v3828
    %v3947 = vadd.f32 %v3813, %v3828
    %v3948 = vadd.f32 %v3814, %v3828
    %v3949 = vadd.f32 %v3815, %v3828
    %v3950 = vadd.f32 %v3816, %v3828
    %v3951 = vadd.f32 %v3817, %v3828
    %v3952 = vadd.f32 %v3818, %v3828
    %v3953 = vadd.f32 %v3819, %v3828
    %v3954 = vadd.f32 %v3820, %v3828
    %v3955 = vadd.f32 %v3821, %v3828
    %v3956 = vadd.f32 %v3822, %v3828
    %v3957 = vadd.f32 %v3823, %v3828
    %v3958 = vmax.f32 %v3830, 0.0
    %v3959 = vmax.f32 %v3831, 0.0
    %v3960 = vmax.f32 %v3832, 0.0
    %v3961 = vmax.f32 %v3833, 0.0
    %v3962 = vmax.f32 %v3834, 0.0
    %v3963 = vmax.f32 %v3835, 0.0
    %v3964 = vmax.f32 %v3836, 0.0
    %v3965 = vmax.f32 %v3837, 0.0
    %v3966 = vmax.f32 %v3838, 0.0
    %v3967 = vmax.f32 %v3839, 0.0
    %v3968 = vmax.f32 %v3840, 0.0
    %v3969 = vmax.f32 %v3841, 0.0
    %v3970 = vmax.f32 %v3842, 0.0
    %v3971 = vmax.f32 %v3843, 0.0
    %v3972 = vmax.f32 %v3844, 0.0
    %v3973 = vmax.f32 %v3845, 0.0
    %v3974 = vmax.f32 %v3846, 0.0
    %v3975 = vmax.f32 %v3847, 0.0
    %v3976 = vmax.f32 %v3848, 0.0
    %v3977 = vmax.f32 %v3849, 0.0
    %v3978 = vmax.f32 %v3850, 0.0
    %v3979 = vmax.f32 %v3851, 0.0
    %v3980 = vmax.f32 %v3852, 0.0
    %v3981 = vmax.f32 %v3853, 0.0
    %v3982 = vmax.f32 %v3854, 0.0
    %v3983 = vmax.f32 %v3855, 0.0
    %v3984 = vmax.f32 %v3856, 0.0
    %v3985 = vmax.f32 %v3857, 0.0
    %v3986 = vmax.f32 %v3858, 0.0
    %v3987 = vmax.f32 %v3859, 0.0
    %v3988 = vmax.f32 %v3860, 0.0
    %v3989 = vmax.f32 %v3861, 0.0
    %v3990 = vmax.f32 %v3862, 0.0
    %v3991 = vmax.f32 %v3863, 0.0
    %v3992 = vmax.f32 %v3864, 0.0
    %v3993 = vmax.f32 %v3865, 0.0
    %v3994 = vmax.f32 %v3866, 0.0
    %v3995 = vmax.f32 %v3867, 0.0
    %v3996 = vmax.f32 %v3868, 0.0
    %v3997 = vmax.f32 %v3869, 0.0
    %v3998 = vmax.f32 %v3870, 0.0
    %v3999 = vmax.f32 %v3871, 0.0
    %v4000 = vmax.f32 %v3872, 0.0
    %v4001 = vmax.f32 %v3873, 0.0
    %v4002 = vmax.f32 %v3874, 0.0
    %v4003 = vmax.f32 %v3875, 0.0
    %v4004 = vmax.f32 %v3876, 0.0
    %v4005 = vmax.f32 %v3877, 0.0
    %v4006 = vmax.f32 %v3878, 0.0
    %v4007 = vmax.f32 %v3879, 0.0
    %v4008 = vmax.f32 %v3880, 0.0
    %v4009 = vmax.f32 %v3881, 0.0
    %v4010 = vmax.f32 %v3882, 0.0
    %v4011 = vmax.f32 %v3883, 0.0
    %v4012 = vmax.f32 %v3884, 0.0
    %v4013 = vmax.f32 %v3885, 0.0
    %v4014 = vmax.f32 %v3886, 0.0
    %v4015 = vmax.f32 %v3887, 0.0
    %v4016 = vmax.f32 %v3888, 0.0
    %v4017 = vmax.f32 %v3889, 0.0
    %v4018 = vmax.f32 %v3890, 0.0
    %v4019 = vmax.f32 %v3891, 0.0
    %v4020 = vmax.f32 %v3892, 0.0
    %v4021 = vmax.f32 %v3893, 0.0
    %v4022 = vmax.f32 %v3894, 0.0
    %v4023 = vmax.f32 %v3895, 0.0
    %v4024 = vmax.f32 %v3896, 0.0
    %v4025 = vmax.f32 %v3897, 0.0
    %v4026 = vmax.f32 %v3898, 0.0
    %v4027 = vmax.f32 %v3899, 0.0
    %v4028 = vmax.f32 %v3900, 0.0
    %v4029 = vmax.f32 %v3901, 0.0
    %v4030 = vmax.f32 %v3902, 0.0
    %v4031 = vmax.f32 %v3903, 0.0
    %v4032 = vmax.f32 %v3904, 0.0
    %v4033 = vmax.f32 %v3905, 0.0
    %v4034 = vmax.f32 %v3906, 0.0
    %v4035 = vmax.f32 %v3907, 0.0
    %v4036 = vmax.f32 %v3908, 0.0
    %v4037 = vmax.f32 %v3909, 0.0
    %v4038 = vmax.f32 %v3910, 0.0
    %v4039 = vmax.f32 %v3911, 0.0
    %v4040 = vmax.f32 %v3912, 0.0
    %v4041 = vmax.f32 %v3913, 0.0
    %v4042 = vmax.f32 %v3914, 0.0
    %v4043 = vmax.f32 %v3915, 0.0
    %v4044 = vmax.f32 %v3916, 0.0
    %v4045 = vmax.f32 %v3917, 0.0
    %v4046 = vmax.f32 %v3918, 0.0
    %v4047 = vmax.f32 %v3919, 0.0
    %v4048 = vmax.f32 %v3920, 0.0
    %v4049 = vmax.f32 %v3921, 0.0
    %v4050 = vmax.f32 %v3922, 0.0
    %v4051 = vmax.f32 %v3923, 0.0
    %v4052 = vmax.f32 %v3924, 0.0
    %v4053 = vmax.f32 %v3925, 0.0
    %v4054 = vmax.f32 %v3926, 0.0
    %v4055 = vmax.f32 %v3927, 0.0
    %v4056 = vmax.f32 %v3928, 0.0
    %v4057 = vmax.f32 %v3929, 0.0
    %v4058 = vmax.f32 %v3930, 0.0
    %v4059 = vmax.f32 %v3931, 0.0
    %v4060 = vmax.f32 %v3932, 0.0
    %v4061 = vmax.f32 %v3933, 0.0
    %v4062 = vmax.f32 %v3934, 0.0
    %v4063 = vmax.f32 %v3935, 0.0
    %v4064 = vmax.f32 %v3936, 0.0
    %v4065 = vmax.f32 %v3937, 0.0
    %v4066 = vmax.f32 %v3938, 0.0
    %v4067 = vmax.f32 %v3939, 0.0
    %v4068 = vmax.f32 %v3940, 0.0
    %v4069 = vmax.f32 %v3941, 0.0
    %v4070 = vmax.f32 %v3942, 0.0
    %v4071 = vmax.f32 %v3943, 0.0
    %v4072 = vmax.f32 %v3944, 0.0
    %v4073 = vmax.f32 %v3945, 0.0
    %v4074 = vmax.f32 %v3946, 0.0
    %v4075 = vmax.f32 %v3947, 0.0
    %v4076 = vmax.f32 %v3948, 0.0
    %v4077 = vmax.f32 %v3949, 0.0
    %v4078 = vmax.f32 %v3950, 0.0
    %v4079 = vmax.f32 %v3951, 0.0
    %v4080 = vmax.f32 %v3952, 0.0
    %v4081 = vmax.f32 %v3953, 0.0
    %v4082 = vmax.f32 %v3954, 0.0
    %v4083 = vmax.f32 %v3955, 0.0
    %v4084 = vmax.f32 %v3956, 0.0
    %v4085 = vmax.f32 %v3957, 0.0
    %4086 = vst.msk [vmem:[#allocation2] sm:$0xff] %vm2901, %v3958
    %4087 = vst.msk [vmem:[#allocation2 + $0x8] sm:$0xff] %vm2901, %v3959
    %4088 = vst.msk [vmem:[#allocation2 + $0x10] sm:$0xff] %vm2901, %v3960
    %4089 = vst.msk [vmem:[#allocation2 + $0x18] sm:$0xff] %vm2901, %v3961
    %4090 = vst.msk [vmem:[#allocation2 + $0x20] sm:$0xff] %vm2901, %v3962
    %4091 = vst.msk [vmem:[#allocation2 + $0x28] sm:$0xff] %vm2901, %v3963
    %4092 = vst.msk [vmem:[#allocation2 + $0x30] sm:$0xff] %vm2901, %v3964
    %4093 = vst.msk [vmem:[#allocation2 + $0x38] sm:$0xff] %vm2901, %v3965
    %4094 = vst.msk [vmem:[#allocation2 + $0x40] sm:$0xff] %vm2901, %v3966
    %4095 = vst.msk [vmem:[#allocation2 + $0x48] sm:$0xff] %vm2901, %v3967
    %4096 = vst.msk [vmem:[#allocation2 + $0x50] sm:$0xff] %vm2901, %v3968
    %4097 = vst.msk [vmem:[#allocation2 + $0x58] sm:$0xff] %vm2901, %v3969
    %4098 = vst.msk [vmem:[#allocation2 + $0x60] sm:$0xff] %vm2901, %v3970
    %4099 = vst.msk [vmem:[#allocation2 + $0x68] sm:$0xff] %vm2901, %v3971
    %4100 = vst.msk [vmem:[#allocation2 + $0x70] sm:$0xff] %vm2901, %v3972
    %4101 = vst.msk [vmem:[#allocation2 + $0x78] sm:$0xff] %vm2901, %v3973
    %4102 = vst.msk [vmem:[#allocation2 + $0x80] sm:$0xff] %vm2901, %v3974
    %4103 = vst.msk [vmem:[#allocation2 + $0x88] sm:$0xff] %vm2901, %v3975
    %4104 = vst.msk [vmem:[#allocation2 + $0x90] sm:$0xff] %vm2901, %v3976
    %4105 = vst.msk [vmem:[#allocation2 + $0x98] sm:$0xff] %vm2901, %v3977
    %4106 = vst.msk [vmem:[#allocation2 + $0xa0] sm:$0xff] %vm2901, %v3978
    %4107 = vst.msk [vmem:[#allocation2 + $0xa8] sm:$0xff] %vm2901, %v3979
    %4108 = vst.msk [vmem:[#allocation2 + $0xb0] sm:$0xff] %vm2901, %v3980
    %4109 = vst.msk [vmem:[#allocation2 + $0xb8] sm:$0xff] %vm2901, %v3981
    %4110 = vst.msk [vmem:[#allocation2 + $0xc0] sm:$0xff] %vm2901, %v3982
    %4111 = vst.msk [vmem:[#allocation2 + $0xc8] sm:$0xff] %vm2901, %v3983
    %4112 = vst.msk [vmem:[#allocation2 + $0xd0] sm:$0xff] %vm2901, %v3984
    %4113 = vst.msk [vmem:[#allocation2 + $0xd8] sm:$0xff] %vm2901, %v3985
    %4114 = vst.msk [vmem:[#allocation2 + $0xe0] sm:$0xff] %vm2901, %v3986
    %4115 = vst.msk [vmem:[#allocation2 + $0xe8] sm:$0xff] %vm2901, %v3987
    %4116 = vst.msk [vmem:[#allocation2 + $0xf0] sm:$0xff] %vm2901, %v3988
    %4117 = vst.msk [vmem:[#allocation2 + $0xf8] sm:$0xff] %vm2901, %v3989
    %4118 = vst.msk [vmem:[#allocation2 + $0x100] sm:$0xff] %vm2901, %v3990
    %4119 = vst.msk [vmem:[#allocation2 + $0x108] sm:$0xff] %vm2901, %v3991
    %4120 = vst.msk [vmem:[#allocation2 + $0x110] sm:$0xff] %vm2901, %v3992
    %4121 = vst.msk [vmem:[#allocation2 + $0x118] sm:$0xff] %vm2901, %v3993
    %4122 = vst.msk [vmem:[#allocation2 + $0x120] sm:$0xff] %vm2901, %v3994
    %4123 = vst.msk [vmem:[#allocation2 + $0x128] sm:$0xff] %vm2901, %v3995
    %4124 = vst.msk [vmem:[#allocation2 + $0x130] sm:$0xff] %vm2901, %v3996
    %4125 = vst.msk [vmem:[#allocation2 + $0x138] sm:$0xff] %vm2901, %v3997
    %4126 = vst.msk [vmem:[#allocation2 + $0x140] sm:$0xff] %vm2901, %v3998
    %4127 = vst.msk [vmem:[#allocation2 + $0x148] sm:$0xff] %vm2901, %v3999
    %4128 = vst.msk [vmem:[#allocation2 + $0x150] sm:$0xff] %vm2901, %v4000
    %4129 = vst.msk [vmem:[#allocation2 + $0x158] sm:$0xff] %vm2901, %v4001
    %4130 = vst.msk [vmem:[#allocation2 + $0x160] sm:$0xff] %vm2901, %v4002
    %4131 = vst.msk [vmem:[#allocation2 + $0x168] sm:$0xff] %vm2901, %v4003
    %4132 = vst.msk [vmem:[#allocation2 + $0x170] sm:$0xff] %vm2901, %v4004
    %4133 = vst.msk [vmem:[#allocation2 + $0x178] sm:$0xff] %vm2901, %v4005
    %4134 = vst.msk [vmem:[#allocation2 + $0x180] sm:$0xff] %vm2901, %v4006
    %4135 = vst.msk [vmem:[#allocation2 + $0x188] sm:$0xff] %vm2901, %v4007
    %4136 = vst.msk [vmem:[#allocation2 + $0x190] sm:$0xff] %vm2901, %v4008
    %4137 = vst.msk [vmem:[#allocation2 + $0x198] sm:$0xff] %vm2901, %v4009
    %4138 = vst.msk [vmem:[#allocation2 + $0x1a0] sm:$0xff] %vm2901, %v4010
    %4139 = vst.msk [vmem:[#allocation2 + $0x1a8] sm:$0xff] %vm2901, %v4011
    %4140 = vst.msk [vmem:[#allocation2 + $0x1b0] sm:$0xff] %vm2901, %v4012
    %4141 = vst.msk [vmem:[#allocation2 + $0x1b8] sm:$0xff] %vm2901, %v4013
    %4142 = vst.msk [vmem:[#allocation2 + $0x1c0] sm:$0xff] %vm2901, %v4014
    %4143 = vst.msk [vmem:[#allocation2 + $0x1c8] sm:$0xff] %vm2901, %v4015
    %4144 = vst.msk [vmem:[#allocation2 + $0x1d0] sm:$0xff] %vm2901, %v4016
    %4145 = vst.msk [vmem:[#allocation2 + $0x1d8] sm:$0xff] %vm2901, %v4017
    %4146 = vst.msk [vmem:[#allocation2 + $0x1e0] sm:$0xff] %vm2901, %v4018
    %4147 = vst.msk [vmem:[#allocation2 + $0x1e8] sm:$0xff] %vm2901, %v4019
    %4148 = vst.msk [vmem:[#allocation2 + $0x1f0] sm:$0xff] %vm2901, %v4020
    %4149 = vst.msk [vmem:[#allocation2 + $0x1f8] sm:$0xff] %vm2901, %v4021
    %4150 = vst.msk [vmem:[#allocation2 + $0x200] sm:$0xff] %vm2901, %v4022
    %4151 = vst.msk [vmem:[#allocation2 + $0x208] sm:$0xff] %vm2901, %v4023
    %4152 = vst.msk [vmem:[#allocation2 + $0x210] sm:$0xff] %vm2901, %v4024
    %4153 = vst.msk [vmem:[#allocation2 + $0x218] sm:$0xff] %vm2901, %v4025
    %4154 = vst.msk [vmem:[#allocation2 + $0x220] sm:$0xff] %vm2901, %v4026
    %4155 = vst.msk [vmem:[#allocation2 + $0x228] sm:$0xff] %vm2901, %v4027
    %4156 = vst.msk [vmem:[#allocation2 + $0x230] sm:$0xff] %vm2901, %v4028
    %4157 = vst.msk [vmem:[#allocation2 + $0x238] sm:$0xff] %vm2901, %v4029
    %4158 = vst.msk [vmem:[#allocation2 + $0x240] sm:$0xff] %vm2901, %v4030
    %4159 = vst.msk [vmem:[#allocation2 + $0x248] sm:$0xff] %vm2901, %v4031
    %4160 = vst.msk [vmem:[#allocation2 + $0x250] sm:$0xff] %vm2901, %v4032
    %4161 = vst.msk [vmem:[#allocation2 + $0x258] sm:$0xff] %vm2901, %v4033
    %4162 = vst.msk [vmem:[#allocation2 + $0x260] sm:$0xff] %vm2901, %v4034
    %4163 = vst.msk [vmem:[#allocation2 + $0x268] sm:$0xff] %vm2901, %v4035
    %4164 = vst.msk [vmem:[#allocation2 + $0x270] sm:$0xff] %vm2901, %v4036
    %4165 = vst.msk [vmem:[#allocation2 + $0x278] sm:$0xff] %vm2901, %v4037
    %4166 = vst.msk [vmem:[#allocation2 + $0x280] sm:$0xff] %vm2901, %v4038
    %4167 = vst.msk [vmem:[#allocation2 + $0x288] sm:$0xff] %vm2901, %v4039
    %4168 = vst.msk [vmem:[#allocation2 + $0x290] sm:$0xff] %vm2901, %v4040
    %4169 = vst.msk [vmem:[#allocation2 + $0x298] sm:$0xff] %vm2901, %v4041
    %4170 = vst.msk [vmem:[#allocation2 + $0x2a0] sm:$0xff] %vm2901, %v4042
    %4171 = vst.msk [vmem:[#allocation2 + $0x2a8] sm:$0xff] %vm2901, %v4043
    %4172 = vst.msk [vmem:[#allocation2 + $0x2b0] sm:$0xff] %vm2901, %v4044
    %4173 = vst.msk [vmem:[#allocation2 + $0x2b8] sm:$0xff] %vm2901, %v4045
    %4174 = vst.msk [vmem:[#allocation2 + $0x2c0] sm:$0xff] %vm2901, %v4046
    %4175 = vst.msk [vmem:[#allocation2 + $0x2c8] sm:$0xff] %vm2901, %v4047
    %4176 = vst.msk [vmem:[#allocation2 + $0x2d0] sm:$0xff] %vm2901, %v4048
    %4177 = vst.msk [vmem:[#allocation2 + $0x2d8] sm:$0xff] %vm2901, %v4049
    %4178 = vst.msk [vmem:[#allocation2 + $0x2e0] sm:$0xff] %vm2901, %v4050
    %4179 = vst.msk [vmem:[#allocation2 + $0x2e8] sm:$0xff] %vm2901, %v4051
    %4180 = vst.msk [vmem:[#allocation2 + $0x2f0] sm:$0xff] %vm2901, %v4052
    %4181 = vst.msk [vmem:[#allocation2 + $0x2f8] sm:$0xff] %vm2901, %v4053
    %4182 = vst.msk [vmem:[#allocation2 + $0x300] sm:$0xff] %vm2901, %v4054
    %4183 = vst.msk [vmem:[#allocation2 + $0x308] sm:$0xff] %vm2901, %v4055
    %4184 = vst.msk [vmem:[#allocation2 + $0x310] sm:$0xff] %vm2901, %v4056
    %4185 = vst.msk [vmem:[#allocation2 + $0x318] sm:$0xff] %vm2901, %v4057
    %4186 = vst.msk [vmem:[#allocation2 + $0x320] sm:$0xff] %vm2901, %v4058
    %4187 = vst.msk [vmem:[#allocation2 + $0x328] sm:$0xff] %vm2901, %v4059
    %4188 = vst.msk [vmem:[#allocation2 + $0x330] sm:$0xff] %vm2901, %v4060
    %4189 = vst.msk [vmem:[#allocation2 + $0x338] sm:$0xff] %vm2901, %v4061
    %4190 = vst.msk [vmem:[#allocation2 + $0x340] sm:$0xff] %vm2901, %v4062
    %4191 = vst.msk [vmem:[#allocation2 + $0x348] sm:$0xff] %vm2901, %v4063
    %4192 = vst.msk [vmem:[#allocation2 + $0x350] sm:$0xff] %vm2901, %v4064
    %4193 = vst.msk [vmem:[#allocation2 + $0x358] sm:$0xff] %vm2901, %v4065
    %4194 = vst.msk [vmem:[#allocation2 + $0x360] sm:$0xff] %vm2901, %v4066
    %4195 = vst.msk [vmem:[#allocation2 + $0x368] sm:$0xff] %vm2901, %v4067
    %4196 = vst.msk [vmem:[#allocation2 + $0x370] sm:$0xff] %vm2901, %v4068
    %4197 = vst.msk [vmem:[#allocation2 + $0x378] sm:$0xff] %vm2901, %v4069
    %4198 = vst.msk [vmem:[#allocation2 + $0x380] sm:$0xff] %vm2901, %v4070
    %4199 = vst.msk [vmem:[#allocation2 + $0x388] sm:$0xff] %vm2901, %v4071
    %4200 = vst.msk [vmem:[#allocation2 + $0x390] sm:$0xff] %vm2901, %v4072
    %4201 = vst.msk [vmem:[#allocation2 + $0x398] sm:$0xff] %vm2901, %v4073
    %4202 = vst.msk [vmem:[#allocation2 + $0x3a0] sm:$0xff] %vm2901, %v4074
    %4203 = vst.msk [vmem:[#allocation2 + $0x3a8] sm:$0xff] %vm2901, %v4075
    %4204 = vst.msk [vmem:[#allocation2 + $0x3b0] sm:$0xff] %vm2901, %v4076
    %4205 = vst.msk [vmem:[#allocation2 + $0x3b8] sm:$0xff] %vm2901, %v4077
    %4206 = vst.msk [vmem:[#allocation2 + $0x3c0] sm:$0xff] %vm2901, %v4078
    %4207 = vst.msk [vmem:[#allocation2 + $0x3c8] sm:$0xff] %vm2901, %v4079
    %4208 = vst.msk [vmem:[#allocation2 + $0x3d0] sm:$0xff] %vm2901, %v4080
    %4209 = vst.msk [vmem:[#allocation2 + $0x3d8] sm:$0xff] %vm2901, %v4081
    %4210 = vst.msk [vmem:[#allocation2 + $0x3e0] sm:$0xff] %vm2901, %v4082
    %4211 = vst.msk [vmem:[#allocation2 + $0x3e8] sm:$0xff] %vm2901, %v4083
    %4212 = vst.msk [vmem:[#allocation2 + $0x3f0] sm:$0xff] %vm2901, %v4084
    %4213 = vst.msk [vmem:[#allocation2 + $0x3f8] sm:$0xff] %vm2901, %v4085
    // Predicated region
    $region18: #{conv3d_block_forward.1} parent=1 // pred_check
      _
    $region19: #{conv3d_block_forward.1} parent=1 // pred_check_branch
      %4215 = sbr.rel (0) target = $region21
    $region20: #{conv3d_block_forward.1} parent=1 // pred_region
      %s4217 = ssub.s32 16384, 16384
      %4218 = vsyncadd [#allocation3], %s4217
      %s4219 = sshll.u32 [#allocation2], 4
      %s4220 = int_to_ptr.vmem [resolvable:$true] %s4219
      %4225 = dma.vmem_to_hbm [thread:$0]  %s4220, 16384, %s4, [#allocation3], 128, 128, 8
    $region21: #{conv3d_block_forward.1} parent=1 // pred_fallthru
      _
    // Predicated region
    $region22: #{conv3d_block_forward.1} parent=1 // pred_check
      _
    $region23: #{conv3d_block_forward.1} parent=1 // pred_check_branch
      %4227 = sbr.rel (0) target = $region25
    $region24: #{conv3d_block_forward.1} parent=1 // pred_region
      %4228 = dma.done [#allocation3], 16384
    $region25: #{conv3d_block_forward.1} parent=1 // pred_fallthru
      _
    %4229 = vsyncpa [#allocation3], 1

</llo_original>
